<compile_context>
chip_gen: v6e
topology: v6e:2x2x1
jax: 0.10.0
libtpu: 0.0.40
codegen_flags: <defaults>
</compile_context>

<pallas_src>
import functools

import jax
import jax.numpy as jnp
import numpy as np
from jax import lax
from jax.experimental import pallas as pl
from jax.experimental.pallas import tpu as pltpu


def block_kernel(x_ref, mask_ref,
                 ln1_w_ref, ln1_b_ref, ln2_w_ref, ln2_b_ref,
                 w_qkv_ref, w_proj_ref, b_proj_ref,
                 w_ff1_ref, b_ff1_ref, w_ff2_ref, b_ff2_ref,
                 out_ref,
                 *, n_head, head_size, seq_len, batch_tile, ff_chunk):
    rows = batch_tile * seq_len
    C = n_head * head_size
    eps = 1e-5
    cdt = w_qkv_ref.dtype                       # matmul operand dtype (bf16)

    x = x_ref[...].astype(jnp.float32)          # (rows, C) f32 residual stream

    def layernorm(v, w_ref, b_ref):             # f32 throughout
        mu = jnp.mean(v, axis=-1, keepdims=True)
        var = jnp.mean(jnp.square(v - mu), axis=-1, keepdims=True)
        return (v - mu) * lax.rsqrt(var + eps) * w_ref[...] + b_ref[...]

    # Precomputed additive causal mask (0 / -1e30), shared by all heads.
    mask = mask_ref[...][None]                  # (1, T, T) f32

    # ------------- attention branch: x + proj(multi-head(ln1(x))) ----------
    h = layernorm(x, ln1_w_ref, ln1_b_ref).astype(cdt)               # (rows, C)

    # One fused lane-dense QKV projection (scale folded into the Q columns).
    qkv = jnp.dot(h, w_qkv_ref[...], preferred_element_type=jnp.float32)
    qkv = qkv.reshape(batch_tile, seq_len, 3 * C)   # leading-dim split only

    # TODO(synk): for large n_head / seq_len this statically-unrolled head loop
    # should become a fori_loop / flash-style KV-block loop to bound live ranges.
    head_outs = []
    for hh in range(n_head):
        lo = hh * head_size
        q3 = qkv[:, :, lo:lo + head_size].astype(cdt)                # (bt, T, D)
        k3 = qkv[:, :, C + lo:C + lo + head_size].astype(cdt)
        v3 = qkv[:, :, 2 * C + lo:2 * C + lo + head_size].astype(cdt)

        s = jnp.einsum('bqd,bkd->bqk', q3, k3,
                       preferred_element_type=jnp.float32)           # (bt,T,T) f32
        s = s + mask
        s = s - jnp.max(s, axis=-1, keepdims=True)
        p = jnp.exp(s)
        l = jnp.sum(p, axis=-1, keepdims=True)                       # (bt, T, 1)

        o = jnp.einsum('bqk,bkd->bqd', p.astype(cdt), v3,
                       preferred_element_type=jnp.float32)           # (bt, T, D)
        # Normalize the small (bt,T,D) tile instead of the (bt,T,T) prob tile.
        o = o * pl.reciprocal(l, approx=True)
        head_outs.append(o.astype(cdt).reshape(rows, head_size))

    att = jnp.concatenate(head_outs, axis=-1)                        # (rows, C) bf16
    sa = jnp.dot(att, w_proj_ref[...], preferred_element_type=jnp.float32)
    x = x + sa + b_proj_ref[...]

    # ------------- feed-forward branch: x + ff(ln2(x)) ---------------------
    h2 = layernorm(x, ln2_w_ref, ln2_b_ref).astype(cdt)
    ff_hidden = w_ff1_ref.shape[1]
    acc = jnp.zeros_like(x)
    for c0 in range(0, ff_hidden, ff_chunk):                         # hidden-dim tiling
        f = jnp.dot(h2, w_ff1_ref[:, c0:c0 + ff_chunk],
                    preferred_element_type=jnp.float32) + b_ff1_ref[:, c0:c0 + ff_chunk]
        f = jnp.maximum(f, 0.0).astype(cdt)
        acc = acc + jnp.dot(f, w_ff2_ref[c0:c0 + ff_chunk, :],
                            preferred_element_type=jnp.float32)
    x = x + acc + b_ff2_ref[...]
    # TODO(synk): dropout (attn weights / proj / FFN) is identity (eval-mode).

    out_ref[...] = x.astype(out_ref.dtype)


def _vmem_capacity_bytes():
    try:
        return int(pltpu.get_tpu_info().vmem_capacity_bytes)
    except Exception:
        return 64 * 1024 * 1024        # conservative per-TC budget (v7x)


def _ff_chunk(ff_hidden):
    """Largest multiple of 128 that divides the FFN hidden dim, capped at 2048."""
    for c in range(2048, 127, -128):
        if ff_hidden % c == 0:
            return c
    return ff_hidden


def _estimate_vmem_bytes(bt, T, C, F, ff_chunk, n_head):
    """Rough per-grid-step VMEM footprint for candidate batch tile `bt`."""
    rows = bt * T
    D = C // n_head
    io = 2 * (rows * C * 4) * 2                              # x-in + out, double-buffered
    weights = 2 * 2 * (3 * C * C + C * C + 2 * C * F)        # bf16 weights, double-buffered
    small = 2 * 4 * (6 * C + 2 * F + T * T)                  # ln/bias/mask
    live = 4 * rows * (4 * C + 3 * C + ff_chunk + C)         # f32 x/h/qkv/att/ffn-chunk
    live += 4 * bt * T * T * 2 + 4 * rows * D                # per-head s, p, o
    return io + weights + small + int(1.3 * live)


def _pick_batch_tile(B, T, C, F, ff_chunk, n_head, budget, target_rows):
    """Largest divisor of B whose footprint fits `budget`, rows 16-aligned."""
    best = 1
    for bt in range(1, B + 1):
        if B % bt:
            continue
        rows = bt * T
        if bt != B and rows % 16:      # bf16 sublane packing for partial blocks
            continue
        if _estimate_vmem_bytes(bt, T, C, F, ff_chunk, n_head) > budget:
            break
        best = bt
        if rows >= target_rows:
            break
    # Prefer >= 2 grid steps so v7x's two TensorCores (and megacore sharding)
    # have work; neutral on single-TC chips at these sizes.
    if B // best == 1 and best % 2 == 0 and ((best // 2) * T) % 16 == 0:
        best //= 2
    return best


def transformer_block(x, params, n_head, *, compute_dtype=jnp.bfloat16):
    (ln1_w, ln1_b, ln2_w, ln2_b, wq, wk, wv, wproj, bproj,
     wff1, bff1, wff2, bff2) = params
    B, T, C = x.shape
    H = n_head
    D = C // H
    F = wff1.shape[1]
    scale = D ** -0.5

    # Fused QKV weight, 1/sqrt(D) folded into the query columns.
    w_qkv = jnp.concatenate([wq * scale, wk, wv], axis=1).astype(compute_dtype)  # (C, 3C)

    # Additive causal mask built once on the host.
    idx = np.arange(T)
    mask = jnp.asarray(
        np.where(idx[None, :] <= idx[:, None], 0.0, -1e30).astype(np.float32))   # (T, T)

    kparams = (
        mask,
        ln1_w.reshape(1, C).astype(jnp.float32),
        ln1_b.reshape(1, C).astype(jnp.float32),
        ln2_w.reshape(1, C).astype(jnp.float32),
        ln2_b.reshape(1, C).astype(jnp.float32),
        w_qkv,
        wproj.astype(compute_dtype),                  # (C, C)
        bproj.reshape(1, C).astype(jnp.float32),
        wff1.astype(compute_dtype),                   # (C, 4C)
        bff1.reshape(1, F).astype(jnp.float32),
        wff2.astype(compute_dtype),                   # (4C, C)
        bff2.reshape(1, C).astype(jnp.float32),
    )

    ff_chunk = _ff_chunk(F)
    cap = _vmem_capacity_bytes()
    budget = int(0.75 * cap)
    target_rows = 1024 if cap >= 96 * 1024 * 1024 else 512
    bt = _pick_batch_tile(B, T, C, F, ff_chunk, H, budget, target_rows)
    rows = bt * T
    vmem_limit = int(min(0.9 * cap, 128 * 1024 * 1024))

    x2 = x.reshape(B * T, C)              # flatten rows so GEMMs see M = bt*T

    kernel = functools.partial(block_kernel, n_head=H, head_size=D,
                               seq_len=T, batch_tile=bt, ff_chunk=ff_chunk)

    def rep_spec(shape):                  # whole array, same block every grid step
        return pl.BlockSpec(shape, lambda i: (0,) * len(shape))
    # TODO(synk): on v7x, single-buffer these constant-index weight blocks
    # (pipeline_mode=pl.Buffered(1)) to halve the resident weight footprint.

    out2 = pl.pallas_call(
        kernel,
        out_shape=jax.ShapeDtypeStruct((B * T, C), x.dtype),
        grid=(B // bt,),
        in_specs=[pl.BlockSpec((rows, C), lambda i: (i, 0))]
                 + [rep_spec(p.shape) for p in kparams],
        out_specs=pl.BlockSpec((rows, C), lambda i: (i, 0)),
        compiler_params=pltpu.CompilerParams(
            dimension_semantics=("parallel",),
            vmem_limit_bytes=vmem_limit),
    )(x2, *kparams)
    return out2.reshape(B, T, C)


def reference_block(x, params, n_head):
    """Pure-JAX f32 reference mirroring the PyTorch forward (eval mode)."""
    (ln1_w, ln1_b, ln2_w, ln2_b, wq, wk, wv, wproj, bproj,
     wff1, bff1, wff2, bff2) = params
    B, T, C = x.shape
    D = C // n_head
    eps = 1e-5

    def ln(v, w, b):
        mu = jnp.mean(v, axis=-1, keepdims=True)
        var = jnp.mean((v - mu) ** 2, axis=-1, keepdims=True)
        return (v - mu) / jnp.sqrt(var + eps) * w + b

    h = ln(x, ln1_w, ln1_b)
    q = (h @ wq).reshape(B, T, n_head, D)
    k = (h @ wk).reshape(B, T, n_head, D)
    v = (h @ wv).reshape(B, T, n_head, D)
    s = jnp.einsum('bqhd,bkhd->bhqk', q, k) * (D ** -0.5)
    causal = jnp.tril(jnp.ones((T, T), dtype=bool))
    s = jnp.where(causal[None, None], s, -jnp.inf)
    p = jax.nn.softmax(s, axis=-1)
    attn = jnp.einsum('bhqk,bkhd->bqhd', p, v).reshape(B, T, C)
    x = x + attn @ wproj + bproj
    h2 = ln(x, ln2_w, ln2_b)
    f = jnp.maximum(h2 @ wff1 + bff1, 0.0)
    x = x + f @ wff2 + bff2
    return x


if __name__ == "__main__":
    # Small shapes, but with a lane-dense feature dim (C multiple of 128).
    B, T = 4, 16                      # batch, sequence length (block_size = T)
    n_embed, n_head = 128, 4
    head_size = n_embed // n_head

    key = jax.random.PRNGKey(0)
    ks = jax.random.split(key, 10)

    def rnd(k, shape, scale=0.05):
        return (jax.random.normal(k, shape) * scale).astype(jnp.float32)

    # Weights stored as (in_features, out_features) = transpose of nn.Linear.weight.
    params = (
        jnp.ones((n_embed,), jnp.float32),            # ln1 weight
        jnp.zeros((n_embed,), jnp.float32),           # ln1 bias
        jnp.ones((n_embed,), jnp.float32),            # ln2 weight
        jnp.zeros((n_embed,), jnp.float32),           # ln2 bias
        rnd(ks[0], (n_embed, n_head * head_size)),    # query weight (per-head concat)
        rnd(ks[1], (n_embed, n_head * head_size)),    # key weight
        rnd(ks[2], (n_embed, n_head * head_size)),    # value weight
        rnd(ks[3], (n_head * head_size, n_embed)),    # attention proj weight
        rnd(ks[4], (n_embed,)),                       # attention proj bias
        rnd(ks[5], (n_embed, 4 * n_embed)),           # ffn linear1 weight
        rnd(ks[6], (4 * n_embed,)),                   # ffn linear1 bias
        rnd(ks[7], (4 * n_embed, n_embed)),           # ffn linear2 weight
        rnd(ks[8], (n_embed,)),                       # ffn linear2 bias
    )

    x = jax.random.normal(ks[9], (B, T, n_embed), jnp.float32)

    out = jax.block_until_ready(transformer_block(x, params, n_head))
    ref = reference_block(x, params, n_head)

    # Kernel uses bf16 matmul operands (f32 accumulation); reference is pure f32.
    np.testing.assert_allclose(np.asarray(out), np.asarray(ref),
                               rtol=3e-2, atol=3e-2)
    print("KERNEL_OK")
</pallas_src>

<mosaic_0001>
module attributes {stable_mosaic.version = 11 : i64} {
  func.func @block_kernel(%arg0: i32, %arg1: memref<32x128xf32, #tpu.memory_space<vmem>>, %arg2: memref<16x16xf32, #tpu.memory_space<vmem>>, %arg3: memref<1x128xf32, #tpu.memory_space<vmem>>, %arg4: memref<1x128xf32, #tpu.memory_space<vmem>>, %arg5: memref<1x128xf32, #tpu.memory_space<vmem>>, %arg6: memref<1x128xf32, #tpu.memory_space<vmem>>, %arg7: memref<128x384xbf16, #tpu.memory_space<vmem>>, %arg8: memref<128x128xbf16, #tpu.memory_space<vmem>>, %arg9: memref<1x128xf32, #tpu.memory_space<vmem>>, %arg10: memref<128x512xbf16, #tpu.memory_space<vmem>>, %arg11: memref<1x512xf32, #tpu.memory_space<vmem>>, %arg12: memref<512x128xbf16, #tpu.memory_space<vmem>>, %arg13: memref<1x128xf32, #tpu.memory_space<vmem>>, %arg14: memref<32x128xf32, #tpu.memory_space<vmem>>) attributes {dimension_semantics = [#tpu.dimension_semantics<parallel>], iteration_bounds = array<i64: 2>, scalar_prefetch = 0 : i64, scratch_operands = 0 : i64, tpu.core_type = #tpu.core_type<tc>, window_params = [{transform_indices = @transform_0, window_bounds = array<i64: 32, 128>}, {pipeline_mode = #tpu.pipeline_mode<synchronous>, transform_indices = @transform_1, window_bounds = array<i64: 16, 16>}, {pipeline_mode = #tpu.pipeline_mode<synchronous>, transform_indices = @transform_2, window_bounds = array<i64: 1, 128>}, {pipeline_mode = #tpu.pipeline_mode<synchronous>, transform_indices = @transform_3, window_bounds = array<i64: 1, 128>}, {pipeline_mode = #tpu.pipeline_mode<synchronous>, transform_indices = @transform_4, window_bounds = array<i64: 1, 128>}, {pipeline_mode = #tpu.pipeline_mode<synchronous>, transform_indices = @transform_5, window_bounds = array<i64: 1, 128>}, {pipeline_mode = #tpu.pipeline_mode<synchronous>, transform_indices = @transform_6, window_bounds = array<i64: 128, 384>}, {pipeline_mode = #tpu.pipeline_mode<synchronous>, transform_indices = @transform_7, window_bounds = array<i64: 128, 128>}, {pipeline_mode = #tpu.pipeline_mode<synchronous>, transform_indices = @transform_8, window_bounds = array<i64: 1, 128>}, {pipeline_mode = #tpu.pipeline_mode<synchronous>, transform_indices = @transform_9, window_bounds = array<i64: 128, 512>}, {pipeline_mode = #tpu.pipeline_mode<synchronous>, transform_indices = @transform_10, window_bounds = array<i64: 1, 512>}, {pipeline_mode = #tpu.pipeline_mode<synchronous>, transform_indices = @transform_11, window_bounds = array<i64: 512, 128>}, {pipeline_mode = #tpu.pipeline_mode<synchronous>, transform_indices = @transform_12, window_bounds = array<i64: 1, 128>}, {transform_indices = @transform_13, window_bounds = array<i64: 32, 128>}]} {
    %c0 = arith.constant 0 : index
    %c0_0 = arith.constant 0 : index
    %0 = vector.load %arg1[%c0, %c0_0] : memref<32x128xf32, #tpu.memory_space<vmem>>, vector<32x128xf32>
    %c0_1 = arith.constant 0 : index
    %c0_2 = arith.constant 0 : index
    %1 = vector.load %arg2[%c0_1, %c0_2] : memref<16x16xf32, #tpu.memory_space<vmem>>, vector<16x16xf32>
    %2 = vector.shape_cast %1 : vector<16x16xf32> to vector<1x16x16xf32>
    %cst = arith.constant dense<0.000000e+00> : vector<32xf32>
    %3 = vector.multi_reduction <add>, %0, %cst [1] : vector<32x128xf32> to vector<32xf32>
    %4 = vector.shape_cast %3 : vector<32xf32> to vector<32x1xf32>
    %cst_3 = arith.constant 1.280000e+02 : f32
    %5 = vector.broadcast %cst_3 : f32 to vector<32x1xf32>
    %6 = arith.divf %4, %5 : vector<32x1xf32>
    %7 = vector.broadcast %6 : vector<32x1xf32> to vector<32x128xf32>
    %8 = arith.subf %0, %7 : vector<32x128xf32>
    %9 = arith.mulf %8, %8 : vector<32x128xf32>
    %cst_4 = arith.constant dense<0.000000e+00> : vector<32xf32>
    %10 = vector.multi_reduction <add>, %9, %cst_4 [1] : vector<32x128xf32> to vector<32xf32>
    %11 = vector.shape_cast %10 : vector<32xf32> to vector<32x1xf32>
    %cst_5 = arith.constant 1.280000e+02 : f32
    %12 = vector.broadcast %cst_5 : f32 to vector<32x1xf32>
    %13 = arith.divf %11, %12 : vector<32x1xf32>
    %14 = vector.broadcast %6 : vector<32x1xf32> to vector<32x128xf32>
    %15 = arith.subf %0, %14 : vector<32x128xf32>
    %cst_6 = arith.constant 9.99999974E-6 : f32
    %16 = vector.broadcast %cst_6 : f32 to vector<32x1xf32>
    %17 = arith.addf %13, %16 : vector<32x1xf32>
    %18 = math.rsqrt %17 : vector<32x1xf32>
    %19 = vector.broadcast %18 : vector<32x1xf32> to vector<32x128xf32>
    %20 = arith.mulf %15, %19 : vector<32x128xf32>
    %c0_7 = arith.constant 0 : index
    %c0_8 = arith.constant 0 : index
    %21 = vector.load %arg3[%c0_7, %c0_8] : memref<1x128xf32, #tpu.memory_space<vmem>>, vector<1x128xf32>
    %22 = vector.broadcast %21 : vector<1x128xf32> to vector<32x128xf32>
    %23 = arith.mulf %20, %22 : vector<32x128xf32>
    %c0_9 = arith.constant 0 : index
    %c0_10 = arith.constant 0 : index
    %24 = vector.load %arg4[%c0_9, %c0_10] : memref<1x128xf32, #tpu.memory_space<vmem>>, vector<1x128xf32>
    %25 = vector.broadcast %24 : vector<1x128xf32> to vector<32x128xf32>
    %26 = arith.addf %23, %25 : vector<32x128xf32>
    %27 = arith.truncf %26 : vector<32x128xf32> to vector<32x128xbf16>
    %c0_11 = arith.constant 0 : index
    %c0_12 = arith.constant 0 : index
    %28 = vector.load %arg7[%c0_11, %c0_12] : memref<128x384xbf16, #tpu.memory_space<vmem>>, vector<128x384xbf16>
    %cst_13 = arith.constant dense<0.000000e+00> : vector<32x384xf32>
    %29 = tpu.matmul %27, %28, %cst_13 {dimension_numbers = #tpu.dot_dimension_numbers<[1], [0], [0], [1], [0, 0, 1, 1], [], []>} : vector<32x128xbf16>, vector<128x384xbf16>, vector<32x384xf32> -> vector<32x384xf32>
    %30 = vector.shape_cast %29 : vector<32x384xf32> to vector<2x16x384xf32>
    %31 = vector.extract_strided_slice %30 {offsets = [0, 0, 0], sizes = [2, 16, 32], strides = [1, 1, 1]} : vector<2x16x384xf32> to vector<2x16x32xf32>
    %32 = arith.truncf %31 : vector<2x16x32xf32> to vector<2x16x32xbf16>
    %33 = vector.extract_strided_slice %30 {offsets = [0, 0, 128], sizes = [2, 16, 32], strides = [1, 1, 1]} : vector<2x16x384xf32> to vector<2x16x32xf32>
    %34 = arith.truncf %33 : vector<2x16x32xf32> to vector<2x16x32xbf16>
    %35 = vector.extract_strided_slice %30 {offsets = [0, 0, 256], sizes = [2, 16, 32], strides = [1, 1, 1]} : vector<2x16x384xf32> to vector<2x16x32xf32>
    %36 = arith.truncf %35 : vector<2x16x32xf32> to vector<2x16x32xbf16>
    "tpu.trace_start"() <{level = 10 : i32, message = "bqd,bkd->bqk"}> : () -> ()
    %cst_14 = arith.constant dense<0.000000e+00> : vector<2x16x16xf32>
    %37 = tpu.matmul %32, %34, %cst_14 {dimension_numbers = #tpu.dot_dimension_numbers<[2], [2], [1], [1], [0, 0, 0, 1, 1, 1], [0], [0]>} : vector<2x16x32xbf16>, vector<2x16x32xbf16>, vector<2x16x16xf32> -> vector<2x16x16xf32>
    "tpu.trace_stop"() : () -> ()
    %38 = vector.broadcast %2 : vector<1x16x16xf32> to vector<2x16x16xf32>
    %39 = arith.addf %37, %38 : vector<2x16x16xf32>
    %cst_15 = arith.constant dense<0xFF800000> : vector<2x16xf32>
    %40 = vector.multi_reduction <maximumf>, %39, %cst_15 [2] : vector<2x16x16xf32> to vector<2x16xf32>
    %41 = vector.shape_cast %40 : vector<2x16xf32> to vector<2x16x1xf32>
    %42 = vector.broadcast %41 : vector<2x16x1xf32> to vector<2x16x16xf32>
    %43 = arith.subf %39, %42 : vector<2x16x16xf32>
    %44 = math.exp %43 : vector<2x16x16xf32>
    %cst_16 = arith.constant dense<0.000000e+00> : vector<2x16xf32>
    %45 = vector.multi_reduction <add>, %44, %cst_16 [2] : vector<2x16x16xf32> to vector<2x16xf32>
    %46 = vector.shape_cast %45 : vector<2x16xf32> to vector<2x16x1xf32>
    %47 = arith.truncf %44 : vector<2x16x16xf32> to vector<2x16x16xbf16>
    "tpu.trace_start"() <{level = 10 : i32, message = "bqk,bkd->bqd"}> : () -> ()
    %cst_17 = arith.constant dense<0.000000e+00> : vector<2x16x32xf32>
    %48 = tpu.matmul %47, %36, %cst_17 {dimension_numbers = #tpu.dot_dimension_numbers<[2], [1], [1], [2], [0, 0, 0, 1, 1, 2], [0], [0]>} : vector<2x16x16xbf16>, vector<2x16x32xbf16>, vector<2x16x32xf32> -> vector<2x16x32xf32>
    "tpu.trace_stop"() : () -> ()
    %49 = tpu.reciprocal %46 {approx = true} : vector<2x16x1xf32> -> vector<2x16x1xf32>
    %50 = vector.broadcast %49 : vector<2x16x1xf32> to vector<2x16x32xf32>
    %51 = arith.mulf %48, %50 : vector<2x16x32xf32>
    %52 = arith.truncf %51 : vector<2x16x32xf32> to vector<2x16x32xbf16>
    %53 = vector.shape_cast %52 : vector<2x16x32xbf16> to vector<32x32xbf16>
    %54 = vector.extract_strided_slice %30 {offsets = [0, 0, 32], sizes = [2, 16, 32], strides = [1, 1, 1]} : vector<2x16x384xf32> to vector<2x16x32xf32>
    %55 = arith.truncf %54 : vector<2x16x32xf32> to vector<2x16x32xbf16>
    %56 = vector.extract_strided_slice %30 {offsets = [0, 0, 160], sizes = [2, 16, 32], strides = [1, 1, 1]} : vector<2x16x384xf32> to vector<2x16x32xf32>
    %57 = arith.truncf %56 : vector<2x16x32xf32> to vector<2x16x32xbf16>
    %58 = vector.extract_strided_slice %30 {offsets = [0, 0, 288], sizes = [2, 16, 32], strides = [1, 1, 1]} : vector<2x16x384xf32> to vector<2x16x32xf32>
    %59 = arith.truncf %58 : vector<2x16x32xf32> to vector<2x16x32xbf16>
    "tpu.trace_start"() <{level = 10 : i32, message = "bqd,bkd->bqk"}> : () -> ()
    %cst_18 = arith.constant dense<0.000000e+00> : vector<2x16x16xf32>
    %60 = tpu.matmul %55, %57, %cst_18 {dimension_numbers = #tpu.dot_dimension_numbers<[2], [2], [1], [1], [0, 0, 0, 1, 1, 1], [0], [0]>} : vector<2x16x32xbf16>, vector<2x16x32xbf16>, vector<2x16x16xf32> -> vector<2x16x16xf32>
    "tpu.trace_stop"() : () -> ()
    %61 = vector.broadcast %2 : vector<1x16x16xf32> to vector<2x16x16xf32>
    %62 = arith.addf %60, %61 : vector<2x16x16xf32>
    %cst_19 = arith.constant dense<0xFF800000> : vector<2x16xf32>
    %63 = vector.multi_reduction <maximumf>, %62, %cst_19 [2] : vector<2x16x16xf32> to vector<2x16xf32>
    %64 = vector.shape_cast %63 : vector<2x16xf32> to vector<2x16x1xf32>
    %65 = vector.broadcast %64 : vector<2x16x1xf32> to vector<2x16x16xf32>
    %66 = arith.subf %62, %65 : vector<2x16x16xf32>
    %67 = math.exp %66 : vector<2x16x16xf32>
    %cst_20 = arith.constant dense<0.000000e+00> : vector<2x16xf32>
    %68 = vector.multi_reduction <add>, %67, %cst_20 [2] : vector<2x16x16xf32> to vector<2x16xf32>
    %69 = vector.shape_cast %68 : vector<2x16xf32> to vector<2x16x1xf32>
    %70 = arith.truncf %67 : vector<2x16x16xf32> to vector<2x16x16xbf16>
    "tpu.trace_start"() <{level = 10 : i32, message = "bqk,bkd->bqd"}> : () -> ()
    %cst_21 = arith.constant dense<0.000000e+00> : vector<2x16x32xf32>
    %71 = tpu.matmul %70, %59, %cst_21 {dimension_numbers = #tpu.dot_dimension_numbers<[2], [1], [1], [2], [0, 0, 0, 1, 1, 2], [0], [0]>} : vector<2x16x16xbf16>, vector<2x16x32xbf16>, vector<2x16x32xf32> -> vector<2x16x32xf32>
    "tpu.trace_stop"() : () -> ()
    %72 = tpu.reciprocal %69 {approx = true} : vector<2x16x1xf32> -> vector<2x16x1xf32>
    %73 = vector.broadcast %72 : vector<2x16x1xf32> to vector<2x16x32xf32>
    %74 = arith.mulf %71, %73 : vector<2x16x32xf32>
    %75 = arith.truncf %74 : vector<2x16x32xf32> to vector<2x16x32xbf16>
    %76 = vector.shape_cast %75 : vector<2x16x32xbf16> to vector<32x32xbf16>
    %77 = vector.extract_strided_slice %30 {offsets = [0, 0, 64], sizes = [2, 16, 32], strides = [1, 1, 1]} : vector<2x16x384xf32> to vector<2x16x32xf32>
    %78 = arith.truncf %77 : vector<2x16x32xf32> to vector<2x16x32xbf16>
    %79 = vector.extract_strided_slice %30 {offsets = [0, 0, 192], sizes = [2, 16, 32], strides = [1, 1, 1]} : vector<2x16x384xf32> to vector<2x16x32xf32>
    %80 = arith.truncf %79 : vector<2x16x32xf32> to vector<2x16x32xbf16>
    %81 = vector.extract_strided_slice %30 {offsets = [0, 0, 320], sizes = [2, 16, 32], strides = [1, 1, 1]} : vector<2x16x384xf32> to vector<2x16x32xf32>
    %82 = arith.truncf %81 : vector<2x16x32xf32> to vector<2x16x32xbf16>
    "tpu.trace_start"() <{level = 10 : i32, message = "bqd,bkd->bqk"}> : () -> ()
    %cst_22 = arith.constant dense<0.000000e+00> : vector<2x16x16xf32>
    %83 = tpu.matmul %78, %80, %cst_22 {dimension_numbers = #tpu.dot_dimension_numbers<[2], [2], [1], [1], [0, 0, 0, 1, 1, 1], [0], [0]>} : vector<2x16x32xbf16>, vector<2x16x32xbf16>, vector<2x16x16xf32> -> vector<2x16x16xf32>
    "tpu.trace_stop"() : () -> ()
    %84 = vector.broadcast %2 : vector<1x16x16xf32> to vector<2x16x16xf32>
    %85 = arith.addf %83, %84 : vector<2x16x16xf32>
    %cst_23 = arith.constant dense<0xFF800000> : vector<2x16xf32>
    %86 = vector.multi_reduction <maximumf>, %85, %cst_23 [2] : vector<2x16x16xf32> to vector<2x16xf32>
    %87 = vector.shape_cast %86 : vector<2x16xf32> to vector<2x16x1xf32>
    %88 = vector.broadcast %87 : vector<2x16x1xf32> to vector<2x16x16xf32>
    %89 = arith.subf %85, %88 : vector<2x16x16xf32>
    %90 = math.exp %89 : vector<2x16x16xf32>
    %cst_24 = arith.constant dense<0.000000e+00> : vector<2x16xf32>
    %91 = vector.multi_reduction <add>, %90, %cst_24 [2] : vector<2x16x16xf32> to vector<2x16xf32>
    %92 = vector.shape_cast %91 : vector<2x16xf32> to vector<2x16x1xf32>
    %93 = arith.truncf %90 : vector<2x16x16xf32> to vector<2x16x16xbf16>
    "tpu.trace_start"() <{level = 10 : i32, message = "bqk,bkd->bqd"}> : () -> ()
    %cst_25 = arith.constant dense<0.000000e+00> : vector<2x16x32xf32>
    %94 = tpu.matmul %93, %82, %cst_25 {dimension_numbers = #tpu.dot_dimension_numbers<[2], [1], [1], [2], [0, 0, 0, 1, 1, 2], [0], [0]>} : vector<2x16x16xbf16>, vector<2x16x32xbf16>, vector<2x16x32xf32> -> vector<2x16x32xf32>
    "tpu.trace_stop"() : () -> ()
    %95 = tpu.reciprocal %92 {approx = true} : vector<2x16x1xf32> -> vector<2x16x1xf32>
    %96 = vector.broadcast %95 : vector<2x16x1xf32> to vector<2x16x32xf32>
    %97 = arith.mulf %94, %96 : vector<2x16x32xf32>
    %98 = arith.truncf %97 : vector<2x16x32xf32> to vector<2x16x32xbf16>
    %99 = vector.shape_cast %98 : vector<2x16x32xbf16> to vector<32x32xbf16>
    %100 = vector.extract_strided_slice %30 {offsets = [0, 0, 96], sizes = [2, 16, 32], strides = [1, 1, 1]} : vector<2x16x384xf32> to vector<2x16x32xf32>
    %101 = arith.truncf %100 : vector<2x16x32xf32> to vector<2x16x32xbf16>
    %102 = vector.extract_strided_slice %30 {offsets = [0, 0, 224], sizes = [2, 16, 32], strides = [1, 1, 1]} : vector<2x16x384xf32> to vector<2x16x32xf32>
    %103 = arith.truncf %102 : vector<2x16x32xf32> to vector<2x16x32xbf16>
    %104 = vector.extract_strided_slice %30 {offsets = [0, 0, 352], sizes = [2, 16, 32], strides = [1, 1, 1]} : vector<2x16x384xf32> to vector<2x16x32xf32>
    %105 = arith.truncf %104 : vector<2x16x32xf32> to vector<2x16x32xbf16>
    "tpu.trace_start"() <{level = 10 : i32, message = "bqd,bkd->bqk"}> : () -> ()
    %cst_26 = arith.constant dense<0.000000e+00> : vector<2x16x16xf32>
    %106 = tpu.matmul %101, %103, %cst_26 {dimension_numbers = #tpu.dot_dimension_numbers<[2], [2], [1], [1], [0, 0, 0, 1, 1, 1], [0], [0]>} : vector<2x16x32xbf16>, vector<2x16x32xbf16>, vector<2x16x16xf32> -> vector<2x16x16xf32>
    "tpu.trace_stop"() : () -> ()
    %107 = vector.broadcast %2 : vector<1x16x16xf32> to vector<2x16x16xf32>
    %108 = arith.addf %106, %107 : vector<2x16x16xf32>
    %cst_27 = arith.constant dense<0xFF800000> : vector<2x16xf32>
    %109 = vector.multi_reduction <maximumf>, %108, %cst_27 [2] : vector<2x16x16xf32> to vector<2x16xf32>
    %110 = vector.shape_cast %109 : vector<2x16xf32> to vector<2x16x1xf32>
    %111 = vector.broadcast %110 : vector<2x16x1xf32> to vector<2x16x16xf32>
    %112 = arith.subf %108, %111 : vector<2x16x16xf32>
    %113 = math.exp %112 : vector<2x16x16xf32>
    %cst_28 = arith.constant dense<0.000000e+00> : vector<2x16xf32>
    %114 = vector.multi_reduction <add>, %113, %cst_28 [2] : vector<2x16x16xf32> to vector<2x16xf32>
    %115 = vector.shape_cast %114 : vector<2x16xf32> to vector<2x16x1xf32>
    %116 = arith.truncf %113 : vector<2x16x16xf32> to vector<2x16x16xbf16>
    "tpu.trace_start"() <{level = 10 : i32, message = "bqk,bkd->bqd"}> : () -> ()
    %cst_29 = arith.constant dense<0.000000e+00> : vector<2x16x32xf32>
    %117 = tpu.matmul %116, %105, %cst_29 {dimension_numbers = #tpu.dot_dimension_numbers<[2], [1], [1], [2], [0, 0, 0, 1, 1, 2], [0], [0]>} : vector<2x16x16xbf16>, vector<2x16x32xbf16>, vector<2x16x32xf32> -> vector<2x16x32xf32>
    "tpu.trace_stop"() : () -> ()
    %118 = tpu.reciprocal %115 {approx = true} : vector<2x16x1xf32> -> vector<2x16x1xf32>
    %119 = vector.broadcast %118 : vector<2x16x1xf32> to vector<2x16x32xf32>
    %120 = arith.mulf %117, %119 : vector<2x16x32xf32>
    %121 = arith.truncf %120 : vector<2x16x32xf32> to vector<2x16x32xbf16>
    %122 = vector.shape_cast %121 : vector<2x16x32xbf16> to vector<32x32xbf16>
    %123 = tpu.concatenate %53, %76, %99, %122 in 1 : vector<32x32xbf16>, vector<32x32xbf16>, vector<32x32xbf16>, vector<32x32xbf16> -> vector<32x128xbf16>
    %c0_30 = arith.constant 0 : index
    %c0_31 = arith.constant 0 : index
    %124 = vector.load %arg8[%c0_30, %c0_31] : memref<128x128xbf16, #tpu.memory_space<vmem>>, vector<128x128xbf16>
    %cst_32 = arith.constant dense<0.000000e+00> : vector<32x128xf32>
    %125 = tpu.matmul %123, %124, %cst_32 {dimension_numbers = #tpu.dot_dimension_numbers<[1], [0], [0], [1], [0, 0, 1, 1], [], []>} : vector<32x128xbf16>, vector<128x128xbf16>, vector<32x128xf32> -> vector<32x128xf32>
    %126 = arith.addf %0, %125 : vector<32x128xf32>
    %c0_33 = arith.constant 0 : index
    %c0_34 = arith.constant 0 : index
    %127 = vector.load %arg9[%c0_33, %c0_34] : memref<1x128xf32, #tpu.memory_space<vmem>>, vector<1x128xf32>
    %128 = vector.broadcast %127 : vector<1x128xf32> to vector<32x128xf32>
    %129 = arith.addf %126, %128 : vector<32x128xf32>
    %cst_35 = arith.constant dense<0.000000e+00> : vector<32xf32>
    %130 = vector.multi_reduction <add>, %129, %cst_35 [1] : vector<32x128xf32> to vector<32xf32>
    %131 = vector.shape_cast %130 : vector<32xf32> to vector<32x1xf32>
    %cst_36 = arith.constant 1.280000e+02 : f32
    %132 = vector.broadcast %cst_36 : f32 to vector<32x1xf32>
    %133 = arith.divf %131, %132 : vector<32x1xf32>
    %134 = vector.broadcast %133 : vector<32x1xf32> to vector<32x128xf32>
    %135 = arith.subf %129, %134 : vector<32x128xf32>
    %136 = arith.mulf %135, %135 : vector<32x128xf32>
    %cst_37 = arith.constant dense<0.000000e+00> : vector<32xf32>
    %137 = vector.multi_reduction <add>, %136, %cst_37 [1] : vector<32x128xf32> to vector<32xf32>
    %138 = vector.shape_cast %137 : vector<32xf32> to vector<32x1xf32>
    %cst_38 = arith.constant 1.280000e+02 : f32
    %139 = vector.broadcast %cst_38 : f32 to vector<32x1xf32>
    %140 = arith.divf %138, %139 : vector<32x1xf32>
    %141 = vector.broadcast %133 : vector<32x1xf32> to vector<32x128xf32>
    %142 = arith.subf %129, %141 : vector<32x128xf32>
    %cst_39 = arith.constant 9.99999974E-6 : f32
    %143 = vector.broadcast %cst_39 : f32 to vector<32x1xf32>
    %144 = arith.addf %140, %143 : vector<32x1xf32>
    %145 = math.rsqrt %144 : vector<32x1xf32>
    %146 = vector.broadcast %145 : vector<32x1xf32> to vector<32x128xf32>
    %147 = arith.mulf %142, %146 : vector<32x128xf32>
    %c0_40 = arith.constant 0 : index
    %c0_41 = arith.constant 0 : index
    %148 = vector.load %arg5[%c0_40, %c0_41] : memref<1x128xf32, #tpu.memory_space<vmem>>, vector<1x128xf32>
    %149 = vector.broadcast %148 : vector<1x128xf32> to vector<32x128xf32>
    %150 = arith.mulf %147, %149 : vector<32x128xf32>
    %c0_42 = arith.constant 0 : index
    %c0_43 = arith.constant 0 : index
    %151 = vector.load %arg6[%c0_42, %c0_43] : memref<1x128xf32, #tpu.memory_space<vmem>>, vector<1x128xf32>
    %152 = vector.broadcast %151 : vector<1x128xf32> to vector<32x128xf32>
    %153 = arith.addf %150, %152 : vector<32x128xf32>
    %154 = arith.truncf %153 : vector<32x128xf32> to vector<32x128xbf16>
    %cst_44 = arith.constant 0.000000e+00 : f32
    %155 = vector.broadcast %cst_44 : f32 to vector<32x128xf32>
    %c0_45 = arith.constant 0 : index
    %c0_46 = arith.constant 0 : index
    %156 = vector.load %arg10[%c0_45, %c0_46] : memref<128x512xbf16, #tpu.memory_space<vmem>>, vector<128x512xbf16>
    %cst_47 = arith.constant dense<0.000000e+00> : vector<32x512xf32>
    %157 = tpu.matmul %154, %156, %cst_47 {dimension_numbers = #tpu.dot_dimension_numbers<[1], [0], [0], [1], [0, 0, 1, 1], [], []>} : vector<32x128xbf16>, vector<128x512xbf16>, vector<32x512xf32> -> vector<32x512xf32>
    %c0_48 = arith.constant 0 : index
    %c0_49 = arith.constant 0 : index
    %158 = vector.load %arg11[%c0_48, %c0_49] : memref<1x512xf32, #tpu.memory_space<vmem>>, vector<1x512xf32>
    %159 = vector.broadcast %158 : vector<1x512xf32> to vector<32x512xf32>
    %160 = arith.addf %157, %159 : vector<32x512xf32>
    %cst_50 = arith.constant 0.000000e+00 : f32
    %161 = vector.broadcast %cst_50 : f32 to vector<32x512xf32>
    %162 = arith.maximumf %160, %161 : vector<32x512xf32>
    %163 = arith.truncf %162 : vector<32x512xf32> to vector<32x512xbf16>
    %c0_51 = arith.constant 0 : index
    %c0_52 = arith.constant 0 : index
    %164 = vector.load %arg12[%c0_51, %c0_52] : memref<512x128xbf16, #tpu.memory_space<vmem>>, vector<512x128xbf16>
    %cst_53 = arith.constant dense<0.000000e+00> : vector<32x128xf32>
    %165 = tpu.matmul %163, %164, %cst_53 {dimension_numbers = #tpu.dot_dimension_numbers<[1], [0], [0], [1], [0, 0, 1, 1], [], []>} : vector<32x512xbf16>, vector<512x128xbf16>, vector<32x128xf32> -> vector<32x128xf32>
    %166 = arith.addf %155, %165 : vector<32x128xf32>
    %167 = arith.addf %129, %166 : vector<32x128xf32>
    %c0_54 = arith.constant 0 : index
    %c0_55 = arith.constant 0 : index
    %168 = vector.load %arg13[%c0_54, %c0_55] : memref<1x128xf32, #tpu.memory_space<vmem>>, vector<1x128xf32>
    %169 = vector.broadcast %168 : vector<1x128xf32> to vector<32x128xf32>
    %170 = arith.addf %167, %169 : vector<32x128xf32>
    %c0_56 = arith.constant 0 : index
    %c0_57 = arith.constant 0 : index
    %171 = vector.load %arg14[%c0_56, %c0_57] : memref<32x128xf32, #tpu.memory_space<vmem>>, vector<32x128xf32>
    tpu.vector_store %arg14[%c0_56, %c0_57], %170 {strides = array<i32>} : memref<32x128xf32, #tpu.memory_space<vmem>>, vector<32x128xf32>,
    return
  }
  func.func @transform_0(%arg0: i32) -> (i32, i32) {
    %c0_i32 = arith.constant 0 : i32
    %c0_i32_0 = arith.constant 0 : i32
    return %arg0, %c0_i32 : i32, i32
  }
  func.func @transform_1(%arg0: i32) -> (i32, i32) {
    %c0_i32 = arith.constant 0 : i32
    %c0_i32_0 = arith.constant 0 : i32
    %c0_i32_1 = arith.constant 0 : i32
    return %c0_i32, %c0_i32_0 : i32, i32
  }
  func.func @transform_2(%arg0: i32) -> (i32, i32) {
    %c0_i32 = arith.constant 0 : i32
    %c0_i32_0 = arith.constant 0 : i32
    %c0_i32_1 = arith.constant 0 : i32
    return %c0_i32, %c0_i32_0 : i32, i32
  }
  func.func @transform_3(%arg0: i32) -> (i32, i32) {
    %c0_i32 = arith.constant 0 : i32
    %c0_i32_0 = arith.constant 0 : i32
    %c0_i32_1 = arith.constant 0 : i32
    return %c0_i32, %c0_i32_0 : i32, i32
  }
  func.func @transform_4(%arg0: i32) -> (i32, i32) {
    %c0_i32 = arith.constant 0 : i32
    %c0_i32_0 = arith.constant 0 : i32
    %c0_i32_1 = arith.constant 0 : i32
    return %c0_i32, %c0_i32_0 : i32, i32
  }
  func.func @transform_5(%arg0: i32) -> (i32, i32) {
    %c0_i32 = arith.constant 0 : i32
    %c0_i32_0 = arith.constant 0 : i32
    %c0_i32_1 = arith.constant 0 : i32
    return %c0_i32, %c0_i32_0 : i32, i32
  }
  func.func @transform_6(%arg0: i32) -> (i32, i32) {
    %c0_i32 = arith.constant 0 : i32
    %c0_i32_0 = arith.constant 0 : i32
    %c0_i32_1 = arith.constant 0 : i32
    return %c0_i32, %c0_i32_0 : i32, i32
  }
  func.func @transform_7(%arg0: i32) -> (i32, i32) {
    %c0_i32 = arith.constant 0 : i32
    %c0_i32_0 = arith.constant 0 : i32
    %c0_i32_1 = arith.constant 0 : i32
    return %c0_i32, %c0_i32_0 : i32, i32
  }
  func.func @transform_8(%arg0: i32) -> (i32, i32) {
    %c0_i32 = arith.constant 0 : i32
    %c0_i32_0 = arith.constant 0 : i32
    %c0_i32_1 = arith.constant 0 : i32
    return %c0_i32, %c0_i32_0 : i32, i32
  }
  func.func @transform_9(%arg0: i32) -> (i32, i32) {
    %c0_i32 = arith.constant 0 : i32
    %c0_i32_0 = arith.constant 0 : i32
    %c0_i32_1 = arith.constant 0 : i32
    return %c0_i32, %c0_i32_0 : i32, i32
  }
  func.func @transform_10(%arg0: i32) -> (i32, i32) {
    %c0_i32 = arith.constant 0 : i32
    %c0_i32_0 = arith.constant 0 : i32
    %c0_i32_1 = arith.constant 0 : i32
    return %c0_i32, %c0_i32_0 : i32, i32
  }
  func.func @transform_11(%arg0: i32) -> (i32, i32) {
    %c0_i32 = arith.constant 0 : i32
    %c0_i32_0 = arith.constant 0 : i32
    %c0_i32_1 = arith.constant 0 : i32
    return %c0_i32, %c0_i32_0 : i32, i32
  }
  func.func @transform_12(%arg0: i32) -> (i32, i32) {
    %c0_i32 = arith.constant 0 : i32
    %c0_i32_0 = arith.constant 0 : i32
    %c0_i32_1 = arith.constant 0 : i32
    return %c0_i32, %c0_i32_0 : i32, i32
  }
  func.func @transform_13(%arg0: i32) -> (i32, i32) {
    %c0_i32 = arith.constant 0 : i32
    %c0_i32_0 = arith.constant 0 : i32
    return %arg0, %c0_i32 : i32, i32
  }
}

</mosaic_0001>

<llo_original>
// kernel: tpu_custom_call.1
$region0: #{tpu_custom_call.1}
  #allocation0 [shape = 'u32[]', space=smem, size = 0x4, offset = 0x4, fixed_abs, tag = 'smem constant byte address 0x4 - core index']
  #allocation1 [shape = 'u32[144,128]{1,0:T(1,128)}', space=vmem, size = 0x12000, scoped, tag = 'internal scratch']
  %s0 = inlined_call_operand.hbm [shape: f32[64,128], index: 0, kind: input, shape index: {}]
  %s1 = inlined_call_operand.hbm [shape: f32[16,16], index: 1, kind: input, shape index: {}]
  %s2 = inlined_call_operand.vmem [shape: f32[1,128], index: 2, kind: input, shape index: {}]
  %s3 = inlined_call_operand.vmem [shape: f32[1,128], index: 3, kind: input, shape index: {}]
  %s4 = inlined_call_operand.vmem [shape: f32[1,128], index: 4, kind: input, shape index: {}]
  %s5 = inlined_call_operand.vmem [shape: f32[1,128], index: 5, kind: input, shape index: {}]
  %s6 = inlined_call_operand.hbm [shape: bf16[128,384], index: 6, kind: input, shape index: {}]
  %s7 = inlined_call_operand.hbm [shape: bf16[128,128], index: 7, kind: input, shape index: {}]
  %s8 = inlined_call_operand.vmem [shape: f32[1,128], index: 8, kind: input, shape index: {}]
  %s9 = inlined_call_operand.hbm [shape: bf16[128,512], index: 9, kind: input, shape index: {}]
  %s10 = inlined_call_operand.vmem [shape: f32[1,512], index: 10, kind: input, shape index: {}]
  %s11 = inlined_call_operand.hbm [shape: bf16[512,128], index: 11, kind: input, shape index: {}]
  %s12 = inlined_call_operand.vmem [shape: f32[1,128], index: 12, kind: input, shape index: {}]
  %s13 = inlined_call_operand.hbm [shape: f32[64,128], index: 13, kind: output, shape index: {}]
  %s14 = sld [smem:[#allocation0]]
  $region109: #{tpu_custom_call.1} parent=0
    _
  %s16 = ssub.s32 1, %s14
  %s17 = scalar_select 0, %s16, %s14
  $region1: #{tpu_custom_call.1} parent=0
    #allocation2 [shape = 'u8[32768]{0}', space=vmem, size = 0x8000, scoped, tag = 'input window, operand 0']
    #allocation3 [shape = 's32[2]{0}', space=sflag, size = 0x8, scoped, tag = 'scoped memory for tpu_custom_call.1']
    #allocation4 [shape = 's32[2]{0}', space=sflag, size = 0x8, scoped, tag = 'scoped memory for tpu_custom_call.1']
    #allocation5 [shape = 'u8[8192]{0}', space=vmem, size = 0x2000, scoped, tag = 'input window, operand 1, single buffered']
    #allocation6 [shape = 's32[1]{0}', space=sflag, size = 0x4, scoped, tag = 'scoped memory for tpu_custom_call.1']
    #allocation7 [shape = 'u8[98304]{0}', space=vmem, size = 0x18000, scoped, tag = 'input window, operand 6, single buffered']
    #allocation8 [shape = 'u8[32768]{0}', space=vmem, size = 0x8000, scoped, tag = 'input window, operand 7, single buffered']
    #allocation9 [shape = 's32[1]{0}', space=sflag, size = 0x4, scoped, tag = 'scoped memory for tpu_custom_call.1']
    #allocation10 [shape = 'u8[131072]{0}', space=vmem, size = 0x20000, scoped, tag = 'input window, operand 9, single buffered']
    #allocation11 [shape = 'u8[131072]{0}', space=vmem, size = 0x20000, scoped, tag = 'input window, operand 11, single buffered']
    #allocation12 [shape = 's32[1]{0}', space=sflag, size = 0x4, scoped, tag = 'scoped memory for tpu_custom_call.1']
    #allocation13 [shape = 'u8[32768]{0}', space=vmem, size = 0x8000, scoped, tag = 'output window, operand 0']
    %18 = vsyncpa [#allocation3], 0
    %s19 = scalar_lea.sflag [#allocation3], 1
    %20 = vsyncpa %s19, 0
    %21 = vsyncpa [#allocation6], 0
    %22 = vsyncpa [#allocation9], 0
    %23 = vsyncpa [#allocation12], 0
    %24 = vsyncpa [#allocation4], 0
    %s25 = scalar_lea.sflag [#allocation4], 1
    %26 = vsyncpa %s25, 0
    loop: start=0, step=1, limit=4
    $region2: #{tpu_custom_call.1} parent=1 // loop_pre_header
      _
    $region3: #{tpu_custom_call.1} parent=1 // loop_header
      %s28 = sphi 0, %s32
      %p29 = scmp.ge.s32.totalorder %s28, 4
      %s38 = sphi 0, %s40
      %s41 = sphi 0, %s38
      %s42 = sphi 0, %s41
      %s58 = sphi 0, %s42
      %s62 = sphi 0, %s62
      %s64 = sphi 0, %s62
      %s65 = sphi 0, %s64
      %s79 = sphi 0, %s65
      %s83 = sphi 0, %s83
      %s85 = sphi 0, %s83
      %s86 = sphi 0, %s85
      %s100 = sphi 0, %s86
      %s104 = sphi 0, %s104
      %s106 = sphi 0, %s104
      %s107 = sphi 0, %s106
      %s121 = sphi 0, %s107
      %s125 = sphi 0, %s125
      %s127 = sphi 0, %s125
      %s128 = sphi 0, %s127
      %s142 = sphi 0, %s128
      %s146 = sphi 0, %s146
      %s148 = sphi 0, %s146
      %s149 = sphi 0, %s148
      %s163 = sphi 0, %s149
      %s167 = sphi 0, %s167
      %s169 = sphi 0, %s167
      %s170 = sphi 0, %s169
      %s184 = sphi 0, %s170
      %s188 = sphi 0, %s188
      %s190 = sphi 0, %s188
      %s191 = sphi 0, %s190
      %s205 = sphi 0, %s191
      %s209 = sphi 0, %s209
      %s211 = sphi 0, %s209
      %s212 = sphi 0, %s211
      %s226 = sphi 0, %s212
      %s230 = sphi 0, %s230
      %s232 = sphi 0, %s230
      %s233 = sphi 0, %s232
      %s247 = sphi 0, %s233
      %s251 = sphi 0, %s251
      %s253 = sphi 0, %s251
      %s254 = sphi 0, %s253
      %s268 = sphi 0, %s254
      %s272 = sphi 0, %s272
      %s274 = sphi 0, %s272
      %s275 = sphi 0, %s274
      %s289 = sphi 0, %s275
      %s293 = sphi 0, %s293
      %s295 = sphi 0, %s293
      %s296 = sphi 0, %s295
      %s310 = sphi 0, %s296
      %s316 = sphi 0, %s318
      %s319 = sphi 0, %s316
      %s320 = sphi 0, %s319
      %s336 = sphi 0, %s320
    $region4: #{tpu_custom_call.1} parent=1 // loop_header_branch
      %31 = sbr.rel (%p29) target = $region8
    $region5: #{tpu_custom_call.1} parent=1 // loop_body
      %s33 = ssub.s32 %s28, 1
      %s34 = ssub.s32 %s28, 2
      %s35 = sadd.s32 %s28, 1
      %s36 = ssub.s32 %s28, %s35
      %p37 = scmp.eq.s32.totalorder %s36, 0
      %s39 = sadd.s32 %s38, 1
      %s40 = scalar_select %p37, %s38, %s39
      %p43 = pneg %p37
      %p44 = scmp.eq.s32.totalorder %s28, 1
      %p45 = por %p43, %p44
      %p46 = scmp.ne.s32.totalorder %s38, %s41
      %p47 = scmp.eq.s32.totalorder %s28, 0
      %p48 = por %p46, %p47
      %p49 = scmp.ne.s32.totalorder %s38, %s41
      %p50 = scmp.eq.s32.totalorder %s33, 1
      %p51 = por %p49, %p50
      %p52 = scmp.ne.s32.totalorder %s41, %s42
      %p53 = scmp.eq.s32.totalorder %s33, 0
      %p54 = por %p52, %p53
      %p55 = scmp.ne.s32.totalorder %s41, %s42
      %p56 = scmp.eq.s32.totalorder %s34, 1
      %p57 = por %p55, %p56
      %p59 = scmp.ne.s32.totalorder %s42, %s58
      %p60 = scmp.eq.s32.totalorder %s34, 0
      %p61 = por %p59, %p60
      %s63 = sadd.s32 %s62, 1
      %p66 = scmp.eq.s32.totalorder %s28, 1
      %p67 = scmp.ne.s32.totalorder %s62, %s64
      %p68 = scmp.eq.s32.totalorder %s28, 0
      %p69 = por %p67, %p68
      %p70 = scmp.ne.s32.totalorder %s62, %s64
      %p71 = scmp.eq.s32.totalorder %s33, 1
      %p72 = por %p70, %p71
      %p73 = scmp.ne.s32.totalorder %s64, %s65
      %p74 = scmp.eq.s32.totalorder %s33, 0
      %p75 = por %p73, %p74
      %p76 = scmp.ne.s32.totalorder %s64, %s65
      %p77 = scmp.eq.s32.totalorder %s34, 1
      %p78 = por %p76, %p77
      %p80 = scmp.ne.s32.totalorder %s65, %s79
      %p81 = scmp.eq.s32.totalorder %s34, 0
      %p82 = por %p80, %p81
      %s84 = sadd.s32 %s83, 1
      %p87 = scmp.eq.s32.totalorder %s28, 1
      %p88 = scmp.ne.s32.totalorder %s83, %s85
      %p89 = scmp.eq.s32.totalorder %s28, 0
      %p90 = por %p88, %p89
      %p91 = scmp.ne.s32.totalorder %s83, %s85
      %p92 = scmp.eq.s32.totalorder %s33, 1
      %p93 = por %p91, %p92
      %p94 = scmp.ne.s32.totalorder %s85, %s86
      %p95 = scmp.eq.s32.totalorder %s33, 0
      %p96 = por %p94, %p95
      %p97 = scmp.ne.s32.totalorder %s85, %s86
      %p98 = scmp.eq.s32.totalorder %s34, 1
      %p99 = por %p97, %p98
      %p101 = scmp.ne.s32.totalorder %s86, %s100
      %p102 = scmp.eq.s32.totalorder %s34, 0
      %p103 = por %p101, %p102
      %s105 = sadd.s32 %s104, 1
      %p108 = scmp.eq.s32.totalorder %s28, 1
      %p109 = scmp.ne.s32.totalorder %s104, %s106
      %p110 = scmp.eq.s32.totalorder %s28, 0
      %p111 = por %p109, %p110
      %p112 = scmp.ne.s32.totalorder %s104, %s106
      %p113 = scmp.eq.s32.totalorder %s33, 1
      %p114 = por %p112, %p113
      %p115 = scmp.ne.s32.totalorder %s106, %s107
      %p116 = scmp.eq.s32.totalorder %s33, 0
      %p117 = por %p115, %p116
      %p118 = scmp.ne.s32.totalorder %s106, %s107
      %p119 = scmp.eq.s32.totalorder %s34, 1
      %p120 = por %p118, %p119
      %p122 = scmp.ne.s32.totalorder %s107, %s121
      %p123 = scmp.eq.s32.totalorder %s34, 0
      %p124 = por %p122, %p123
      %s126 = sadd.s32 %s125, 1
      %p129 = scmp.eq.s32.totalorder %s28, 1
      %p130 = scmp.ne.s32.totalorder %s125, %s127
      %p131 = scmp.eq.s32.totalorder %s28, 0
      %p132 = por %p130, %p131
      %p133 = scmp.ne.s32.totalorder %s125, %s127
      %p134 = scmp.eq.s32.totalorder %s33, 1
      %p135 = por %p133, %p134
      %p136 = scmp.ne.s32.totalorder %s127, %s128
      %p137 = scmp.eq.s32.totalorder %s33, 0
      %p138 = por %p136, %p137
      %p139 = scmp.ne.s32.totalorder %s127, %s128
      %p140 = scmp.eq.s32.totalorder %s34, 1
      %p141 = por %p139, %p140
      %p143 = scmp.ne.s32.totalorder %s128, %s142
      %p144 = scmp.eq.s32.totalorder %s34, 0
      %p145 = por %p143, %p144
      %s147 = sadd.s32 %s146, 1
      %p150 = scmp.eq.s32.totalorder %s28, 1
      %p151 = scmp.ne.s32.totalorder %s146, %s148
      %p152 = scmp.eq.s32.totalorder %s28, 0
      %p153 = por %p151, %p152
      %p154 = scmp.ne.s32.totalorder %s146, %s148
      %p155 = scmp.eq.s32.totalorder %s33, 1
      %p156 = por %p154, %p155
      %p157 = scmp.ne.s32.totalorder %s148, %s149
      %p158 = scmp.eq.s32.totalorder %s33, 0
      %p159 = por %p157, %p158
      %p160 = scmp.ne.s32.totalorder %s148, %s149
      %p161 = scmp.eq.s32.totalorder %s34, 1
      %p162 = por %p160, %p161
      %p164 = scmp.ne.s32.totalorder %s149, %s163
      %p165 = scmp.eq.s32.totalorder %s34, 0
      %p166 = por %p164, %p165
      %s168 = sadd.s32 %s167, 1
      %p171 = scmp.eq.s32.totalorder %s28, 1
      %p172 = scmp.ne.s32.totalorder %s167, %s169
      %p173 = scmp.eq.s32.totalorder %s28, 0
      %p174 = por %p172, %p173
      %p175 = scmp.ne.s32.totalorder %s167, %s169
      %p176 = scmp.eq.s32.totalorder %s33, 1
      %p177 = por %p175, %p176
      %p178 = scmp.ne.s32.totalorder %s169, %s170
      %p179 = scmp.eq.s32.totalorder %s33, 0
      %p180 = por %p178, %p179
      %p181 = scmp.ne.s32.totalorder %s169, %s170
      %p182 = scmp.eq.s32.totalorder %s34, 1
      %p183 = por %p181, %p182
      %p185 = scmp.ne.s32.totalorder %s170, %s184
      %p186 = scmp.eq.s32.totalorder %s34, 0
      %p187 = por %p185, %p186
      %s189 = sadd.s32 %s188, 1
      %p192 = scmp.eq.s32.totalorder %s28, 1
      %p193 = scmp.ne.s32.totalorder %s188, %s190
      %p194 = scmp.eq.s32.totalorder %s28, 0
      %p195 = por %p193, %p194
      %p196 = scmp.ne.s32.totalorder %s188, %s190
      %p197 = scmp.eq.s32.totalorder %s33, 1
      %p198 = por %p196, %p197
      %p199 = scmp.ne.s32.totalorder %s190, %s191
      %p200 = scmp.eq.s32.totalorder %s33, 0
      %p201 = por %p199, %p200
      %p202 = scmp.ne.s32.totalorder %s190, %s191
      %p203 = scmp.eq.s32.totalorder %s34, 1
      %p204 = por %p202, %p203
      %p206 = scmp.ne.s32.totalorder %s191, %s205
      %p207 = scmp.eq.s32.totalorder %s34, 0
      %p208 = por %p206, %p207
      %s210 = sadd.s32 %s209, 1
      %p213 = scmp.eq.s32.totalorder %s28, 1
      %p214 = scmp.ne.s32.totalorder %s209, %s211
      %p215 = scmp.eq.s32.totalorder %s28, 0
      %p216 = por %p214, %p215
      %p217 = scmp.ne.s32.totalorder %s209, %s211
      %p218 = scmp.eq.s32.totalorder %s33, 1
      %p219 = por %p217, %p218
      %p220 = scmp.ne.s32.totalorder %s211, %s212
      %p221 = scmp.eq.s32.totalorder %s33, 0
      %p222 = por %p220, %p221
      %p223 = scmp.ne.s32.totalorder %s211, %s212
      %p224 = scmp.eq.s32.totalorder %s34, 1
      %p225 = por %p223, %p224
      %p227 = scmp.ne.s32.totalorder %s212, %s226
      %p228 = scmp.eq.s32.totalorder %s34, 0
      %p229 = por %p227, %p228
      %s231 = sadd.s32 %s230, 1
      %p234 = scmp.eq.s32.totalorder %s28, 1
      %p235 = scmp.ne.s32.totalorder %s230, %s232
      %p236 = scmp.eq.s32.totalorder %s28, 0
      %p237 = por %p235, %p236
      %p238 = scmp.ne.s32.totalorder %s230, %s232
      %p239 = scmp.eq.s32.totalorder %s33, 1
      %p240 = por %p238, %p239
      %p241 = scmp.ne.s32.totalorder %s232, %s233
      %p242 = scmp.eq.s32.totalorder %s33, 0
      %p243 = por %p241, %p242
      %p244 = scmp.ne.s32.totalorder %s232, %s233
      %p245 = scmp.eq.s32.totalorder %s34, 1
      %p246 = por %p244, %p245
      %p248 = scmp.ne.s32.totalorder %s233, %s247
      %p249 = scmp.eq.s32.totalorder %s34, 0
      %p250 = por %p248, %p249
      %s252 = sadd.s32 %s251, 1
      %p255 = scmp.eq.s32.totalorder %s28, 1
      %p256 = scmp.ne.s32.totalorder %s251, %s253
      %p257 = scmp.eq.s32.totalorder %s28, 0
      %p258 = por %p256, %p257
      %p259 = scmp.ne.s32.totalorder %s251, %s253
      %p260 = scmp.eq.s32.totalorder %s33, 1
      %p261 = por %p259, %p260
      %p262 = scmp.ne.s32.totalorder %s253, %s254
      %p263 = scmp.eq.s32.totalorder %s33, 0
      %p264 = por %p262, %p263
      %p265 = scmp.ne.s32.totalorder %s253, %s254
      %p266 = scmp.eq.s32.totalorder %s34, 1
      %p267 = por %p265, %p266
      %p269 = scmp.ne.s32.totalorder %s254, %s268
      %p270 = scmp.eq.s32.totalorder %s34, 0
      %p271 = por %p269, %p270
      %s273 = sadd.s32 %s272, 1
      %p276 = scmp.eq.s32.totalorder %s28, 1
      %p277 = scmp.ne.s32.totalorder %s272, %s274
      %p278 = scmp.eq.s32.totalorder %s28, 0
      %p279 = por %p277, %p278
      %p280 = scmp.ne.s32.totalorder %s272, %s274
      %p281 = scmp.eq.s32.totalorder %s33, 1
      %p282 = por %p280, %p281
      %p283 = scmp.ne.s32.totalorder %s274, %s275
      %p284 = scmp.eq.s32.totalorder %s33, 0
      %p285 = por %p283, %p284
      %p286 = scmp.ne.s32.totalorder %s274, %s275
      %p287 = scmp.eq.s32.totalorder %s34, 1
      %p288 = por %p286, %p287
      %p290 = scmp.ne.s32.totalorder %s275, %s289
      %p291 = scmp.eq.s32.totalorder %s34, 0
      %p292 = por %p290, %p291
      %s294 = sadd.s32 %s293, 1
      %p297 = scmp.eq.s32.totalorder %s28, 1
      %p298 = scmp.ne.s32.totalorder %s293, %s295
      %p299 = scmp.eq.s32.totalorder %s28, 0
      %p300 = por %p298, %p299
      %p301 = scmp.ne.s32.totalorder %s293, %s295
      %p302 = scmp.eq.s32.totalorder %s33, 1
      %p303 = por %p301, %p302
      %p304 = scmp.ne.s32.totalorder %s295, %s296
      %p305 = scmp.eq.s32.totalorder %s33, 0
      %p306 = por %p304, %p305
      %p307 = scmp.ne.s32.totalorder %s295, %s296
      %p308 = scmp.eq.s32.totalorder %s34, 1
      %p309 = por %p307, %p308
      %p311 = scmp.ne.s32.totalorder %s296, %s310
      %p312 = scmp.eq.s32.totalorder %s34, 0
      %p313 = por %p311, %p312
      %s314 = ssub.s32 %s28, %s35
      %p315 = scmp.eq.s32.totalorder %s314, 0
      %s317 = sadd.s32 %s316, 1
      %s318 = scalar_select %p315, %s316, %s317
      %p321 = pneg %p315
      %p322 = scmp.eq.s32.totalorder %s28, 1
      %p323 = por %p321, %p322
      %p324 = scmp.ne.s32.totalorder %s316, %s319
      %p325 = scmp.eq.s32.totalorder %s28, 0
      %p326 = por %p324, %p325
      %p327 = scmp.ne.s32.totalorder %s316, %s319
      %p328 = scmp.eq.s32.totalorder %s33, 1
      %p329 = por %p327, %p328
      %p330 = scmp.ne.s32.totalorder %s319, %s320
      %p331 = scmp.eq.s32.totalorder %s33, 0
      %p332 = por %p330, %p331
      %p333 = scmp.ne.s32.totalorder %s319, %s320
      %p334 = scmp.eq.s32.totalorder %s34, 1
      %p335 = por %p333, %p334
      %p337 = scmp.ne.s32.totalorder %s320, %s336
      %p338 = scmp.eq.s32.totalorder %s34, 0
      %p339 = por %p337, %p338
      %p340 = scmp.le.s32.totalorder 1, %s28
      %p341 = scmp.lt.s32.totalorder %s28, 3
      %p342 = pnand %p340, %p341
      %p343 = pneg %p342
      // Predicated region
      $region9: #{tpu_custom_call.1} parent=5 // pred_check
        _
      $region10: #{tpu_custom_call.1} parent=5 // pred_check_branch
        %345 = sbr.rel (%p342) target = $region12
      $region11: #{tpu_custom_call.1} parent=5 // pred_region
        %s346 = ssub.s32 %s28, 1
        // Predicated region
        $region13: #{tpu_custom_call.1} parent=11 // pred_check
          %p347 = pneg %p75
        $region14: #{tpu_custom_call.1} parent=11 // pred_check_branch
          %349 = sbr.rel (%p347) target = $region16
        $region15: #{tpu_custom_call.1} parent=11 // pred_region
          %s351 = ssub.s32 256, 256
          %352 = vsyncadd [#allocation6], %s351
          %s353 = sshll.u32 [#allocation5], 4
          %s354 = int_to_ptr.vmem [resolvable:$true] %s353
          %359 = dma.hbm_to_vmem [thread:$0]  %s1, 256, %s354, [#allocation6], 128, 128, 8
        $region16: #{tpu_custom_call.1} parent=11 // pred_fallthru
          _
        // Predicated region
        $region17: #{tpu_custom_call.1} parent=11 // pred_check
          %p360 = pneg %p96
        $region18: #{tpu_custom_call.1} parent=11 // pred_check_branch
          %362 = sbr.rel (%p360) target = $region20
        $region19: #{tpu_custom_call.1} parent=11 // pred_region
          _
        $region20: #{tpu_custom_call.1} parent=11 // pred_fallthru
          _
        // Predicated region
        $region21: #{tpu_custom_call.1} parent=11 // pred_check
          %p363 = pneg %p117
        $region22: #{tpu_custom_call.1} parent=11 // pred_check_branch
          %365 = sbr.rel (%p363) target = $region24
        $region23: #{tpu_custom_call.1} parent=11 // pred_region
          _
        $region24: #{tpu_custom_call.1} parent=11 // pred_fallthru
          _
        // Predicated region
        $region25: #{tpu_custom_call.1} parent=11 // pred_check
          %p366 = pneg %p138
        $region26: #{tpu_custom_call.1} parent=11 // pred_check_branch
          %368 = sbr.rel (%p366) target = $region28
        $region27: #{tpu_custom_call.1} parent=11 // pred_region
          _
        $region28: #{tpu_custom_call.1} parent=11 // pred_fallthru
          _
        // Predicated region
        $region29: #{tpu_custom_call.1} parent=11 // pred_check
          %p369 = pneg %p159
        $region30: #{tpu_custom_call.1} parent=11 // pred_check_branch
          %371 = sbr.rel (%p369) target = $region32
        $region31: #{tpu_custom_call.1} parent=11 // pred_region
          _
        $region32: #{tpu_custom_call.1} parent=11 // pred_fallthru
          _
        // Predicated region
        $region33: #{tpu_custom_call.1} parent=11 // pred_check
          %p372 = pneg %p180
        $region34: #{tpu_custom_call.1} parent=11 // pred_check_branch
          %374 = sbr.rel (%p372) target = $region36
        $region35: #{tpu_custom_call.1} parent=11 // pred_region
          %s376 = ssub.s32 3072, 3072
          %377 = vsyncadd [#allocation6], %s376
          %s378 = sshll.u32 [#allocation7], 4
          %s379 = int_to_ptr.vmem [resolvable:$true] %s378
          %384 = dma.hbm_to_vmem [thread:$0]  %s6, 3072, %s379, [#allocation6], 192, 192, 12
        $region36: #{tpu_custom_call.1} parent=11 // pred_fallthru
          _
        // Predicated region
        $region37: #{tpu_custom_call.1} parent=11 // pred_check
          %p385 = pneg %p201
        $region38: #{tpu_custom_call.1} parent=11 // pred_check_branch
          %387 = sbr.rel (%p385) target = $region40
        $region39: #{tpu_custom_call.1} parent=11 // pred_region
          %s389 = ssub.s32 1024, 1024
          %390 = vsyncadd [#allocation9], %s389
          %s391 = sshll.u32 [#allocation8], 4
          %s392 = int_to_ptr.vmem [resolvable:$true] %s391
          %397 = dma.hbm_to_vmem [thread:$0]  %s7, 1024, %s392, [#allocation9], 64, 64, 4
        $region40: #{tpu_custom_call.1} parent=11 // pred_fallthru
          _
        // Predicated region
        $region41: #{tpu_custom_call.1} parent=11 // pred_check
          %p398 = pneg %p222
        $region42: #{tpu_custom_call.1} parent=11 // pred_check_branch
          %400 = sbr.rel (%p398) target = $region44
        $region43: #{tpu_custom_call.1} parent=11 // pred_region
          _
        $region44: #{tpu_custom_call.1} parent=11 // pred_fallthru
          _
        // Predicated region
        $region45: #{tpu_custom_call.1} parent=11 // pred_check
          %p401 = pneg %p243
        $region46: #{tpu_custom_call.1} parent=11 // pred_check_branch
          %403 = sbr.rel (%p401) target = $region48
        $region47: #{tpu_custom_call.1} parent=11 // pred_region
          %s405 = ssub.s32 4096, 4096
          %406 = vsyncadd [#allocation9], %s405
          %s407 = sshll.u32 [#allocation10], 4
          %s408 = int_to_ptr.vmem [resolvable:$true] %s407
          %413 = dma.hbm_to_vmem [thread:$0]  %s9, 4096, %s408, [#allocation9], 256, 256, 16
        $region48: #{tpu_custom_call.1} parent=11 // pred_fallthru
          _
        // Predicated region
        $region49: #{tpu_custom_call.1} parent=11 // pred_check
          %p414 = pneg %p264
        $region50: #{tpu_custom_call.1} parent=11 // pred_check_branch
          %416 = sbr.rel (%p414) target = $region52
        $region51: #{tpu_custom_call.1} parent=11 // pred_region
          _
        $region52: #{tpu_custom_call.1} parent=11 // pred_fallthru
          _
        // Predicated region
        $region53: #{tpu_custom_call.1} parent=11 // pred_check
          %p417 = pneg %p285
        $region54: #{tpu_custom_call.1} parent=11 // pred_check_branch
          %419 = sbr.rel (%p417) target = $region56
        $region55: #{tpu_custom_call.1} parent=11 // pred_region
          %s421 = ssub.s32 4096, 4096
          %422 = vsyncadd [#allocation12], %s421
          %s423 = sshll.u32 [#allocation11], 4
          %s424 = int_to_ptr.vmem [resolvable:$true] %s423
          %429 = dma.hbm_to_vmem [thread:$0]  %s11, 4096, %s424, [#allocation12], 64, 64, 4
        $region56: #{tpu_custom_call.1} parent=11 // pred_fallthru
          _
        // Predicated region
        $region57: #{tpu_custom_call.1} parent=11 // pred_check
          %p430 = pneg %p306
        $region58: #{tpu_custom_call.1} parent=11 // pred_check_branch
          %432 = sbr.rel (%p430) target = $region60
        $region59: #{tpu_custom_call.1} parent=11 // pred_region
          _
        $region60: #{tpu_custom_call.1} parent=11 // pred_fallthru
          _
      $region12: #{tpu_custom_call.1} parent=5 // pred_fallthru
        _
      %p433 = scmp.lt.s32.totalorder %s28, 2
      // Predicated region
      $region61: #{tpu_custom_call.1} parent=5 // pred_check
        %p434 = pneg %p433
      $region62: #{tpu_custom_call.1} parent=5 // pred_check_branch
        %436 = sbr.rel (%p434) target = $region64
      $region63: #{tpu_custom_call.1} parent=5 // pred_region
        // Predicated region
        $region65: #{tpu_custom_call.1} parent=63 // pred_check
          %p437 = pneg %p48
        $region66: #{tpu_custom_call.1} parent=63 // pred_check_branch
          %439 = sbr.rel (%p437) target = $region68
        $region67: #{tpu_custom_call.1} parent=63 // pred_region
          %s440 = sand.u32 %s38, 1
          %s441 = scalar_lea.sflag [#allocation3], %s440
          %s442 = sand.u32 %s38, 1
          %s443 = smul.addr %s442, 32
          %s444 = scalar_lea.vmem [#allocation2], %s443
          %s445 = smul.u32 4, %s28
          %s447 = ssub.s32 512, 512
          %448 = vsyncadd %s441, %s447
          %s449 = smul.addr %s445, 128
          %s450 = scalar_lea.hbm %s0, %s449
          %s451 = sshll.u32 %s444, 4
          %s452 = int_to_ptr.vmem [resolvable:$true] %s451
          %457 = dma.hbm_to_vmem [thread:$0]  %s450, 512, %s452, %s441, 128, 128, 8
        $region68: #{tpu_custom_call.1} parent=63 // pred_fallthru
          _
      $region64: #{tpu_custom_call.1} parent=5 // pred_fallthru
        _
      %p458 = scmp.le.s32.totalorder 1, %s28
      %p459 = scmp.lt.s32.totalorder %s28, 3
      %p460 = pnand %p458, %p459
      %p461 = pneg %p460
      // Predicated region
      $region69: #{tpu_custom_call.1} parent=5 // pred_check
        _
      $region70: #{tpu_custom_call.1} parent=5 // pred_check_branch
        %463 = sbr.rel (%p460) target = $region72
      $region71: #{tpu_custom_call.1} parent=5 // pred_region
        %s464 = ssub.s32 %s28, 1
        %s465 = sand.u32 %s41, 1
        %s466 = scalar_lea.sflag [#allocation3], %s465
        %s467 = sand.u32 %s41, 1
        %s468 = smul.addr %s467, 32
        %s469 = scalar_lea.vmem [#allocation2], %s468
        // Predicated region
        $region73: #{tpu_custom_call.1} parent=71 // pred_check
          %p470 = pneg %p54
        $region74: #{tpu_custom_call.1} parent=71 // pred_check_branch
          %472 = sbr.rel (%p470) target = $region76
        $region75: #{tpu_custom_call.1} parent=71 // pred_region
          %473 = dma.done %s466, 512
        $region76: #{tpu_custom_call.1} parent=71 // pred_fallthru
          _
        // Predicated region
        $region77: #{tpu_custom_call.1} parent=71 // pred_check
          %p474 = pneg %p75
        $region78: #{tpu_custom_call.1} parent=71 // pred_check_branch
          %476 = sbr.rel (%p474) target = $region80
        $region79: #{tpu_custom_call.1} parent=71 // pred_region
          %477 = dma.done [#allocation6], 256
        $region80: #{tpu_custom_call.1} parent=71 // pred_fallthru
          _
        // Predicated region
        $region81: #{tpu_custom_call.1} parent=71 // pred_check
          %p478 = pneg %p180
        $region82: #{tpu_custom_call.1} parent=71 // pred_check_branch
          %480 = sbr.rel (%p478) target = $region84
        $region83: #{tpu_custom_call.1} parent=71 // pred_region
          %481 = dma.done [#allocation6], 3072
        $region84: #{tpu_custom_call.1} parent=71 // pred_fallthru
          _
        // Predicated region
        $region85: #{tpu_custom_call.1} parent=71 // pred_check
          %p482 = pneg %p201
        $region86: #{tpu_custom_call.1} parent=71 // pred_check_branch
          %484 = sbr.rel (%p482) target = $region88
        $region87: #{tpu_custom_call.1} parent=71 // pred_region
          %485 = dma.done [#allocation9], 1024
        $region88: #{tpu_custom_call.1} parent=71 // pred_fallthru
          _
        // Predicated region
        $region89: #{tpu_custom_call.1} parent=71 // pred_check
          %p486 = pneg %p243
        $region90: #{tpu_custom_call.1} parent=71 // pred_check_branch
          %488 = sbr.rel (%p486) target = $region92
        $region91: #{tpu_custom_call.1} parent=71 // pred_region
          %489 = dma.done [#allocation9], 4096
        $region92: #{tpu_custom_call.1} parent=71 // pred_fallthru
          _
        // Predicated region
        $region93: #{tpu_custom_call.1} parent=71 // pred_check
          %p490 = pneg %p285
        $region94: #{tpu_custom_call.1} parent=71 // pred_check_branch
          %492 = sbr.rel (%p490) target = $region96
        $region95: #{tpu_custom_call.1} parent=71 // pred_region
          %493 = dma.done [#allocation12], 4096
        $region96: #{tpu_custom_call.1} parent=71 // pred_fallthru
          _
        %s494 = sand.u32 %s41, 1
        %s495 = scalar_lea.sflag [#allocation3], %s494
        %s496 = sand.u32 %s41, 1
        %s497 = smul.addr %s496, 32
        %s498 = scalar_lea.vmem [#allocation2], %s497
        %p499 = pneg %p54
        %p500 = pneg %p51
        %p501 = pneg %p75
        %p502 = pneg %p72
        %p503 = pneg %p96
        %p504 = pneg %p93
        %p505 = pneg %p117
        %p506 = pneg %p114
        %p507 = pneg %p138
        %p508 = pneg %p135
        %p509 = pneg %p159
        %p510 = pneg %p156
        %p511 = pneg %p180
        %p512 = pneg %p177
        %p513 = pneg %p201
        %p514 = pneg %p198
        %p515 = pneg %p222
        %p516 = pneg %p219
        %p517 = pneg %p243
        %p518 = pneg %p240
        %p519 = pneg %p264
        %p520 = pneg %p261
        %p521 = pneg %p285
        %p522 = pneg %p282
        %p523 = pneg %p306
        %p524 = pneg %p303
        %p525 = pneg %p332
        %p526 = pneg %p329
        %s527 = sand.u32 %s319, 1
        %s528 = scalar_lea.sflag [#allocation4], %s527
        %s529 = sand.u32 %s319, 1
        %s530 = smul.addr %s529, 32
        %s531 = scalar_lea.vmem [#allocation13], %s530
        %s532 = smul.u32 4, %s33
        %s533 = smul.u32 4, %s33
        %v535 = vld [vmem:[%s469] sm:$0xff]
        %v536 = vld [vmem:[%s469 + $0x8] sm:$0xff]
        %v537 = vld [vmem:[%s469 + $0x10] sm:$0xff]
        %v538 = vld [vmem:[%s469 + $0x18] sm:$0xff]
        %v539 = vld [vmem:[#allocation5] sm:$0xff]
        %v540 = vld [vmem:[#allocation5 + $0x8] sm:$0xff]
        %541 = vadd.xlane.f32.xlu0 %v535
        %v542 = vpop.xlane.xlu0 %541
        %543 = vadd.xlane.f32.xlu0 %v536
        %v544 = vpop.xlane.xlu0 %543
        %545 = vadd.xlane.f32.xlu0 %v537
        %v546 = vpop.xlane.xlu0 %545
        %547 = vadd.xlane.f32.xlu0 %v538
        %v548 = vpop.xlane.xlu0 %547
        %v549 = vrcp.pop 128.0
        %v550 = vmul.f32 %v542, %v549
        %v551 = vmul.f32 %v544, %v549
        %v552 = vmul.f32 %v546, %v549
        %v553 = vmul.f32 %v548, %v549
        %v554 = vsub.f32 %v535, %v550
        %v555 = vsub.f32 %v536, %v551
        %v556 = vsub.f32 %v537, %v552
        %v557 = vsub.f32 %v538, %v553
        %v558 = vmul.f32 %v554, %v554
        %v559 = vmul.f32 %v555, %v555
        %v560 = vmul.f32 %v556, %v556
        %v561 = vmul.f32 %v557, %v557
        %562 = vadd.xlane.f32.xlu0 %v558
        %v563 = vpop.xlane.xlu0 %562
        %564 = vadd.xlane.f32.xlu0 %v559
        %v565 = vpop.xlane.xlu0 %564
        %566 = vadd.xlane.f32.xlu0 %v560
        %v567 = vpop.xlane.xlu0 %566
        %568 = vadd.xlane.f32.xlu0 %v561
        %v569 = vpop.xlane.xlu0 %568
        %v570 = vmul.f32 %v563, %v549
        %v571 = vmul.f32 %v565, %v549
        %v572 = vmul.f32 %v567, %v549
        %v573 = vmul.f32 %v569, %v549
        %v574 = vadd.f32 %v570, 1e-05
        %v575 = vadd.f32 %v571, 1e-05
        %v576 = vadd.f32 %v572, 1e-05
        %v577 = vadd.f32 %v573, 1e-05
        %v578 = vrsqrt.pop %v574
        %v579 = vrsqrt.pop %v575
        %v580 = vrsqrt.pop %v576
        %v581 = vrsqrt.pop %v577
        %v582 = vmul.f32 %v554, %v578
        %v583 = vmul.f32 %v555, %v579
        %v584 = vmul.f32 %v556, %v580
        %v585 = vmul.f32 %v557, %v581
        %v586 = vld [vmem:[%s2] sm:$0x1]
        %v588 = vlaneseq
        %v589 = vshrl.u32 %v588, 7
        %v590 = vsub.s32 0, %v589
        %v591 = vrot.slane %v586, %v590
        %v593 = vmul.f32 %v582, %v591
        %v594 = vmul.f32 %v583, %v591
        %v595 = vmul.f32 %v584, %v591
        %v596 = vmul.f32 %v585, %v591
        %v597 = vld [vmem:[%s3] sm:$0x1]
        %v599 = vlaneseq
        %v600 = vshrl.u32 %v599, 7
        %v601 = vsub.s32 0, %v600
        %v602 = vrot.slane %v597, %v601
        %v604 = vadd.f32 %v593, %v602
        %v605 = vadd.f32 %v594, %v602
        %v606 = vadd.f32 %v595, %v602
        %v607 = vadd.f32 %v596, %v602
        %v608 = vpack.c.bf16 %v605, %v604
        %v609 = vpack.c.bf16 %v607, %v606
        %v610 = vld [vmem:[#allocation7] sm:$0xff]
        %v611 = vld [vmem:[#allocation7 + $0x8] sm:$0xf]
        %v612 = vld [vmem:[#allocation7 + $0xc] sm:$0xff]
        %v613 = vld [vmem:[#allocation7 + $0x14] sm:$0xf]
        %v614 = vld [vmem:[#allocation7 + $0x18] sm:$0xff]
        %v615 = vld [vmem:[#allocation7 + $0x20] sm:$0xf]
        %v616 = vld [vmem:[#allocation7 + $0x24] sm:$0xff]
        %v617 = vld [vmem:[#allocation7 + $0x2c] sm:$0xf]
        %v618 = vld [vmem:[#allocation7 + $0x30] sm:$0xff]
        %v619 = vld [vmem:[#allocation7 + $0x38] sm:$0xf]
        %v620 = vld [vmem:[#allocation7 + $0x3c] sm:$0xff]
        %v621 = vld [vmem:[#allocation7 + $0x44] sm:$0xf]
        %v622 = vld [vmem:[#allocation7 + $0x48] sm:$0xff]
        %v623 = vld [vmem:[#allocation7 + $0x50] sm:$0xf]
        %v624 = vld [vmem:[#allocation7 + $0x54] sm:$0xff]
        %v625 = vld [vmem:[#allocation7 + $0x5c] sm:$0xf]
        %v626 = vld [vmem:[#allocation7 + $0x60] sm:$0xff]
        %v627 = vld [vmem:[#allocation7 + $0x68] sm:$0xf]
        %v628 = vld [vmem:[#allocation7 + $0x6c] sm:$0xff]
        %v629 = vld [vmem:[#allocation7 + $0x74] sm:$0xf]
        %v630 = vld [vmem:[#allocation7 + $0x78] sm:$0xff]
        %v631 = vld [vmem:[#allocation7 + $0x80] sm:$0xf]
        %v632 = vld [vmem:[#allocation7 + $0x84] sm:$0xff]
        %v633 = vld [vmem:[#allocation7 + $0x8c] sm:$0xf]
        %v634 = vld [vmem:[#allocation7 + $0x90] sm:$0xff]
        %v635 = vld [vmem:[#allocation7 + $0x98] sm:$0xf]
        %v636 = vld [vmem:[#allocation7 + $0x9c] sm:$0xff]
        %v637 = vld [vmem:[#allocation7 + $0xa4] sm:$0xf]
        %v638 = vld [vmem:[#allocation7 + $0xa8] sm:$0xff]
        %v639 = vld [vmem:[#allocation7 + $0xb0] sm:$0xf]
        %v640 = vld [vmem:[#allocation7 + $0xb4] sm:$0xff]
        %v641 = vld [vmem:[#allocation7 + $0xbc] sm:$0xf]
        %v674 = vunpack.c.l.b16 %v610
        %v675 = vunpack.c.h.b16 %v610
        %v676 = vunpack.c.l.b16 %v611
        %v677 = vunpack.c.l.b16 %v612
        %v678 = vunpack.c.h.b16 %v612
        %v679 = vunpack.c.l.b16 %v613
        %v680 = vunpack.c.l.b16 %v614
        %v681 = vunpack.c.h.b16 %v614
        %v682 = vunpack.c.l.b16 %v615
        %v683 = vunpack.c.l.b16 %v616
        %v684 = vunpack.c.h.b16 %v616
        %v685 = vunpack.c.l.b16 %v617
        %v686 = vunpack.c.l.b16 %v618
        %v687 = vunpack.c.h.b16 %v618
        %v688 = vunpack.c.l.b16 %v619
        %v689 = vunpack.c.l.b16 %v620
        %v690 = vunpack.c.h.b16 %v620
        %v691 = vunpack.c.l.b16 %v621
        %v692 = vunpack.c.l.b16 %v622
        %v693 = vunpack.c.h.b16 %v622
        %v694 = vunpack.c.l.b16 %v623
        %v695 = vunpack.c.l.b16 %v624
        %v696 = vunpack.c.h.b16 %v624
        %v697 = vunpack.c.l.b16 %v625
        %v698 = vunpack.c.l.b16 %v626
        %v699 = vunpack.c.h.b16 %v626
        %v700 = vunpack.c.l.b16 %v627
        %v701 = vunpack.c.l.b16 %v628
        %v702 = vunpack.c.h.b16 %v628
        %v703 = vunpack.c.l.b16 %v629
        %v704 = vunpack.c.l.b16 %v630
        %v705 = vunpack.c.h.b16 %v630
        %v706 = vunpack.c.l.b16 %v631
        %v707 = vunpack.c.l.b16 %v632
        %v708 = vunpack.c.h.b16 %v632
        %v709 = vunpack.c.l.b16 %v633
        %v710 = vunpack.c.l.b16 %v634
        %v711 = vunpack.c.h.b16 %v634
        %v712 = vunpack.c.l.b16 %v635
        %v713 = vunpack.c.l.b16 %v636
        %v714 = vunpack.c.h.b16 %v636
        %v715 = vunpack.c.l.b16 %v637
        %v716 = vunpack.c.l.b16 %v638
        %v717 = vunpack.c.h.b16 %v638
        %v718 = vunpack.c.l.b16 %v639
        %v719 = vunpack.c.l.b16 %v640
        %v720 = vunpack.c.h.b16 %v640
        %v721 = vunpack.c.l.b16 %v641
        %v722 = vpack.c.b16 %v677, %v674
        %v723 = vpack.c.b16 %v678, %v675
        %v724 = vpack.c.b16 %v679, %v676
        %v725 = vpack.c.b16 %v683, %v680
        %v726 = vpack.c.b16 %v684, %v681
        %v727 = vpack.c.b16 %v685, %v682
        %v728 = vpack.c.b16 %v689, %v686
        %v729 = vpack.c.b16 %v690, %v687
        %v730 = vpack.c.b16 %v691, %v688
        %v731 = vpack.c.b16 %v695, %v692
        %v732 = vpack.c.b16 %v696, %v693
        %v733 = vpack.c.b16 %v697, %v694
        %v734 = vpack.c.b16 %v701, %v698
        %v735 = vpack.c.b16 %v702, %v699
        %v736 = vpack.c.b16 %v703, %v700
        %v737 = vpack.c.b16 %v707, %v704
        %v738 = vpack.c.b16 %v708, %v705
        %v739 = vpack.c.b16 %v709, %v706
        %v740 = vpack.c.b16 %v713, %v710
        %v741 = vpack.c.b16 %v714, %v711
        %v742 = vpack.c.b16 %v715, %v712
        %v743 = vpack.c.b16 %v719, %v716
        %v744 = vpack.c.b16 %v720, %v717
        %v745 = vpack.c.b16 %v721, %v718
        %770 = vmatprep.subr.bf16.mxu0 %v744
        %771 = vmatpush1.bf16.msra.mxu0 %v743
        %772 = vmatprep.subr.bf16.mxu0 %v741
        %773 = vmatpush1.bf16.msra.mxu0 %v740
        %774 = vmatprep.subr.bf16.mxu0 %v738
        %775 = vmatpush1.bf16.msra.mxu0 %v737
        %776 = vmatprep.subr.bf16.mxu0 %v735
        %777 = vmatpush1.bf16.msra.mxu0 %v734
        %778 = vmatprep.subr.bf16.mxu0 %v732
        %779 = vmatpush1.bf16.msra.mxu0 %v731
        %780 = vmatprep.subr.bf16.mxu0 %v729
        %781 = vmatpush1.bf16.msra.mxu0 %v728
        %782 = vmatprep.subr.bf16.mxu0 %v726
        %783 = vmatpush1.bf16.msra.mxu0 %v725
        %784 = vmatprep.subr.bf16.mxu0 %v723
        %785 = vmatpush1.bf16.msra.mxu0 %v722
        %786 = vmatprep.subr.bf16.mxu0 0
        %787 = vmatpush2.bf16.msra.mxu0 0
        %788 = vmatprep.subr.bf16.mxu0 0
        %789 = vmatpush2.bf16.msra.mxu0 0
        %790 = vmatprep.subr.bf16.mxu0 0
        %791 = vmatpush2.bf16.msra.mxu0 0
        %792 = vmatprep.subr.bf16.mxu0 0
        %793 = vmatpush2.bf16.msra.mxu0 0
        %794 = vmatprep.subr.bf16.mxu0 0
        %795 = vmatpush2.bf16.msra.mxu0 0
        %796 = vmatprep.subr.bf16.mxu0 0
        %797 = vmatpush2.bf16.msra.mxu0 0
        %798 = vmatprep.subr.bf16.mxu0 0
        %799 = vmatpush2.bf16.msra.mxu0 0
        %800 = vmatprep.subr.bf16.mxu0 0
        %801 = vmatpush2.bf16.msra.mxu0 0
        %802 = vmatprep.mubr.bf16.mxu0 0
        %803 = vmatmul.mubr.bf16.gmra.mxu0 %v608
        %v804 = vpop.f32.mrf.mxu0
        %v805 = vadd.f32 0.0, %v804
        %v806 = vpop.f32.mrf.mxu0
        %v807 = vadd.f32 0.0, %v806
        %v808 = vpop.f32.mrf.mxu0
        %v809 = vadd.f32 0.0, %v808
        %v810 = vpop.f32.mrf.mxu0
        %v811 = vadd.f32 0.0, %v810
        %812 = vmatprep.mubr.bf16.mxu0 0
        %813 = vmatmul.mubr.bf16.gmra.mxu0 %v609
        %v814 = vpop.f32.mrf.mxu0
        %v815 = vadd.f32 0.0, %v814
        %v816 = vpop.f32.mrf.mxu0
        %v817 = vadd.f32 0.0, %v816
        %v818 = vpop.f32.mrf.mxu0
        %v819 = vadd.f32 0.0, %v818
        %v820 = vpop.f32.mrf.mxu0
        %v821 = vadd.f32 0.0, %v820
        %822 = vdwg.mxu0
        %823 = vmatprep.subr.bf16.mxu0 0
        %824 = vmatpush1.bf16.msra.mxu0 %v745
        %825 = vmatprep.subr.bf16.mxu0 0
        %826 = vmatpush1.bf16.msra.mxu0 %v742
        %827 = vmatprep.subr.bf16.mxu0 0
        %828 = vmatpush1.bf16.msra.mxu0 %v739
        %829 = vmatprep.subr.bf16.mxu0 0
        %830 = vmatpush1.bf16.msra.mxu0 %v736
        %831 = vmatprep.subr.bf16.mxu0 0
        %832 = vmatpush1.bf16.msra.mxu0 %v733
        %833 = vmatprep.subr.bf16.mxu0 0
        %834 = vmatpush1.bf16.msra.mxu0 %v730
        %835 = vmatprep.subr.bf16.mxu0 0
        %836 = vmatpush1.bf16.msra.mxu0 %v727
        %837 = vmatprep.subr.bf16.mxu0 0
        %838 = vmatpush1.bf16.msra.mxu0 %v724
        %839 = vmatprep.subr.bf16.mxu0 0
        %840 = vmatpush2.bf16.msra.mxu0 0
        %841 = vmatprep.subr.bf16.mxu0 0
        %842 = vmatpush2.bf16.msra.mxu0 0
        %843 = vmatprep.subr.bf16.mxu0 0
        %844 = vmatpush2.bf16.msra.mxu0 0
        %845 = vmatprep.subr.bf16.mxu0 0
        %846 = vmatpush2.bf16.msra.mxu0 0
        %847 = vmatprep.subr.bf16.mxu0 0
        %848 = vmatpush2.bf16.msra.mxu0 0
        %849 = vmatprep.subr.bf16.mxu0 0
        %850 = vmatpush2.bf16.msra.mxu0 0
        %851 = vmatprep.subr.bf16.mxu0 0
        %852 = vmatpush2.bf16.msra.mxu0 0
        %853 = vmatprep.subr.bf16.mxu0 0
        %854 = vmatpush2.bf16.msra.mxu0 0
        %855 = vmatprep.mubr.bf16.mxu0 0
        %856 = vmatmul.mubr.bf16.gmra.mxu0 %v608
        %v857 = vpop.f32.mrf.mxu0
        %v858 = vadd.f32 0.0, %v857
        %v859 = vpop.f32.mrf.mxu0
        %v860 = vpop.f32.mrf.mxu0
        %v861 = vadd.f32 0.0, %v860
        %v862 = vpop.f32.mrf.mxu0
        %863 = vmatprep.mubr.bf16.mxu0 0
        %864 = vmatmul.mubr.bf16.gmra.mxu0 %v609
        %v865 = vpop.f32.mrf.mxu0
        %v866 = vadd.f32 0.0, %v865
        %v867 = vpop.f32.mrf.mxu0
        %v868 = vpop.f32.mrf.mxu0
        %v869 = vadd.f32 0.0, %v868
        %v870 = vpop.f32.mrf.mxu0
        %871 = vdwg.mxu0
        %v872 = vpack.c.bf16 %v809, %v805
        %v873 = vpack.c.bf16 %v819, %v815
        %v874 = vpack.c.bf16 %v811, %v807
        %v875 = vpack.c.bf16 %v821, %v817
        %v876 = vpack.c.bf16 %v861, %v858
        %v877 = vpack.c.bf16 %v869, %v866
        %vm878 = vcmask 261120
        %v880 = vsel %vm878, %v872, 0
        %v883 = vsel %vm878, %v874, 0
        %885 = vmatprep.subr.bf16.mxu0 0
        %886 = vmatpush1.bf16.xpose.msra.mxu0 0
        %887 = vmatprep.subr.bf16.mxu0 0
        %888 = vmatpush1.bf16.xpose.msra.mxu0 0
        %889 = vmatprep.subr.bf16.mxu0 0
        %890 = vmatpush1.bf16.xpose.msra.mxu0 0
        %891 = vmatprep.subr.bf16.mxu0 0
        %892 = vmatpush1.bf16.xpose.msra.mxu0 0
        %893 = vmatprep.subr.bf16.mxu0 0
        %894 = vmatpush1.bf16.xpose.msra.mxu0 0
        %895 = vmatprep.subr.bf16.mxu0 0
        %896 = vmatpush1.bf16.xpose.msra.mxu0 0
        %897 = vmatprep.subr.bf16.mxu0 0
        %898 = vmatpush1.bf16.xpose.msra.mxu0 0
        %899 = vmatprep.subr.bf16.mxu0 0
        %900 = vmatpush1.bf16.xpose.msra.mxu0 %v883
        %901 = vmatprep.subr.bf16.mxu0 0
        %902 = vmatpush2.bf16.xpose.msra.mxu0 0
        %903 = vmatprep.subr.bf16.mxu0 0
        %904 = vmatpush2.bf16.xpose.msra.mxu0 0
        %905 = vmatprep.subr.bf16.mxu0 0
        %906 = vmatpush2.bf16.xpose.msra.mxu0 0
        %907 = vmatprep.subr.bf16.mxu0 0
        %908 = vmatpush2.bf16.xpose.msra.mxu0 0
        %909 = vmatprep.subr.bf16.mxu0 0
        %910 = vmatpush2.bf16.xpose.msra.mxu0 0
        %911 = vmatprep.subr.bf16.mxu0 0
        %912 = vmatpush2.bf16.xpose.msra.mxu0 0
        %913 = vmatprep.subr.bf16.mxu0 0
        %914 = vmatpush2.bf16.xpose.msra.mxu0 0
        %915 = vmatprep.subr.bf16.mxu0 0
        %916 = vmatpush2.bf16.xpose.msra.mxu0 0
        %917 = vmatprep.mubr.bf16.mxu0 0
        %918 = vmatmul.mubr.bf16.gmra.mxu0 %v880
        %v919 = vpop.f32.mrf.mxu0
        %v920 = vadd.f32 %v539, %v919
        %v921 = vpop.f32.mrf.mxu0
        %v922 = vpop.f32.mrf.mxu0
        %v923 = vadd.f32 %v540, %v922
        %v924 = vpop.f32.mrf.mxu0
        %925 = vdwg.mxu0
        %v927 = vsel %vm878, %v873, 0
        %v930 = vsel %vm878, %v875, 0
        %932 = vmatprep.subr.bf16.mxu0 0
        %933 = vmatpush1.bf16.xpose.msra.mxu0 0
        %934 = vmatprep.subr.bf16.mxu0 0
        %935 = vmatpush1.bf16.xpose.msra.mxu0 0
        %936 = vmatprep.subr.bf16.mxu0 0
        %937 = vmatpush1.bf16.xpose.msra.mxu0 0
        %938 = vmatprep.subr.bf16.mxu0 0
        %939 = vmatpush1.bf16.xpose.msra.mxu0 0
        %940 = vmatprep.subr.bf16.mxu0 0
        %941 = vmatpush1.bf16.xpose.msra.mxu0 0
        %942 = vmatprep.subr.bf16.mxu0 0
        %943 = vmatpush1.bf16.xpose.msra.mxu0 0
        %944 = vmatprep.subr.bf16.mxu0 0
        %945 = vmatpush1.bf16.xpose.msra.mxu0 0
        %946 = vmatprep.subr.bf16.mxu0 0
        %947 = vmatpush1.bf16.xpose.msra.mxu0 %v930
        %948 = vmatprep.subr.bf16.mxu0 0
        %949 = vmatpush2.bf16.xpose.msra.mxu0 0
        %950 = vmatprep.subr.bf16.mxu0 0
        %951 = vmatpush2.bf16.xpose.msra.mxu0 0
        %952 = vmatprep.subr.bf16.mxu0 0
        %953 = vmatpush2.bf16.xpose.msra.mxu0 0
        %954 = vmatprep.subr.bf16.mxu0 0
        %955 = vmatpush2.bf16.xpose.msra.mxu0 0
        %956 = vmatprep.subr.bf16.mxu0 0
        %957 = vmatpush2.bf16.xpose.msra.mxu0 0
        %958 = vmatprep.subr.bf16.mxu0 0
        %959 = vmatpush2.bf16.xpose.msra.mxu0 0
        %960 = vmatprep.subr.bf16.mxu0 0
        %961 = vmatpush2.bf16.xpose.msra.mxu0 0
        %962 = vmatprep.subr.bf16.mxu0 0
        %963 = vmatpush2.bf16.xpose.msra.mxu0 0
        %964 = vmatprep.mubr.bf16.mxu0 0
        %965 = vmatmul.mubr.bf16.gmra.mxu0 %v927
        %v966 = vpop.f32.mrf.mxu0
        %v967 = vadd.f32 %v539, %v966
        %v968 = vpop.f32.mrf.mxu0
        %v969 = vpop.f32.mrf.mxu0
        %v970 = vadd.f32 %v540, %v969
        %v971 = vpop.f32.mrf.mxu0
        %972 = vdwg.mxu0
        %vm973 = vcmask 130048
        %v974 = vsel %vm973, %v920, -inf
        %975 = vmax.xlane.f32.xlu0 %v974
        %v976 = vpop.xlane.xlu0 %975
        %v977 = vsel %vm973, %v923, -inf
        %978 = vmax.xlane.f32.xlu0 %v977
        %v979 = vpop.xlane.xlu0 %978
        %v980 = vsel %vm973, %v967, -inf
        %981 = vmax.xlane.f32.xlu0 %v980
        %v982 = vpop.xlane.xlu0 %981
        %v983 = vsel %vm973, %v970, -inf
        %984 = vmax.xlane.f32.xlu0 %v983
        %v985 = vpop.xlane.xlu0 %984
        %v986 = vsub.f32 %v920, %v976
        %v987 = vsub.f32 %v923, %v979
        %v988 = vsub.f32 %v967, %v982
        %v989 = vsub.f32 %v970, %v985
        %v990 = vmul.f32 %v986, 1.442695
        %v991 = vpow.pop %v990
        %v992 = vmul.f32 %v987, 1.442695
        %v993 = vpow.pop %v992
        %v994 = vmul.f32 %v988, 1.442695
        %v995 = vpow.pop %v994
        %v996 = vmul.f32 %v989, 1.442695
        %v997 = vpow.pop %v996
        %v998 = vsel %vm973, %v991, 0.0
        %999 = vadd.xlane.f32.xlu0 %v998
        %v1000 = vpop.xlane.xlu0 %999
        %v1001 = vsel %vm973, %v993, 0.0
        %1002 = vadd.xlane.f32.xlu0 %v1001
        %v1003 = vpop.xlane.xlu0 %1002
        %v1004 = vsel %vm973, %v995, 0.0
        %1005 = vadd.xlane.f32.xlu0 %v1004
        %v1006 = vpop.xlane.xlu0 %1005
        %v1007 = vsel %vm973, %v997, 0.0
        %1008 = vadd.xlane.f32.xlu0 %v1007
        %v1009 = vpop.xlane.xlu0 %1008
        %v1010 = vpack.c.bf16 %v993, %v991
        %v1011 = vpack.c.bf16 %v997, %v995
        %v1013 = vsel %vm973, %v1010, 0
        %1015 = vmatprep.subr.bf16.mxu0 0
        %1016 = vmatpush1.bf16.msra.mxu0 0
        %1017 = vmatprep.subr.bf16.mxu0 0
        %1018 = vmatpush1.bf16.msra.mxu0 0
        %1019 = vmatprep.subr.bf16.mxu0 0
        %1020 = vmatpush1.bf16.msra.mxu0 0
        %1021 = vmatprep.subr.bf16.mxu0 0
        %1022 = vmatpush1.bf16.msra.mxu0 0
        %1023 = vmatprep.subr.bf16.mxu0 0
        %1024 = vmatpush1.bf16.msra.mxu0 0
        %1025 = vmatprep.subr.bf16.mxu0 0
        %1026 = vmatpush1.bf16.msra.mxu0 0
        %1027 = vmatprep.subr.bf16.mxu0 0
        %1028 = vmatpush1.bf16.msra.mxu0 0
        %1029 = vmatprep.subr.bf16.mxu0 0
        %1030 = vmatpush1.bf16.msra.mxu0 %v876
        %1031 = vmatprep.subr.bf16.mxu0 0
        %1032 = vmatpush2.bf16.msra.mxu0 0
        %1033 = vmatprep.subr.bf16.mxu0 0
        %1034 = vmatpush2.bf16.msra.mxu0 0
        %1035 = vmatprep.subr.bf16.mxu0 0
        %1036 = vmatpush2.bf16.msra.mxu0 0
        %1037 = vmatprep.subr.bf16.mxu0 0
        %1038 = vmatpush2.bf16.msra.mxu0 0
        %1039 = vmatprep.subr.bf16.mxu0 0
        %1040 = vmatpush2.bf16.msra.mxu0 0
        %1041 = vmatprep.subr.bf16.mxu0 0
        %1042 = vmatpush2.bf16.msra.mxu0 0
        %1043 = vmatprep.subr.bf16.mxu0 0
        %1044 = vmatpush2.bf16.msra.mxu0 0
        %1045 = vmatprep.subr.bf16.mxu0 0
        %1046 = vmatpush2.bf16.msra.mxu0 0
        %1047 = vmatprep.mubr.bf16.mxu0 0
        %1048 = vmatmul.mubr.bf16.gmra.mxu0 %v1013
        %v1049 = vpop.f32.mrf.mxu0
        %v1050 = vadd.f32 0.0, %v1049
        %v1051 = vpop.f32.mrf.mxu0
        %v1052 = vpop.f32.mrf.mxu0
        %v1053 = vadd.f32 0.0, %v1052
        %v1054 = vpop.f32.mrf.mxu0
        %1055 = vdwg.mxu0
        %v1057 = vsel %vm973, %v1011, 0
        %1059 = vmatprep.subr.bf16.mxu0 0
        %1060 = vmatpush1.bf16.msra.mxu0 0
        %1061 = vmatprep.subr.bf16.mxu0 0
        %1062 = vmatpush1.bf16.msra.mxu0 0
        %1063 = vmatprep.subr.bf16.mxu0 0
        %1064 = vmatpush1.bf16.msra.mxu0 0
        %1065 = vmatprep.subr.bf16.mxu0 0
        %1066 = vmatpush1.bf16.msra.mxu0 0
        %1067 = vmatprep.subr.bf16.mxu0 0
        %1068 = vmatpush1.bf16.msra.mxu0 0
        %1069 = vmatprep.subr.bf16.mxu0 0
        %1070 = vmatpush1.bf16.msra.mxu0 0
        %1071 = vmatprep.subr.bf16.mxu0 0
        %1072 = vmatpush1.bf16.msra.mxu0 0
        %1073 = vmatprep.subr.bf16.mxu0 0
        %1074 = vmatpush1.bf16.msra.mxu0 %v877
        %1075 = vmatprep.subr.bf16.mxu0 0
        %1076 = vmatpush2.bf16.msra.mxu0 0
        %1077 = vmatprep.subr.bf16.mxu0 0
        %1078 = vmatpush2.bf16.msra.mxu0 0
        %1079 = vmatprep.subr.bf16.mxu0 0
        %1080 = vmatpush2.bf16.msra.mxu0 0
        %1081 = vmatprep.subr.bf16.mxu0 0
        %1082 = vmatpush2.bf16.msra.mxu0 0
        %1083 = vmatprep.subr.bf16.mxu0 0
        %1084 = vmatpush2.bf16.msra.mxu0 0
        %1085 = vmatprep.subr.bf16.mxu0 0
        %1086 = vmatpush2.bf16.msra.mxu0 0
        %1087 = vmatprep.subr.bf16.mxu0 0
        %1088 = vmatpush2.bf16.msra.mxu0 0
        %1089 = vmatprep.subr.bf16.mxu0 0
        %1090 = vmatpush2.bf16.msra.mxu0 0
        %1091 = vmatprep.mubr.bf16.mxu0 0
        %1092 = vmatmul.mubr.bf16.gmra.mxu0 %v1057
        %v1093 = vpop.f32.mrf.mxu0
        %v1094 = vadd.f32 0.0, %v1093
        %v1095 = vpop.f32.mrf.mxu0
        %v1096 = vpop.f32.mrf.mxu0
        %v1097 = vadd.f32 0.0, %v1096
        %v1098 = vpop.f32.mrf.mxu0
        %1099 = vdwg.mxu0
        %v1100 = vrcp.pop %v1000
        %v1101 = vrcp.pop %v1003
        %v1102 = vrcp.pop %v1006
        %v1103 = vrcp.pop %v1009
        %v1104 = vmul.f32 %v1050, %v1100
        %v1105 = vmul.f32 %v1053, %v1101
        %v1106 = vmul.f32 %v1094, %v1102
        %v1107 = vmul.f32 %v1097, %v1103
        %v1108 = vpack.c.bf16 %v1105, %v1104
        %v1109 = vpack.c.bf16 %v1107, %v1106
        %1111 = vrot.lane.b32.xlu0 %v872, 96
        %v1112 = vpop.permute.xlu0 %1111
        %1114 = vrot.lane.b32.xlu0 %v874, 96
        %v1115 = vpop.permute.xlu0 %1114
        %v1117 = vsel %vm878, %v1112, 0
        %v1120 = vsel %vm878, %v1115, 0
        %1122 = vmatprep.subr.bf16.mxu0 0
        %1123 = vmatpush1.bf16.xpose.msra.mxu0 0
        %1124 = vmatprep.subr.bf16.mxu0 0
        %1125 = vmatpush1.bf16.xpose.msra.mxu0 0
        %1126 = vmatprep.subr.bf16.mxu0 0
        %1127 = vmatpush1.bf16.xpose.msra.mxu0 0
        %1128 = vmatprep.subr.bf16.mxu0 0
        %1129 = vmatpush1.bf16.xpose.msra.mxu0 0
        %1130 = vmatprep.subr.bf16.mxu0 0
        %1131 = vmatpush1.bf16.xpose.msra.mxu0 0
        %1132 = vmatprep.subr.bf16.mxu0 0
        %1133 = vmatpush1.bf16.xpose.msra.mxu0 0
        %1134 = vmatprep.subr.bf16.mxu0 0
        %1135 = vmatpush1.bf16.xpose.msra.mxu0 0
        %1136 = vmatprep.subr.bf16.mxu0 0
        %1137 = vmatpush1.bf16.xpose.msra.mxu0 %v1120
        %1138 = vmatprep.subr.bf16.mxu0 0
        %1139 = vmatpush2.bf16.xpose.msra.mxu0 0
        %1140 = vmatprep.subr.bf16.mxu0 0
        %1141 = vmatpush2.bf16.xpose.msra.mxu0 0
        %1142 = vmatprep.subr.bf16.mxu0 0
        %1143 = vmatpush2.bf16.xpose.msra.mxu0 0
        %1144 = vmatprep.subr.bf16.mxu0 0
        %1145 = vmatpush2.bf16.xpose.msra.mxu0 0
        %1146 = vmatprep.subr.bf16.mxu0 0
        %1147 = vmatpush2.bf16.xpose.msra.mxu0 0
        %1148 = vmatprep.subr.bf16.mxu0 0
        %1149 = vmatpush2.bf16.xpose.msra.mxu0 0
        %1150 = vmatprep.subr.bf16.mxu0 0
        %1151 = vmatpush2.bf16.xpose.msra.mxu0 0
        %1152 = vmatprep.subr.bf16.mxu0 0
        %1153 = vmatpush2.bf16.xpose.msra.mxu0 0
        %1154 = vmatprep.mubr.bf16.mxu0 0
        %1155 = vmatmul.mubr.bf16.gmra.mxu0 %v1117
        %v1156 = vpop.f32.mrf.mxu0
        %v1157 = vadd.f32 %v539, %v1156
        %v1158 = vpop.f32.mrf.mxu0
        %v1159 = vpop.f32.mrf.mxu0
        %v1160 = vadd.f32 %v540, %v1159
        %v1161 = vpop.f32.mrf.mxu0
        %1162 = vdwg.mxu0
        %1164 = vrot.lane.b32.xlu0 %v873, 96
        %v1165 = vpop.permute.xlu0 %1164
        %1167 = vrot.lane.b32.xlu0 %v875, 96
        %v1168 = vpop.permute.xlu0 %1167
        %v1170 = vsel %vm878, %v1165, 0
        %v1173 = vsel %vm878, %v1168, 0
        %1175 = vmatprep.subr.bf16.mxu0 0
        %1176 = vmatpush1.bf16.xpose.msra.mxu0 0
        %1177 = vmatprep.subr.bf16.mxu0 0
        %1178 = vmatpush1.bf16.xpose.msra.mxu0 0
        %1179 = vmatprep.subr.bf16.mxu0 0
        %1180 = vmatpush1.bf16.xpose.msra.mxu0 0
        %1181 = vmatprep.subr.bf16.mxu0 0
        %1182 = vmatpush1.bf16.xpose.msra.mxu0 0
        %1183 = vmatprep.subr.bf16.mxu0 0
        %1184 = vmatpush1.bf16.xpose.msra.mxu0 0
        %1185 = vmatprep.subr.bf16.mxu0 0
        %1186 = vmatpush1.bf16.xpose.msra.mxu0 0
        %1187 = vmatprep.subr.bf16.mxu0 0
        %1188 = vmatpush1.bf16.xpose.msra.mxu0 0
        %1189 = vmatprep.subr.bf16.mxu0 0
        %1190 = vmatpush1.bf16.xpose.msra.mxu0 %v1173
        %1191 = vmatprep.subr.bf16.mxu0 0
        %1192 = vmatpush2.bf16.xpose.msra.mxu0 0
        %1193 = vmatprep.subr.bf16.mxu0 0
        %1194 = vmatpush2.bf16.xpose.msra.mxu0 0
        %1195 = vmatprep.subr.bf16.mxu0 0
        %1196 = vmatpush2.bf16.xpose.msra.mxu0 0
        %1197 = vmatprep.subr.bf16.mxu0 0
        %1198 = vmatpush2.bf16.xpose.msra.mxu0 0
        %1199 = vmatprep.subr.bf16.mxu0 0
        %1200 = vmatpush2.bf16.xpose.msra.mxu0 0
        %1201 = vmatprep.subr.bf16.mxu0 0
        %1202 = vmatpush2.bf16.xpose.msra.mxu0 0
        %1203 = vmatprep.subr.bf16.mxu0 0
        %1204 = vmatpush2.bf16.xpose.msra.mxu0 0
        %1205 = vmatprep.subr.bf16.mxu0 0
        %1206 = vmatpush2.bf16.xpose.msra.mxu0 0
        %1207 = vmatprep.mubr.bf16.mxu0 0
        %1208 = vmatmul.mubr.bf16.gmra.mxu0 %v1170
        %v1209 = vpop.f32.mrf.mxu0
        %v1210 = vadd.f32 %v539, %v1209
        %v1211 = vpop.f32.mrf.mxu0
        %v1212 = vpop.f32.mrf.mxu0
        %v1213 = vadd.f32 %v540, %v1212
        %v1214 = vpop.f32.mrf.mxu0
        %1215 = vdwg.mxu0
        %v1216 = vsel %vm973, %v1157, -inf
        %1217 = vmax.xlane.f32.xlu0 %v1216
        %v1218 = vpop.xlane.xlu0 %1217
        %v1219 = vsel %vm973, %v1160, -inf
        %1220 = vmax.xlane.f32.xlu0 %v1219
        %v1221 = vpop.xlane.xlu0 %1220
        %v1222 = vsel %vm973, %v1210, -inf
        %1223 = vmax.xlane.f32.xlu0 %v1222
        %v1224 = vpop.xlane.xlu0 %1223
        %v1225 = vsel %vm973, %v1213, -inf
        %1226 = vmax.xlane.f32.xlu0 %v1225
        %v1227 = vpop.xlane.xlu0 %1226
        %v1228 = vsub.f32 %v1157, %v1218
        %v1229 = vsub.f32 %v1160, %v1221
        %v1230 = vsub.f32 %v1210, %v1224
        %v1231 = vsub.f32 %v1213, %v1227
        %v1232 = vmul.f32 %v1228, 1.442695
        %v1233 = vpow.pop %v1232
        %v1234 = vmul.f32 %v1229, 1.442695
        %v1235 = vpow.pop %v1234
        %v1236 = vmul.f32 %v1230, 1.442695
        %v1237 = vpow.pop %v1236
        %v1238 = vmul.f32 %v1231, 1.442695
        %v1239 = vpow.pop %v1238
        %v1240 = vsel %vm973, %v1233, 0.0
        %1241 = vadd.xlane.f32.xlu0 %v1240
        %v1242 = vpop.xlane.xlu0 %1241
        %v1243 = vsel %vm973, %v1235, 0.0
        %1244 = vadd.xlane.f32.xlu0 %v1243
        %v1245 = vpop.xlane.xlu0 %1244
        %v1246 = vsel %vm973, %v1237, 0.0
        %1247 = vadd.xlane.f32.xlu0 %v1246
        %v1248 = vpop.xlane.xlu0 %1247
        %v1249 = vsel %vm973, %v1239, 0.0
        %1250 = vadd.xlane.f32.xlu0 %v1249
        %v1251 = vpop.xlane.xlu0 %1250
        %v1252 = vpack.c.bf16 %v1235, %v1233
        %v1253 = vpack.c.bf16 %v1239, %v1237
        %1255 = vrot.lane.b32.xlu0 %v876, 96
        %v1256 = vpop.permute.xlu0 %1255
        %v1259 = vsel %vm973, %v1252, 0
        %1261 = vmatprep.subr.bf16.mxu0 0
        %1262 = vmatpush1.bf16.msra.mxu0 0
        %1263 = vmatprep.subr.bf16.mxu0 0
        %1264 = vmatpush1.bf16.msra.mxu0 0
        %1265 = vmatprep.subr.bf16.mxu0 0
        %1266 = vmatpush1.bf16.msra.mxu0 0
        %1267 = vmatprep.subr.bf16.mxu0 0
        %1268 = vmatpush1.bf16.msra.mxu0 0
        %1269 = vmatprep.subr.bf16.mxu0 0
        %1270 = vmatpush1.bf16.msra.mxu0 0
        %1271 = vmatprep.subr.bf16.mxu0 0
        %1272 = vmatpush1.bf16.msra.mxu0 0
        %1273 = vmatprep.subr.bf16.mxu0 0
        %1274 = vmatpush1.bf16.msra.mxu0 0
        %1275 = vmatprep.subr.bf16.mxu0 0
        %1276 = vmatpush1.bf16.msra.mxu0 %v1256
        %1277 = vmatprep.subr.bf16.mxu0 0
        %1278 = vmatpush2.bf16.msra.mxu0 0
        %1279 = vmatprep.subr.bf16.mxu0 0
        %1280 = vmatpush2.bf16.msra.mxu0 0
        %1281 = vmatprep.subr.bf16.mxu0 0
        %1282 = vmatpush2.bf16.msra.mxu0 0
        %1283 = vmatprep.subr.bf16.mxu0 0
        %1284 = vmatpush2.bf16.msra.mxu0 0
        %1285 = vmatprep.subr.bf16.mxu0 0
        %1286 = vmatpush2.bf16.msra.mxu0 0
        %1287 = vmatprep.subr.bf16.mxu0 0
        %1288 = vmatpush2.bf16.msra.mxu0 0
        %1289 = vmatprep.subr.bf16.mxu0 0
        %1290 = vmatpush2.bf16.msra.mxu0 0
        %1291 = vmatprep.subr.bf16.mxu0 0
        %1292 = vmatpush2.bf16.msra.mxu0 0
        %1293 = vmatprep.mubr.bf16.mxu0 0
        %1294 = vmatmul.mubr.bf16.gmra.mxu0 %v1259
        %v1295 = vpop.f32.mrf.mxu0
        %v1296 = vadd.f32 0.0, %v1295
        %v1297 = vpop.f32.mrf.mxu0
        %v1298 = vpop.f32.mrf.mxu0
        %v1299 = vadd.f32 0.0, %v1298
        %v1300 = vpop.f32.mrf.mxu0
        %1301 = vdwg.mxu0
        %1303 = vrot.lane.b32.xlu0 %v877, 96
        %v1304 = vpop.permute.xlu0 %1303
        %v1307 = vsel %vm973, %v1253, 0
        %1309 = vmatprep.subr.bf16.mxu0 0
        %1310 = vmatpush1.bf16.msra.mxu0 0
        %1311 = vmatprep.subr.bf16.mxu0 0
        %1312 = vmatpush1.bf16.msra.mxu0 0
        %1313 = vmatprep.subr.bf16.mxu0 0
        %1314 = vmatpush1.bf16.msra.mxu0 0
        %1315 = vmatprep.subr.bf16.mxu0 0
        %1316 = vmatpush1.bf16.msra.mxu0 0
        %1317 = vmatprep.subr.bf16.mxu0 0
        %1318 = vmatpush1.bf16.msra.mxu0 0
        %1319 = vmatprep.subr.bf16.mxu0 0
        %1320 = vmatpush1.bf16.msra.mxu0 0
        %1321 = vmatprep.subr.bf16.mxu0 0
        %1322 = vmatpush1.bf16.msra.mxu0 0
        %1323 = vmatprep.subr.bf16.mxu0 0
        %1324 = vmatpush1.bf16.msra.mxu0 %v1304
        %1325 = vmatprep.subr.bf16.mxu0 0
        %1326 = vmatpush2.bf16.msra.mxu0 0
        %1327 = vmatprep.subr.bf16.mxu0 0
        %1328 = vmatpush2.bf16.msra.mxu0 0
        %1329 = vmatprep.subr.bf16.mxu0 0
        %1330 = vmatpush2.bf16.msra.mxu0 0
        %1331 = vmatprep.subr.bf16.mxu0 0
        %1332 = vmatpush2.bf16.msra.mxu0 0
        %1333 = vmatprep.subr.bf16.mxu0 0
        %1334 = vmatpush2.bf16.msra.mxu0 0
        %1335 = vmatprep.subr.bf16.mxu0 0
        %1336 = vmatpush2.bf16.msra.mxu0 0
        %1337 = vmatprep.subr.bf16.mxu0 0
        %1338 = vmatpush2.bf16.msra.mxu0 0
        %1339 = vmatprep.subr.bf16.mxu0 0
        %1340 = vmatpush2.bf16.msra.mxu0 0
        %1341 = vmatprep.mubr.bf16.mxu0 0
        %1342 = vmatmul.mubr.bf16.gmra.mxu0 %v1307
        %v1343 = vpop.f32.mrf.mxu0
        %v1344 = vadd.f32 0.0, %v1343
        %v1345 = vpop.f32.mrf.mxu0
        %v1346 = vpop.f32.mrf.mxu0
        %v1347 = vadd.f32 0.0, %v1346
        %v1348 = vpop.f32.mrf.mxu0
        %1349 = vdwg.mxu0
        %v1350 = vrcp.pop %v1242
        %v1351 = vrcp.pop %v1245
        %v1352 = vrcp.pop %v1248
        %v1353 = vrcp.pop %v1251
        %v1354 = vmul.f32 %v1296, %v1350
        %v1355 = vmul.f32 %v1299, %v1351
        %v1356 = vmul.f32 %v1344, %v1352
        %v1357 = vmul.f32 %v1347, %v1353
        %v1358 = vpack.c.bf16 %v1355, %v1354
        %v1359 = vpack.c.bf16 %v1357, %v1356
        %1360 = vrot.lane.b32.xlu0 %v872, 64
        %v1361 = vpop.permute.xlu0 %1360
        %1362 = vrot.lane.b32.xlu0 %v874, 64
        %v1363 = vpop.permute.xlu0 %1362
        %v1365 = vsel %vm878, %v1361, 0
        %v1368 = vsel %vm878, %v1363, 0
        %1370 = vmatprep.subr.bf16.mxu0 0
        %1371 = vmatpush1.bf16.xpose.msra.mxu0 0
        %1372 = vmatprep.subr.bf16.mxu0 0
        %1373 = vmatpush1.bf16.xpose.msra.mxu0 0
        %1374 = vmatprep.subr.bf16.mxu0 0
        %1375 = vmatpush1.bf16.xpose.msra.mxu0 0
        %1376 = vmatprep.subr.bf16.mxu0 0
        %1377 = vmatpush1.bf16.xpose.msra.mxu0 0
        %1378 = vmatprep.subr.bf16.mxu0 0
        %1379 = vmatpush1.bf16.xpose.msra.mxu0 0
        %1380 = vmatprep.subr.bf16.mxu0 0
        %1381 = vmatpush1.bf16.xpose.msra.mxu0 0
        %1382 = vmatprep.subr.bf16.mxu0 0
        %1383 = vmatpush1.bf16.xpose.msra.mxu0 0
        %1384 = vmatprep.subr.bf16.mxu0 0
        %1385 = vmatpush1.bf16.xpose.msra.mxu0 %v1368
        %1386 = vmatprep.subr.bf16.mxu0 0
        %1387 = vmatpush2.bf16.xpose.msra.mxu0 0
        %1388 = vmatprep.subr.bf16.mxu0 0
        %1389 = vmatpush2.bf16.xpose.msra.mxu0 0
        %1390 = vmatprep.subr.bf16.mxu0 0
        %1391 = vmatpush2.bf16.xpose.msra.mxu0 0
        %1392 = vmatprep.subr.bf16.mxu0 0
        %1393 = vmatpush2.bf16.xpose.msra.mxu0 0
        %1394 = vmatprep.subr.bf16.mxu0 0
        %1395 = vmatpush2.bf16.xpose.msra.mxu0 0
        %1396 = vmatprep.subr.bf16.mxu0 0
        %1397 = vmatpush2.bf16.xpose.msra.mxu0 0
        %1398 = vmatprep.subr.bf16.mxu0 0
        %1399 = vmatpush2.bf16.xpose.msra.mxu0 0
        %1400 = vmatprep.subr.bf16.mxu0 0
        %1401 = vmatpush2.bf16.xpose.msra.mxu0 0
        %1402 = vmatprep.mubr.bf16.mxu0 0
        %1403 = vmatmul.mubr.bf16.gmra.mxu0 %v1365
        %v1404 = vpop.f32.mrf.mxu0
        %v1405 = vadd.f32 %v539, %v1404
        %v1406 = vpop.f32.mrf.mxu0
        %v1407 = vpop.f32.mrf.mxu0
        %v1408 = vadd.f32 %v540, %v1407
        %v1409 = vpop.f32.mrf.mxu0
        %1410 = vdwg.mxu0
        %1411 = vrot.lane.b32.xlu0 %v873, 64
        %v1412 = vpop.permute.xlu0 %1411
        %1413 = vrot.lane.b32.xlu0 %v875, 64
        %v1414 = vpop.permute.xlu0 %1413
        %v1416 = vsel %vm878, %v1412, 0
        %v1419 = vsel %vm878, %v1414, 0
        %1421 = vmatprep.subr.bf16.mxu0 0
        %1422 = vmatpush1.bf16.xpose.msra.mxu0 0
        %1423 = vmatprep.subr.bf16.mxu0 0
        %1424 = vmatpush1.bf16.xpose.msra.mxu0 0
        %1425 = vmatprep.subr.bf16.mxu0 0
        %1426 = vmatpush1.bf16.xpose.msra.mxu0 0
        %1427 = vmatprep.subr.bf16.mxu0 0
        %1428 = vmatpush1.bf16.xpose.msra.mxu0 0
        %1429 = vmatprep.subr.bf16.mxu0 0
        %1430 = vmatpush1.bf16.xpose.msra.mxu0 0
        %1431 = vmatprep.subr.bf16.mxu0 0
        %1432 = vmatpush1.bf16.xpose.msra.mxu0 0
        %1433 = vmatprep.subr.bf16.mxu0 0
        %1434 = vmatpush1.bf16.xpose.msra.mxu0 0
        %1435 = vmatprep.subr.bf16.mxu0 0
        %1436 = vmatpush1.bf16.xpose.msra.mxu0 %v1419
        %1437 = vmatprep.subr.bf16.mxu0 0
        %1438 = vmatpush2.bf16.xpose.msra.mxu0 0
        %1439 = vmatprep.subr.bf16.mxu0 0
        %1440 = vmatpush2.bf16.xpose.msra.mxu0 0
        %1441 = vmatprep.subr.bf16.mxu0 0
        %1442 = vmatpush2.bf16.xpose.msra.mxu0 0
        %1443 = vmatprep.subr.bf16.mxu0 0
        %1444 = vmatpush2.bf16.xpose.msra.mxu0 0
        %1445 = vmatprep.subr.bf16.mxu0 0
        %1446 = vmatpush2.bf16.xpose.msra.mxu0 0
        %1447 = vmatprep.subr.bf16.mxu0 0
        %1448 = vmatpush2.bf16.xpose.msra.mxu0 0
        %1449 = vmatprep.subr.bf16.mxu0 0
        %1450 = vmatpush2.bf16.xpose.msra.mxu0 0
        %1451 = vmatprep.subr.bf16.mxu0 0
        %1452 = vmatpush2.bf16.xpose.msra.mxu0 0
        %1453 = vmatprep.mubr.bf16.mxu0 0
        %1454 = vmatmul.mubr.bf16.gmra.mxu0 %v1416
        %v1455 = vpop.f32.mrf.mxu0
        %v1456 = vadd.f32 %v539, %v1455
        %v1457 = vpop.f32.mrf.mxu0
        %v1458 = vpop.f32.mrf.mxu0
        %v1459 = vadd.f32 %v540, %v1458
        %v1460 = vpop.f32.mrf.mxu0
        %1461 = vdwg.mxu0
        %v1462 = vsel %vm973, %v1405, -inf
        %1463 = vmax.xlane.f32.xlu0 %v1462
        %v1464 = vpop.xlane.xlu0 %1463
        %v1465 = vsel %vm973, %v1408, -inf
        %1466 = vmax.xlane.f32.xlu0 %v1465
        %v1467 = vpop.xlane.xlu0 %1466
        %v1468 = vsel %vm973, %v1456, -inf
        %1469 = vmax.xlane.f32.xlu0 %v1468
        %v1470 = vpop.xlane.xlu0 %1469
        %v1471 = vsel %vm973, %v1459, -inf
        %1472 = vmax.xlane.f32.xlu0 %v1471
        %v1473 = vpop.xlane.xlu0 %1472
        %v1474 = vsub.f32 %v1405, %v1464
        %v1475 = vsub.f32 %v1408, %v1467
        %v1476 = vsub.f32 %v1456, %v1470
        %v1477 = vsub.f32 %v1459, %v1473
        %v1478 = vmul.f32 %v1474, 1.442695
        %v1479 = vpow.pop %v1478
        %v1480 = vmul.f32 %v1475, 1.442695
        %v1481 = vpow.pop %v1480
        %v1482 = vmul.f32 %v1476, 1.442695
        %v1483 = vpow.pop %v1482
        %v1484 = vmul.f32 %v1477, 1.442695
        %v1485 = vpow.pop %v1484
        %v1486 = vsel %vm973, %v1479, 0.0
        %1487 = vadd.xlane.f32.xlu0 %v1486
        %v1488 = vpop.xlane.xlu0 %1487
        %v1489 = vsel %vm973, %v1481, 0.0
        %1490 = vadd.xlane.f32.xlu0 %v1489
        %v1491 = vpop.xlane.xlu0 %1490
        %v1492 = vsel %vm973, %v1483, 0.0
        %1493 = vadd.xlane.f32.xlu0 %v1492
        %v1494 = vpop.xlane.xlu0 %1493
        %v1495 = vsel %vm973, %v1485, 0.0
        %1496 = vadd.xlane.f32.xlu0 %v1495
        %v1497 = vpop.xlane.xlu0 %1496
        %v1498 = vpack.c.bf16 %v1481, %v1479
        %v1499 = vpack.c.bf16 %v1485, %v1483
        %1500 = vrot.lane.b32.xlu0 %v876, 64
        %v1501 = vpop.permute.xlu0 %1500
        %v1504 = vsel %vm973, %v1498, 0
        %1506 = vmatprep.subr.bf16.mxu0 0
        %1507 = vmatpush1.bf16.msra.mxu0 0
        %1508 = vmatprep.subr.bf16.mxu0 0
        %1509 = vmatpush1.bf16.msra.mxu0 0
        %1510 = vmatprep.subr.bf16.mxu0 0
        %1511 = vmatpush1.bf16.msra.mxu0 0
        %1512 = vmatprep.subr.bf16.mxu0 0
        %1513 = vmatpush1.bf16.msra.mxu0 0
        %1514 = vmatprep.subr.bf16.mxu0 0
        %1515 = vmatpush1.bf16.msra.mxu0 0
        %1516 = vmatprep.subr.bf16.mxu0 0
        %1517 = vmatpush1.bf16.msra.mxu0 0
        %1518 = vmatprep.subr.bf16.mxu0 0
        %1519 = vmatpush1.bf16.msra.mxu0 0
        %1520 = vmatprep.subr.bf16.mxu0 0
        %1521 = vmatpush1.bf16.msra.mxu0 %v1501
        %1522 = vmatprep.subr.bf16.mxu0 0
        %1523 = vmatpush2.bf16.msra.mxu0 0
        %1524 = vmatprep.subr.bf16.mxu0 0
        %1525 = vmatpush2.bf16.msra.mxu0 0
        %1526 = vmatprep.subr.bf16.mxu0 0
        %1527 = vmatpush2.bf16.msra.mxu0 0
        %1528 = vmatprep.subr.bf16.mxu0 0
        %1529 = vmatpush2.bf16.msra.mxu0 0
        %1530 = vmatprep.subr.bf16.mxu0 0
        %1531 = vmatpush2.bf16.msra.mxu0 0
        %1532 = vmatprep.subr.bf16.mxu0 0
        %1533 = vmatpush2.bf16.msra.mxu0 0
        %1534 = vmatprep.subr.bf16.mxu0 0
        %1535 = vmatpush2.bf16.msra.mxu0 0
        %1536 = vmatprep.subr.bf16.mxu0 0
        %1537 = vmatpush2.bf16.msra.mxu0 0
        %1538 = vmatprep.mubr.bf16.mxu0 0
        %1539 = vmatmul.mubr.bf16.gmra.mxu0 %v1504
        %v1540 = vpop.f32.mrf.mxu0
        %v1541 = vadd.f32 0.0, %v1540
        %v1542 = vpop.f32.mrf.mxu0
        %v1543 = vpop.f32.mrf.mxu0
        %v1544 = vadd.f32 0.0, %v1543
        %v1545 = vpop.f32.mrf.mxu0
        %1546 = vdwg.mxu0
        %1547 = vrot.lane.b32.xlu0 %v877, 64
        %v1548 = vpop.permute.xlu0 %1547
        %v1551 = vsel %vm973, %v1499, 0
        %1553 = vmatprep.subr.bf16.mxu0 0
        %1554 = vmatpush1.bf16.msra.mxu0 0
        %1555 = vmatprep.subr.bf16.mxu0 0
        %1556 = vmatpush1.bf16.msra.mxu0 0
        %1557 = vmatprep.subr.bf16.mxu0 0
        %1558 = vmatpush1.bf16.msra.mxu0 0
        %1559 = vmatprep.subr.bf16.mxu0 0
        %1560 = vmatpush1.bf16.msra.mxu0 0
        %1561 = vmatprep.subr.bf16.mxu0 0
        %1562 = vmatpush1.bf16.msra.mxu0 0
        %1563 = vmatprep.subr.bf16.mxu0 0
        %1564 = vmatpush1.bf16.msra.mxu0 0
        %1565 = vmatprep.subr.bf16.mxu0 0
        %1566 = vmatpush1.bf16.msra.mxu0 0
        %1567 = vmatprep.subr.bf16.mxu0 0
        %1568 = vmatpush1.bf16.msra.mxu0 %v1548
        %1569 = vmatprep.subr.bf16.mxu0 0
        %1570 = vmatpush2.bf16.msra.mxu0 0
        %1571 = vmatprep.subr.bf16.mxu0 0
        %1572 = vmatpush2.bf16.msra.mxu0 0
        %1573 = vmatprep.subr.bf16.mxu0 0
        %1574 = vmatpush2.bf16.msra.mxu0 0
        %1575 = vmatprep.subr.bf16.mxu0 0
        %1576 = vmatpush2.bf16.msra.mxu0 0
        %1577 = vmatprep.subr.bf16.mxu0 0
        %1578 = vmatpush2.bf16.msra.mxu0 0
        %1579 = vmatprep.subr.bf16.mxu0 0
        %1580 = vmatpush2.bf16.msra.mxu0 0
        %1581 = vmatprep.subr.bf16.mxu0 0
        %1582 = vmatpush2.bf16.msra.mxu0 0
        %1583 = vmatprep.subr.bf16.mxu0 0
        %1584 = vmatpush2.bf16.msra.mxu0 0
        %1585 = vmatprep.mubr.bf16.mxu0 0
        %1586 = vmatmul.mubr.bf16.gmra.mxu0 %v1551
        %v1587 = vpop.f32.mrf.mxu0
        %v1588 = vadd.f32 0.0, %v1587
        %v1589 = vpop.f32.mrf.mxu0
        %v1590 = vpop.f32.mrf.mxu0
        %v1591 = vadd.f32 0.0, %v1590
        %v1592 = vpop.f32.mrf.mxu0
        %1593 = vdwg.mxu0
        %v1594 = vrcp.pop %v1488
        %v1595 = vrcp.pop %v1491
        %v1596 = vrcp.pop %v1494
        %v1597 = vrcp.pop %v1497
        %v1598 = vmul.f32 %v1541, %v1594
        %v1599 = vmul.f32 %v1544, %v1595
        %v1600 = vmul.f32 %v1588, %v1596
        %v1601 = vmul.f32 %v1591, %v1597
        %v1602 = vpack.c.bf16 %v1599, %v1598
        %v1603 = vpack.c.bf16 %v1601, %v1600
        %1604 = vrot.lane.b32.xlu0 %v872, 32
        %v1605 = vpop.permute.xlu0 %1604
        %1606 = vrot.lane.b32.xlu0 %v874, 32
        %v1607 = vpop.permute.xlu0 %1606
        %v1609 = vsel %vm878, %v1605, 0
        %v1612 = vsel %vm878, %v1607, 0
        %1614 = vmatprep.subr.bf16.mxu0 0
        %1615 = vmatpush1.bf16.xpose.msra.mxu0 0
        %1616 = vmatprep.subr.bf16.mxu0 0
        %1617 = vmatpush1.bf16.xpose.msra.mxu0 0
        %1618 = vmatprep.subr.bf16.mxu0 0
        %1619 = vmatpush1.bf16.xpose.msra.mxu0 0
        %1620 = vmatprep.subr.bf16.mxu0 0
        %1621 = vmatpush1.bf16.xpose.msra.mxu0 0
        %1622 = vmatprep.subr.bf16.mxu0 0
        %1623 = vmatpush1.bf16.xpose.msra.mxu0 0
        %1624 = vmatprep.subr.bf16.mxu0 0
        %1625 = vmatpush1.bf16.xpose.msra.mxu0 0
        %1626 = vmatprep.subr.bf16.mxu0 0
        %1627 = vmatpush1.bf16.xpose.msra.mxu0 0
        %1628 = vmatprep.subr.bf16.mxu0 0
        %1629 = vmatpush1.bf16.xpose.msra.mxu0 %v1612
        %1630 = vmatprep.subr.bf16.mxu0 0
        %1631 = vmatpush2.bf16.xpose.msra.mxu0 0
        %1632 = vmatprep.subr.bf16.mxu0 0
        %1633 = vmatpush2.bf16.xpose.msra.mxu0 0
        %1634 = vmatprep.subr.bf16.mxu0 0
        %1635 = vmatpush2.bf16.xpose.msra.mxu0 0
        %1636 = vmatprep.subr.bf16.mxu0 0
        %1637 = vmatpush2.bf16.xpose.msra.mxu0 0
        %1638 = vmatprep.subr.bf16.mxu0 0
        %1639 = vmatpush2.bf16.xpose.msra.mxu0 0
        %1640 = vmatprep.subr.bf16.mxu0 0
        %1641 = vmatpush2.bf16.xpose.msra.mxu0 0
        %1642 = vmatprep.subr.bf16.mxu0 0
        %1643 = vmatpush2.bf16.xpose.msra.mxu0 0
        %1644 = vmatprep.subr.bf16.mxu0 0
        %1645 = vmatpush2.bf16.xpose.msra.mxu0 0
        %1646 = vmatprep.mubr.bf16.mxu0 0
        %1647 = vmatmul.mubr.bf16.gmra.mxu0 %v1609
        %v1648 = vpop.f32.mrf.mxu0
        %v1649 = vadd.f32 %v539, %v1648
        %v1650 = vpop.f32.mrf.mxu0
        %v1651 = vpop.f32.mrf.mxu0
        %v1652 = vadd.f32 %v540, %v1651
        %v1653 = vpop.f32.mrf.mxu0
        %1654 = vdwg.mxu0
        %1655 = vrot.lane.b32.xlu0 %v873, 32
        %v1656 = vpop.permute.xlu0 %1655
        %1657 = vrot.lane.b32.xlu0 %v875, 32
        %v1658 = vpop.permute.xlu0 %1657
        %v1660 = vsel %vm878, %v1656, 0
        %v1663 = vsel %vm878, %v1658, 0
        %1665 = vmatprep.subr.bf16.mxu0 0
        %1666 = vmatpush1.bf16.xpose.msra.mxu0 0
        %1667 = vmatprep.subr.bf16.mxu0 0
        %1668 = vmatpush1.bf16.xpose.msra.mxu0 0
        %1669 = vmatprep.subr.bf16.mxu0 0
        %1670 = vmatpush1.bf16.xpose.msra.mxu0 0
        %1671 = vmatprep.subr.bf16.mxu0 0
        %1672 = vmatpush1.bf16.xpose.msra.mxu0 0
        %1673 = vmatprep.subr.bf16.mxu0 0
        %1674 = vmatpush1.bf16.xpose.msra.mxu0 0
        %1675 = vmatprep.subr.bf16.mxu0 0
        %1676 = vmatpush1.bf16.xpose.msra.mxu0 0
        %1677 = vmatprep.subr.bf16.mxu0 0
        %1678 = vmatpush1.bf16.xpose.msra.mxu0 0
        %1679 = vmatprep.subr.bf16.mxu0 0
        %1680 = vmatpush1.bf16.xpose.msra.mxu0 %v1663
        %1681 = vmatprep.subr.bf16.mxu0 0
        %1682 = vmatpush2.bf16.xpose.msra.mxu0 0
        %1683 = vmatprep.subr.bf16.mxu0 0
        %1684 = vmatpush2.bf16.xpose.msra.mxu0 0
        %1685 = vmatprep.subr.bf16.mxu0 0
        %1686 = vmatpush2.bf16.xpose.msra.mxu0 0
        %1687 = vmatprep.subr.bf16.mxu0 0
        %1688 = vmatpush2.bf16.xpose.msra.mxu0 0
        %1689 = vmatprep.subr.bf16.mxu0 0
        %1690 = vmatpush2.bf16.xpose.msra.mxu0 0
        %1691 = vmatprep.subr.bf16.mxu0 0
        %1692 = vmatpush2.bf16.xpose.msra.mxu0 0
        %1693 = vmatprep.subr.bf16.mxu0 0
        %1694 = vmatpush2.bf16.xpose.msra.mxu0 0
        %1695 = vmatprep.subr.bf16.mxu0 0
        %1696 = vmatpush2.bf16.xpose.msra.mxu0 0
        %1697 = vmatprep.mubr.bf16.mxu0 0
        %1698 = vmatmul.mubr.bf16.gmra.mxu0 %v1660
        %v1699 = vpop.f32.mrf.mxu0
        %v1700 = vadd.f32 %v539, %v1699
        %v1701 = vpop.f32.mrf.mxu0
        %v1702 = vpop.f32.mrf.mxu0
        %v1703 = vadd.f32 %v540, %v1702
        %v1704 = vpop.f32.mrf.mxu0
        %1705 = vdwg.mxu0
        %v1706 = vsel %vm973, %v1649, -inf
        %1707 = vmax.xlane.f32.xlu0 %v1706
        %v1708 = vpop.xlane.xlu0 %1707
        %v1709 = vsel %vm973, %v1652, -inf
        %1710 = vmax.xlane.f32.xlu0 %v1709
        %v1711 = vpop.xlane.xlu0 %1710
        %v1712 = vsel %vm973, %v1700, -inf
        %1713 = vmax.xlane.f32.xlu0 %v1712
        %v1714 = vpop.xlane.xlu0 %1713
        %v1715 = vsel %vm973, %v1703, -inf
        %1716 = vmax.xlane.f32.xlu0 %v1715
        %v1717 = vpop.xlane.xlu0 %1716
        %v1718 = vsub.f32 %v1649, %v1708
        %v1719 = vsub.f32 %v1652, %v1711
        %v1720 = vsub.f32 %v1700, %v1714
        %v1721 = vsub.f32 %v1703, %v1717
        %v1722 = vmul.f32 %v1718, 1.442695
        %v1723 = vpow.pop %v1722
        %v1724 = vmul.f32 %v1719, 1.442695
        %v1725 = vpow.pop %v1724
        %v1726 = vmul.f32 %v1720, 1.442695
        %v1727 = vpow.pop %v1726
        %v1728 = vmul.f32 %v1721, 1.442695
        %v1729 = vpow.pop %v1728
        %v1730 = vsel %vm973, %v1723, 0.0
        %1731 = vadd.xlane.f32.xlu0 %v1730
        %v1732 = vpop.xlane.xlu0 %1731
        %v1733 = vsel %vm973, %v1725, 0.0
        %1734 = vadd.xlane.f32.xlu0 %v1733
        %v1735 = vpop.xlane.xlu0 %1734
        %v1736 = vsel %vm973, %v1727, 0.0
        %1737 = vadd.xlane.f32.xlu0 %v1736
        %v1738 = vpop.xlane.xlu0 %1737
        %v1739 = vsel %vm973, %v1729, 0.0
        %1740 = vadd.xlane.f32.xlu0 %v1739
        %v1741 = vpop.xlane.xlu0 %1740
        %v1742 = vpack.c.bf16 %v1725, %v1723
        %v1743 = vpack.c.bf16 %v1729, %v1727
        %1744 = vrot.lane.b32.xlu0 %v876, 32
        %v1745 = vpop.permute.xlu0 %1744
        %v1748 = vsel %vm973, %v1742, 0
        %1750 = vmatprep.subr.bf16.mxu0 0
        %1751 = vmatpush1.bf16.msra.mxu0 0
        %1752 = vmatprep.subr.bf16.mxu0 0
        %1753 = vmatpush1.bf16.msra.mxu0 0
        %1754 = vmatprep.subr.bf16.mxu0 0
        %1755 = vmatpush1.bf16.msra.mxu0 0
        %1756 = vmatprep.subr.bf16.mxu0 0
        %1757 = vmatpush1.bf16.msra.mxu0 0
        %1758 = vmatprep.subr.bf16.mxu0 0
        %1759 = vmatpush1.bf16.msra.mxu0 0
        %1760 = vmatprep.subr.bf16.mxu0 0
        %1761 = vmatpush1.bf16.msra.mxu0 0
        %1762 = vmatprep.subr.bf16.mxu0 0
        %1763 = vmatpush1.bf16.msra.mxu0 0
        %1764 = vmatprep.subr.bf16.mxu0 0
        %1765 = vmatpush1.bf16.msra.mxu0 %v1745
        %1766 = vmatprep.subr.bf16.mxu0 0
        %1767 = vmatpush2.bf16.msra.mxu0 0
        %1768 = vmatprep.subr.bf16.mxu0 0
        %1769 = vmatpush2.bf16.msra.mxu0 0
        %1770 = vmatprep.subr.bf16.mxu0 0
        %1771 = vmatpush2.bf16.msra.mxu0 0
        %1772 = vmatprep.subr.bf16.mxu0 0
        %1773 = vmatpush2.bf16.msra.mxu0 0
        %1774 = vmatprep.subr.bf16.mxu0 0
        %1775 = vmatpush2.bf16.msra.mxu0 0
        %1776 = vmatprep.subr.bf16.mxu0 0
        %1777 = vmatpush2.bf16.msra.mxu0 0
        %1778 = vmatprep.subr.bf16.mxu0 0
        %1779 = vmatpush2.bf16.msra.mxu0 0
        %1780 = vmatprep.subr.bf16.mxu0 0
        %1781 = vmatpush2.bf16.msra.mxu0 0
        %1782 = vmatprep.mubr.bf16.mxu0 0
        %1783 = vmatmul.mubr.bf16.gmra.mxu0 %v1748
        %v1784 = vpop.f32.mrf.mxu0
        %v1785 = vadd.f32 0.0, %v1784
        %v1786 = vpop.f32.mrf.mxu0
        %v1787 = vpop.f32.mrf.mxu0
        %v1788 = vadd.f32 0.0, %v1787
        %v1789 = vpop.f32.mrf.mxu0
        %1790 = vdwg.mxu0
        %1791 = vrot.lane.b32.xlu0 %v877, 32
        %v1792 = vpop.permute.xlu0 %1791
        %v1795 = vsel %vm973, %v1743, 0
        %1797 = vmatprep.subr.bf16.mxu0 0
        %1798 = vmatpush1.bf16.msra.mxu0 0
        %1799 = vmatprep.subr.bf16.mxu0 0
        %1800 = vmatpush1.bf16.msra.mxu0 0
        %1801 = vmatprep.subr.bf16.mxu0 0
        %1802 = vmatpush1.bf16.msra.mxu0 0
        %1803 = vmatprep.subr.bf16.mxu0 0
        %1804 = vmatpush1.bf16.msra.mxu0 0
        %1805 = vmatprep.subr.bf16.mxu0 0
        %1806 = vmatpush1.bf16.msra.mxu0 0
        %1807 = vmatprep.subr.bf16.mxu0 0
        %1808 = vmatpush1.bf16.msra.mxu0 0
        %1809 = vmatprep.subr.bf16.mxu0 0
        %1810 = vmatpush1.bf16.msra.mxu0 0
        %1811 = vmatprep.subr.bf16.mxu0 0
        %1812 = vmatpush1.bf16.msra.mxu0 %v1792
        %1813 = vmatprep.subr.bf16.mxu0 0
        %1814 = vmatpush2.bf16.msra.mxu0 0
        %1815 = vmatprep.subr.bf16.mxu0 0
        %1816 = vmatpush2.bf16.msra.mxu0 0
        %1817 = vmatprep.subr.bf16.mxu0 0
        %1818 = vmatpush2.bf16.msra.mxu0 0
        %1819 = vmatprep.subr.bf16.mxu0 0
        %1820 = vmatpush2.bf16.msra.mxu0 0
        %1821 = vmatprep.subr.bf16.mxu0 0
        %1822 = vmatpush2.bf16.msra.mxu0 0
        %1823 = vmatprep.subr.bf16.mxu0 0
        %1824 = vmatpush2.bf16.msra.mxu0 0
        %1825 = vmatprep.subr.bf16.mxu0 0
        %1826 = vmatpush2.bf16.msra.mxu0 0
        %1827 = vmatprep.subr.bf16.mxu0 0
        %1828 = vmatpush2.bf16.msra.mxu0 0
        %1829 = vmatprep.mubr.bf16.mxu0 0
        %1830 = vmatmul.mubr.bf16.gmra.mxu0 %v1795
        %v1831 = vpop.f32.mrf.mxu0
        %v1832 = vadd.f32 0.0, %v1831
        %v1833 = vpop.f32.mrf.mxu0
        %v1834 = vpop.f32.mrf.mxu0
        %v1835 = vadd.f32 0.0, %v1834
        %v1836 = vpop.f32.mrf.mxu0
        %1837 = vdwg.mxu0
        %v1838 = vrcp.pop %v1732
        %v1839 = vrcp.pop %v1735
        %v1840 = vrcp.pop %v1738
        %v1841 = vrcp.pop %v1741
        %v1842 = vmul.f32 %v1785, %v1838
        %v1843 = vmul.f32 %v1788, %v1839
        %v1844 = vmul.f32 %v1832, %v1840
        %v1845 = vmul.f32 %v1835, %v1841
        %v1846 = vpack.c.bf16 %v1843, %v1842
        %v1847 = vpack.c.bf16 %v1845, %v1844
        %1850 = vrot.lane.b32.xlu0 %v1358, 32
        %v1851 = vpop.permute.xlu0 %1850
        %1852 = vrot.lane.b32.xlu0 %v1359, 32
        %v1853 = vpop.permute.xlu0 %1852
        %1856 = vrot.lane.b32.xlu0 %v1602, 64
        %v1857 = vpop.permute.xlu0 %1856
        %1858 = vrot.lane.b32.xlu0 %v1603, 64
        %v1859 = vpop.permute.xlu0 %1858
        %1862 = vrot.lane.b32.xlu0 %v1846, 96
        %v1863 = vpop.permute.xlu0 %1862
        %1864 = vrot.lane.b32.xlu0 %v1847, 96
        %v1865 = vpop.permute.xlu0 %1864
        %v1868 = vsel %vm878, %v1108, %v1851
        %v1871 = vsel %vm878, %v1109, %v1853
        %vm1872 = vcmask 523264
        %v1874 = vsel %vm1872, %v1868, %v1857
        %v1876 = vsel %vm1872, %v1871, %v1859
        %vm1877 = vcmask 785408
        %v1879 = vsel %vm1877, %v1874, %v1863
        %v1882 = vsel %vm1877, %v1876, %v1865
        %v1884 = vld [vmem:[#allocation8] sm:$0xf]
        %v1885 = vld [vmem:[#allocation8 + $0x4] sm:$0xf]
        %v1886 = vld [vmem:[#allocation8 + $0x8] sm:$0xf]
        %v1887 = vld [vmem:[#allocation8 + $0xc] sm:$0xf]
        %v1888 = vld [vmem:[#allocation8 + $0x10] sm:$0xf]
        %v1889 = vld [vmem:[#allocation8 + $0x14] sm:$0xf]
        %v1890 = vld [vmem:[#allocation8 + $0x18] sm:$0xf]
        %v1891 = vld [vmem:[#allocation8 + $0x1c] sm:$0xf]
        %v1892 = vld [vmem:[#allocation8 + $0x20] sm:$0xf]
        %v1893 = vld [vmem:[#allocation8 + $0x24] sm:$0xf]
        %v1894 = vld [vmem:[#allocation8 + $0x28] sm:$0xf]
        %v1895 = vld [vmem:[#allocation8 + $0x2c] sm:$0xf]
        %v1896 = vld [vmem:[#allocation8 + $0x30] sm:$0xf]
        %v1897 = vld [vmem:[#allocation8 + $0x34] sm:$0xf]
        %v1898 = vld [vmem:[#allocation8 + $0x38] sm:$0xf]
        %v1899 = vld [vmem:[#allocation8 + $0x3c] sm:$0xf]
        %v1916 = vunpack.c.l.b16 %v1884
        %v1917 = vunpack.c.l.b16 %v1885
        %v1918 = vunpack.c.l.b16 %v1886
        %v1919 = vunpack.c.l.b16 %v1887
        %v1920 = vunpack.c.l.b16 %v1888
        %v1921 = vunpack.c.l.b16 %v1889
        %v1922 = vunpack.c.l.b16 %v1890
        %v1923 = vunpack.c.l.b16 %v1891
        %v1924 = vunpack.c.l.b16 %v1892
        %v1925 = vunpack.c.l.b16 %v1893
        %v1926 = vunpack.c.l.b16 %v1894
        %v1927 = vunpack.c.l.b16 %v1895
        %v1928 = vunpack.c.l.b16 %v1896
        %v1929 = vunpack.c.l.b16 %v1897
        %v1930 = vunpack.c.l.b16 %v1898
        %v1931 = vunpack.c.l.b16 %v1899
        %v1932 = vpack.c.b16 %v1917, %v1916
        %v1933 = vpack.c.b16 %v1919, %v1918
        %v1934 = vpack.c.b16 %v1921, %v1920
        %v1935 = vpack.c.b16 %v1923, %v1922
        %v1936 = vpack.c.b16 %v1925, %v1924
        %v1937 = vpack.c.b16 %v1927, %v1926
        %v1938 = vpack.c.b16 %v1929, %v1928
        %v1939 = vpack.c.b16 %v1931, %v1930
        %1948 = vmatprep.subr.bf16.mxu0 0
        %1949 = vmatpush1.bf16.msra.mxu0 %v1939
        %1950 = vmatprep.subr.bf16.mxu0 0
        %1951 = vmatpush1.bf16.msra.mxu0 %v1938
        %1952 = vmatprep.subr.bf16.mxu0 0
        %1953 = vmatpush1.bf16.msra.mxu0 %v1937
        %1954 = vmatprep.subr.bf16.mxu0 0
        %1955 = vmatpush1.bf16.msra.mxu0 %v1936
        %1956 = vmatprep.subr.bf16.mxu0 0
        %1957 = vmatpush1.bf16.msra.mxu0 %v1935
        %1958 = vmatprep.subr.bf16.mxu0 0
        %1959 = vmatpush1.bf16.msra.mxu0 %v1934
        %1960 = vmatprep.subr.bf16.mxu0 0
        %1961 = vmatpush1.bf16.msra.mxu0 %v1933
        %1962 = vmatprep.subr.bf16.mxu0 0
        %1963 = vmatpush1.bf16.msra.mxu0 %v1932
        %1964 = vmatprep.subr.bf16.mxu0 0
        %1965 = vmatpush2.bf16.msra.mxu0 0
        %1966 = vmatprep.subr.bf16.mxu0 0
        %1967 = vmatpush2.bf16.msra.mxu0 0
        %1968 = vmatprep.subr.bf16.mxu0 0
        %1969 = vmatpush2.bf16.msra.mxu0 0
        %1970 = vmatprep.subr.bf16.mxu0 0
        %1971 = vmatpush2.bf16.msra.mxu0 0
        %1972 = vmatprep.subr.bf16.mxu0 0
        %1973 = vmatpush2.bf16.msra.mxu0 0
        %1974 = vmatprep.subr.bf16.mxu0 0
        %1975 = vmatpush2.bf16.msra.mxu0 0
        %1976 = vmatprep.subr.bf16.mxu0 0
        %1977 = vmatpush2.bf16.msra.mxu0 0
        %1978 = vmatprep.subr.bf16.mxu0 0
        %1979 = vmatpush2.bf16.msra.mxu0 0
        %1980 = vmatprep.mubr.bf16.mxu0 0
        %1981 = vmatmul.mubr.bf16.gmra.mxu0 %v1879
        %v1982 = vpop.f32.mrf.mxu0
        %v1983 = vadd.f32 0.0, %v1982
        %v1984 = vpop.f32.mrf.mxu0
        %v1985 = vpop.f32.mrf.mxu0
        %v1986 = vadd.f32 0.0, %v1985
        %v1987 = vpop.f32.mrf.mxu0
        %1988 = vmatprep.mubr.bf16.mxu0 0
        %1989 = vmatmul.mubr.bf16.gmra.mxu0 %v1882
        %v1990 = vpop.f32.mrf.mxu0
        %v1991 = vadd.f32 0.0, %v1990
        %v1992 = vpop.f32.mrf.mxu0
        %v1993 = vpop.f32.mrf.mxu0
        %v1994 = vadd.f32 0.0, %v1993
        %v1995 = vpop.f32.mrf.mxu0
        %1996 = vdwg.mxu0
        %v1997 = vadd.f32 %v535, %v1983
        %v1998 = vadd.f32 %v536, %v1986
        %v1999 = vadd.f32 %v537, %v1991
        %v2000 = vadd.f32 %v538, %v1994
        %v2001 = vld [vmem:[%s8] sm:$0x1]
        %v2003 = vlaneseq
        %v2004 = vshrl.u32 %v2003, 7
        %v2005 = vsub.s32 0, %v2004
        %v2006 = vrot.slane %v2001, %v2005
        %v2008 = vadd.f32 %v1997, %v2006
        %v2009 = vadd.f32 %v1998, %v2006
        %v2010 = vadd.f32 %v1999, %v2006
        %v2011 = vadd.f32 %v2000, %v2006
        %2012 = vadd.xlane.f32.xlu0 %v2008
        %v2013 = vpop.xlane.xlu0 %2012
        %2014 = vadd.xlane.f32.xlu0 %v2009
        %v2015 = vpop.xlane.xlu0 %2014
        %2016 = vadd.xlane.f32.xlu0 %v2010
        %v2017 = vpop.xlane.xlu0 %2016
        %2018 = vadd.xlane.f32.xlu0 %v2011
        %v2019 = vpop.xlane.xlu0 %2018
        %v2020 = vmul.f32 %v2013, %v549
        %v2021 = vmul.f32 %v2015, %v549
        %v2022 = vmul.f32 %v2017, %v549
        %v2023 = vmul.f32 %v2019, %v549
        %v2024 = vsub.f32 %v2008, %v2020
        %v2025 = vsub.f32 %v2009, %v2021
        %v2026 = vsub.f32 %v2010, %v2022
        %v2027 = vsub.f32 %v2011, %v2023
        %v2028 = vmul.f32 %v2024, %v2024
        %v2029 = vmul.f32 %v2025, %v2025
        %v2030 = vmul.f32 %v2026, %v2026
        %v2031 = vmul.f32 %v2027, %v2027
        %2032 = vadd.xlane.f32.xlu0 %v2028
        %v2033 = vpop.xlane.xlu0 %2032
        %2034 = vadd.xlane.f32.xlu0 %v2029
        %v2035 = vpop.xlane.xlu0 %2034
        %2036 = vadd.xlane.f32.xlu0 %v2030
        %v2037 = vpop.xlane.xlu0 %2036
        %2038 = vadd.xlane.f32.xlu0 %v2031
        %v2039 = vpop.xlane.xlu0 %2038
        %v2040 = vmul.f32 %v2033, %v549
        %v2041 = vmul.f32 %v2035, %v549
        %v2042 = vmul.f32 %v2037, %v549
        %v2043 = vmul.f32 %v2039, %v549
        %v2044 = vadd.f32 %v2040, 1e-05
        %v2045 = vadd.f32 %v2041, 1e-05
        %v2046 = vadd.f32 %v2042, 1e-05
        %v2047 = vadd.f32 %v2043, 1e-05
        %v2048 = vrsqrt.pop %v2044
        %v2049 = vrsqrt.pop %v2045
        %v2050 = vrsqrt.pop %v2046
        %v2051 = vrsqrt.pop %v2047
        %v2052 = vmul.f32 %v2024, %v2048
        %v2053 = vmul.f32 %v2025, %v2049
        %v2054 = vmul.f32 %v2026, %v2050
        %v2055 = vmul.f32 %v2027, %v2051
        %v2056 = vld [vmem:[%s4] sm:$0x1]
        %v2058 = vlaneseq
        %v2059 = vshrl.u32 %v2058, 7
        %v2060 = vsub.s32 0, %v2059
        %v2061 = vrot.slane %v2056, %v2060
        %v2063 = vmul.f32 %v2052, %v2061
        %v2064 = vmul.f32 %v2053, %v2061
        %v2065 = vmul.f32 %v2054, %v2061
        %v2066 = vmul.f32 %v2055, %v2061
        %v2067 = vld [vmem:[%s5] sm:$0x1]
        %v2069 = vlaneseq
        %v2070 = vshrl.u32 %v2069, 7
        %v2071 = vsub.s32 0, %v2070
        %v2072 = vrot.slane %v2067, %v2071
        %v2074 = vadd.f32 %v2063, %v2072
        %v2075 = vadd.f32 %v2064, %v2072
        %v2076 = vadd.f32 %v2065, %v2072
        %v2077 = vadd.f32 %v2066, %v2072
        %v2078 = vpack.c.bf16 %v2075, %v2074
        %v2079 = vpack.c.bf16 %v2077, %v2076
        %v2080 = vld [vmem:[#allocation10] sm:$0xff]
        %v2081 = vld [vmem:[#allocation10 + $0x8] sm:$0xff]
        %v2082 = vld [vmem:[#allocation10 + $0x10] sm:$0xff]
        %v2083 = vld [vmem:[#allocation10 + $0x18] sm:$0xff]
        %v2084 = vld [vmem:[#allocation10 + $0x20] sm:$0xff]
        %v2085 = vld [vmem:[#allocation10 + $0x28] sm:$0xff]
        %v2086 = vld [vmem:[#allocation10 + $0x30] sm:$0xff]
        %v2087 = vld [vmem:[#allocation10 + $0x38] sm:$0xff]
        %v2088 = vld [vmem:[#allocation10 + $0x40] sm:$0xff]
        %v2089 = vld [vmem:[#allocation10 + $0x48] sm:$0xff]
        %v2090 = vld [vmem:[#allocation10 + $0x50] sm:$0xff]
        %v2091 = vld [vmem:[#allocation10 + $0x58] sm:$0xff]
        %v2092 = vld [vmem:[#allocation10 + $0x60] sm:$0xff]
        %v2093 = vld [vmem:[#allocation10 + $0x68] sm:$0xff]
        %v2094 = vld [vmem:[#allocation10 + $0x70] sm:$0xff]
        %v2095 = vld [vmem:[#allocation10 + $0x78] sm:$0xff]
        %v2096 = vld [vmem:[#allocation10 + $0x80] sm:$0xff]
        %v2097 = vld [vmem:[#allocation10 + $0x88] sm:$0xff]
        %v2098 = vld [vmem:[#allocation10 + $0x90] sm:$0xff]
        %v2099 = vld [vmem:[#allocation10 + $0x98] sm:$0xff]
        %v2100 = vld [vmem:[#allocation10 + $0xa0] sm:$0xff]
        %v2101 = vld [vmem:[#allocation10 + $0xa8] sm:$0xff]
        %v2102 = vld [vmem:[#allocation10 + $0xb0] sm:$0xff]
        %v2103 = vld [vmem:[#allocation10 + $0xb8] sm:$0xff]
        %v2104 = vld [vmem:[#allocation10 + $0xc0] sm:$0xff]
        %v2105 = vld [vmem:[#allocation10 + $0xc8] sm:$0xff]
        %v2106 = vld [vmem:[#allocation10 + $0xd0] sm:$0xff]
        %v2107 = vld [vmem:[#allocation10 + $0xd8] sm:$0xff]
        %v2108 = vld [vmem:[#allocation10 + $0xe0] sm:$0xff]
        %v2109 = vld [vmem:[#allocation10 + $0xe8] sm:$0xff]
        %v2110 = vld [vmem:[#allocation10 + $0xf0] sm:$0xff]
        %v2111 = vld [vmem:[#allocation10 + $0xf8] sm:$0xff]
        %v2112 = vld [vmem:[%s10] sm:$0xf]
        %v2114 = vlaneseq
        %v2115 = vshrl.u32 %v2114, 7
        %v2116 = vsub.s32 0, %v2115
        %v2117 = vrot.slane %v2112, %v2116
        %v2118 = vlaneseq
        %v2119 = vshrl.u32 %v2118, 7
        %v2120 = vsub.s32 1, %v2119
        %v2121 = vrot.slane %v2112, %v2120
        %v2122 = vlaneseq
        %v2123 = vshrl.u32 %v2122, 7
        %v2124 = vsub.s32 2, %v2123
        %v2125 = vrot.slane %v2112, %v2124
        %v2126 = vlaneseq
        %v2127 = vshrl.u32 %v2126, 7
        %v2128 = vsub.s32 3, %v2127
        %v2129 = vrot.slane %v2112, %v2128
        %v2166 = vunpack.c.l.b16 %v2080
        %v2167 = vunpack.c.h.b16 %v2080
        %v2168 = vunpack.c.l.b16 %v2081
        %v2169 = vunpack.c.h.b16 %v2081
        %v2170 = vunpack.c.l.b16 %v2082
        %v2171 = vunpack.c.h.b16 %v2082
        %v2172 = vunpack.c.l.b16 %v2083
        %v2173 = vunpack.c.h.b16 %v2083
        %v2174 = vunpack.c.l.b16 %v2084
        %v2175 = vunpack.c.h.b16 %v2084
        %v2176 = vunpack.c.l.b16 %v2085
        %v2177 = vunpack.c.h.b16 %v2085
        %v2178 = vunpack.c.l.b16 %v2086
        %v2179 = vunpack.c.h.b16 %v2086
        %v2180 = vunpack.c.l.b16 %v2087
        %v2181 = vunpack.c.h.b16 %v2087
        %v2182 = vunpack.c.l.b16 %v2088
        %v2183 = vunpack.c.h.b16 %v2088
        %v2184 = vunpack.c.l.b16 %v2089
        %v2185 = vunpack.c.h.b16 %v2089
        %v2186 = vunpack.c.l.b16 %v2090
        %v2187 = vunpack.c.h.b16 %v2090
        %v2188 = vunpack.c.l.b16 %v2091
        %v2189 = vunpack.c.h.b16 %v2091
        %v2190 = vunpack.c.l.b16 %v2092
        %v2191 = vunpack.c.h.b16 %v2092
        %v2192 = vunpack.c.l.b16 %v2093
        %v2193 = vunpack.c.h.b16 %v2093
        %v2194 = vunpack.c.l.b16 %v2094
        %v2195 = vunpack.c.h.b16 %v2094
        %v2196 = vunpack.c.l.b16 %v2095
        %v2197 = vunpack.c.h.b16 %v2095
        %v2198 = vunpack.c.l.b16 %v2096
        %v2199 = vunpack.c.h.b16 %v2096
        %v2200 = vunpack.c.l.b16 %v2097
        %v2201 = vunpack.c.h.b16 %v2097
        %v2202 = vunpack.c.l.b16 %v2098
        %v2203 = vunpack.c.h.b16 %v2098
        %v2204 = vunpack.c.l.b16 %v2099
        %v2205 = vunpack.c.h.b16 %v2099
        %v2206 = vunpack.c.l.b16 %v2100
        %v2207 = vunpack.c.h.b16 %v2100
        %v2208 = vunpack.c.l.b16 %v2101
        %v2209 = vunpack.c.h.b16 %v2101
        %v2210 = vunpack.c.l.b16 %v2102
        %v2211 = vunpack.c.h.b16 %v2102
        %v2212 = vunpack.c.l.b16 %v2103
        %v2213 = vunpack.c.h.b16 %v2103
        %v2214 = vunpack.c.l.b16 %v2104
        %v2215 = vunpack.c.h.b16 %v2104
        %v2216 = vunpack.c.l.b16 %v2105
        %v2217 = vunpack.c.h.b16 %v2105
        %v2218 = vunpack.c.l.b16 %v2106
        %v2219 = vunpack.c.h.b16 %v2106
        %v2220 = vunpack.c.l.b16 %v2107
        %v2221 = vunpack.c.h.b16 %v2107
        %v2222 = vunpack.c.l.b16 %v2108
        %v2223 = vunpack.c.h.b16 %v2108
        %v2224 = vunpack.c.l.b16 %v2109
        %v2225 = vunpack.c.h.b16 %v2109
        %v2226 = vunpack.c.l.b16 %v2110
        %v2227 = vunpack.c.h.b16 %v2110
        %v2228 = vunpack.c.l.b16 %v2111
        %v2229 = vunpack.c.h.b16 %v2111
        %v2230 = vpack.c.b16 %v2170, %v2166
        %v2231 = vpack.c.b16 %v2171, %v2167
        %v2232 = vpack.c.b16 %v2172, %v2168
        %v2233 = vpack.c.b16 %v2173, %v2169
        %v2234 = vpack.c.b16 %v2178, %v2174
        %v2235 = vpack.c.b16 %v2179, %v2175
        %v2236 = vpack.c.b16 %v2180, %v2176
        %v2237 = vpack.c.b16 %v2181, %v2177
        %v2238 = vpack.c.b16 %v2186, %v2182
        %v2239 = vpack.c.b16 %v2187, %v2183
        %v2240 = vpack.c.b16 %v2188, %v2184
        %v2241 = vpack.c.b16 %v2189, %v2185
        %v2242 = vpack.c.b16 %v2194, %v2190
        %v2243 = vpack.c.b16 %v2195, %v2191
        %v2244 = vpack.c.b16 %v2196, %v2192
        %v2245 = vpack.c.b16 %v2197, %v2193
        %v2246 = vpack.c.b16 %v2202, %v2198
        %v2247 = vpack.c.b16 %v2203, %v2199
        %v2248 = vpack.c.b16 %v2204, %v2200
        %v2249 = vpack.c.b16 %v2205, %v2201
        %v2250 = vpack.c.b16 %v2210, %v2206
        %v2251 = vpack.c.b16 %v2211, %v2207
        %v2252 = vpack.c.b16 %v2212, %v2208
        %v2253 = vpack.c.b16 %v2213, %v2209
        %v2254 = vpack.c.b16 %v2218, %v2214
        %v2255 = vpack.c.b16 %v2219, %v2215
        %v2256 = vpack.c.b16 %v2220, %v2216
        %v2257 = vpack.c.b16 %v2221, %v2217
        %v2258 = vpack.c.b16 %v2226, %v2222
        %v2259 = vpack.c.b16 %v2227, %v2223
        %v2260 = vpack.c.b16 %v2228, %v2224
        %v2261 = vpack.c.b16 %v2229, %v2225
        %2294 = vmatprep.subr.bf16.mxu0 %v2259
        %2295 = vmatpush1.bf16.msra.mxu0 %v2258
        %2296 = vmatprep.subr.bf16.mxu0 %v2255
        %2297 = vmatpush1.bf16.msra.mxu0 %v2254
        %2298 = vmatprep.subr.bf16.mxu0 %v2251
        %2299 = vmatpush1.bf16.msra.mxu0 %v2250
        %2300 = vmatprep.subr.bf16.mxu0 %v2247
        %2301 = vmatpush1.bf16.msra.mxu0 %v2246
        %2302 = vmatprep.subr.bf16.mxu0 %v2243
        %2303 = vmatpush1.bf16.msra.mxu0 %v2242
        %2304 = vmatprep.subr.bf16.mxu0 %v2239
        %2305 = vmatpush1.bf16.msra.mxu0 %v2238
        %2306 = vmatprep.subr.bf16.mxu0 %v2235
        %2307 = vmatpush1.bf16.msra.mxu0 %v2234
        %2308 = vmatprep.subr.bf16.mxu0 %v2231
        %2309 = vmatpush1.bf16.msra.mxu0 %v2230
        %2310 = vmatprep.subr.bf16.mxu0 0
        %2311 = vmatpush2.bf16.msra.mxu0 0
        %2312 = vmatprep.subr.bf16.mxu0 0
        %2313 = vmatpush2.bf16.msra.mxu0 0
        %2314 = vmatprep.subr.bf16.mxu0 0
        %2315 = vmatpush2.bf16.msra.mxu0 0
        %2316 = vmatprep.subr.bf16.mxu0 0
        %2317 = vmatpush2.bf16.msra.mxu0 0
        %2318 = vmatprep.subr.bf16.mxu0 0
        %2319 = vmatpush2.bf16.msra.mxu0 0
        %2320 = vmatprep.subr.bf16.mxu0 0
        %2321 = vmatpush2.bf16.msra.mxu0 0
        %2322 = vmatprep.subr.bf16.mxu0 0
        %2323 = vmatpush2.bf16.msra.mxu0 0
        %2324 = vmatprep.subr.bf16.mxu0 0
        %2325 = vmatpush2.bf16.msra.mxu0 0
        %2326 = vmatprep.mubr.bf16.mxu0 0
        %2327 = vmatmul.mubr.bf16.gmra.mxu0 %v2078
        %v2328 = vpop.f32.mrf.mxu0
        %v2329 = vadd.f32 %v2117, %v2328
        %v2330 = vpop.f32.mrf.mxu0
        %v2331 = vadd.f32 %v2121, %v2330
        %v2332 = vpop.f32.mrf.mxu0
        %v2333 = vadd.f32 %v2117, %v2332
        %v2334 = vpop.f32.mrf.mxu0
        %v2335 = vadd.f32 %v2121, %v2334
        %2336 = vmatprep.mubr.bf16.mxu0 0
        %2337 = vmatmul.mubr.bf16.gmra.mxu0 %v2079
        %v2338 = vpop.f32.mrf.mxu0
        %v2339 = vadd.f32 %v2117, %v2338
        %v2340 = vpop.f32.mrf.mxu0
        %v2341 = vadd.f32 %v2121, %v2340
        %v2342 = vpop.f32.mrf.mxu0
        %v2343 = vadd.f32 %v2117, %v2342
        %v2344 = vpop.f32.mrf.mxu0
        %v2345 = vadd.f32 %v2121, %v2344
        %2346 = vdwg.mxu0
        %2347 = vmatprep.subr.bf16.mxu0 %v2261
        %2348 = vmatpush1.bf16.msra.mxu0 %v2260
        %2349 = vmatprep.subr.bf16.mxu0 %v2257
        %2350 = vmatpush1.bf16.msra.mxu0 %v2256
        %2351 = vmatprep.subr.bf16.mxu0 %v2253
        %2352 = vmatpush1.bf16.msra.mxu0 %v2252
        %2353 = vmatprep.subr.bf16.mxu0 %v2249
        %2354 = vmatpush1.bf16.msra.mxu0 %v2248
        %2355 = vmatprep.subr.bf16.mxu0 %v2245
        %2356 = vmatpush1.bf16.msra.mxu0 %v2244
        %2357 = vmatprep.subr.bf16.mxu0 %v2241
        %2358 = vmatpush1.bf16.msra.mxu0 %v2240
        %2359 = vmatprep.subr.bf16.mxu0 %v2237
        %2360 = vmatpush1.bf16.msra.mxu0 %v2236
        %2361 = vmatprep.subr.bf16.mxu0 %v2233
        %2362 = vmatpush1.bf16.msra.mxu0 %v2232
        %2363 = vmatprep.subr.bf16.mxu0 0
        %2364 = vmatpush2.bf16.msra.mxu0 0
        %2365 = vmatprep.subr.bf16.mxu0 0
        %2366 = vmatpush2.bf16.msra.mxu0 0
        %2367 = vmatprep.subr.bf16.mxu0 0
        %2368 = vmatpush2.bf16.msra.mxu0 0
        %2369 = vmatprep.subr.bf16.mxu0 0
        %2370 = vmatpush2.bf16.msra.mxu0 0
        %2371 = vmatprep.subr.bf16.mxu0 0
        %2372 = vmatpush2.bf16.msra.mxu0 0
        %2373 = vmatprep.subr.bf16.mxu0 0
        %2374 = vmatpush2.bf16.msra.mxu0 0
        %2375 = vmatprep.subr.bf16.mxu0 0
        %2376 = vmatpush2.bf16.msra.mxu0 0
        %2377 = vmatprep.subr.bf16.mxu0 0
        %2378 = vmatpush2.bf16.msra.mxu0 0
        %2379 = vmatprep.mubr.bf16.mxu0 0
        %2380 = vmatmul.mubr.bf16.gmra.mxu0 %v2078
        %v2381 = vpop.f32.mrf.mxu0
        %v2382 = vadd.f32 %v2125, %v2381
        %v2383 = vpop.f32.mrf.mxu0
        %v2384 = vadd.f32 %v2129, %v2383
        %v2385 = vpop.f32.mrf.mxu0
        %v2386 = vadd.f32 %v2125, %v2385
        %v2387 = vpop.f32.mrf.mxu0
        %v2388 = vadd.f32 %v2129, %v2387
        %2389 = vmatprep.mubr.bf16.mxu0 0
        %2390 = vmatmul.mubr.bf16.gmra.mxu0 %v2079
        %v2391 = vpop.f32.mrf.mxu0
        %v2392 = vadd.f32 %v2125, %v2391
        %v2393 = vpop.f32.mrf.mxu0
        %v2394 = vadd.f32 %v2129, %v2393
        %v2395 = vpop.f32.mrf.mxu0
        %v2396 = vadd.f32 %v2125, %v2395
        %v2397 = vpop.f32.mrf.mxu0
        %v2398 = vadd.f32 %v2129, %v2397
        %2399 = vdwg.mxu0
        %v2400 = vmax.f32 %v2329, 0.0
        %v2401 = vmax.f32 %v2331, 0.0
        %v2402 = vmax.f32 %v2382, 0.0
        %v2403 = vmax.f32 %v2384, 0.0
        %v2404 = vmax.f32 %v2333, 0.0
        %v2405 = vmax.f32 %v2335, 0.0
        %v2406 = vmax.f32 %v2386, 0.0
        %v2407 = vmax.f32 %v2388, 0.0
        %v2408 = vmax.f32 %v2339, 0.0
        %v2409 = vmax.f32 %v2341, 0.0
        %v2410 = vmax.f32 %v2392, 0.0
        %v2411 = vmax.f32 %v2394, 0.0
        %v2412 = vmax.f32 %v2343, 0.0
        %v2413 = vmax.f32 %v2345, 0.0
        %v2414 = vmax.f32 %v2396, 0.0
        %v2415 = vmax.f32 %v2398, 0.0
        %v2416 = vpack.c.bf16 %v2404, %v2400
        %v2417 = vpack.c.bf16 %v2405, %v2401
        %v2418 = vpack.c.bf16 %v2406, %v2402
        %v2419 = vpack.c.bf16 %v2407, %v2403
        %v2420 = vpack.c.bf16 %v2412, %v2408
        %v2421 = vpack.c.bf16 %v2413, %v2409
        %v2422 = vpack.c.bf16 %v2414, %v2410
        %v2423 = vpack.c.bf16 %v2415, %v2411
        %v2424 = vld [vmem:[#allocation11] sm:$0xf]
        %v2425 = vld [vmem:[#allocation11 + $0x4] sm:$0xf]
        %v2426 = vld [vmem:[#allocation11 + $0x8] sm:$0xf]
        %v2427 = vld [vmem:[#allocation11 + $0xc] sm:$0xf]
        %v2428 = vld [vmem:[#allocation11 + $0x10] sm:$0xf]
        %v2429 = vld [vmem:[#allocation11 + $0x14] sm:$0xf]
        %v2430 = vld [vmem:[#allocation11 + $0x18] sm:$0xf]
        %v2431 = vld [vmem:[#allocation11 + $0x1c] sm:$0xf]
        %v2432 = vld [vmem:[#allocation11 + $0x20] sm:$0xf]
        %v2433 = vld [vmem:[#allocation11 + $0x24] sm:$0xf]
        %v2434 = vld [vmem:[#allocation11 + $0x28] sm:$0xf]
        %v2435 = vld [vmem:[#allocation11 + $0x2c] sm:$0xf]
        %v2436 = vld [vmem:[#allocation11 + $0x30] sm:$0xf]
        %v2437 = vld [vmem:[#allocation11 + $0x34] sm:$0xf]
        %v2438 = vld [vmem:[#allocation11 + $0x38] sm:$0xf]
        %v2439 = vld [vmem:[#allocation11 + $0x3c] sm:$0xf]
        %v2440 = vld [vmem:[#allocation11 + $0x40] sm:$0xf]
        %v2441 = vld [vmem:[#allocation11 + $0x44] sm:$0xf]
        %v2442 = vld [vmem:[#allocation11 + $0x48] sm:$0xf]
        %v2443 = vld [vmem:[#allocation11 + $0x4c] sm:$0xf]
        %v2444 = vld [vmem:[#allocation11 + $0x50] sm:$0xf]
        %v2445 = vld [vmem:[#allocation11 + $0x54] sm:$0xf]
        %v2446 = vld [vmem:[#allocation11 + $0x58] sm:$0xf]
        %v2447 = vld [vmem:[#allocation11 + $0x5c] sm:$0xf]
        %v2448 = vld [vmem:[#allocation11 + $0x60] sm:$0xf]
        %v2449 = vld [vmem:[#allocation11 + $0x64] sm:$0xf]
        %v2450 = vld [vmem:[#allocation11 + $0x68] sm:$0xf]
        %v2451 = vld [vmem:[#allocation11 + $0x6c] sm:$0xf]
        %v2452 = vld [vmem:[#allocation11 + $0x70] sm:$0xf]
        %v2453 = vld [vmem:[#allocation11 + $0x74] sm:$0xf]
        %v2454 = vld [vmem:[#allocation11 + $0x78] sm:$0xf]
        %v2455 = vld [vmem:[#allocation11 + $0x7c] sm:$0xf]
        %v2456 = vld [vmem:[#allocation11 + $0x80] sm:$0xf]
        %v2457 = vld [vmem:[#allocation11 + $0x84] sm:$0xf]
        %v2458 = vld [vmem:[#allocation11 + $0x88] sm:$0xf]
        %v2459 = vld [vmem:[#allocation11 + $0x8c] sm:$0xf]
        %v2460 = vld [vmem:[#allocation11 + $0x90] sm:$0xf]
        %v2461 = vld [vmem:[#allocation11 + $0x94] sm:$0xf]
        %v2462 = vld [vmem:[#allocation11 + $0x98] sm:$0xf]
        %v2463 = vld [vmem:[#allocation11 + $0x9c] sm:$0xf]
        %v2464 = vld [vmem:[#allocation11 + $0xa0] sm:$0xf]
        %v2465 = vld [vmem:[#allocation11 + $0xa4] sm:$0xf]
        %v2466 = vld [vmem:[#allocation11 + $0xa8] sm:$0xf]
        %v2467 = vld [vmem:[#allocation11 + $0xac] sm:$0xf]
        %v2468 = vld [vmem:[#allocation11 + $0xb0] sm:$0xf]
        %v2469 = vld [vmem:[#allocation11 + $0xb4] sm:$0xf]
        %v2470 = vld [vmem:[#allocation11 + $0xb8] sm:$0xf]
        %v2471 = vld [vmem:[#allocation11 + $0xbc] sm:$0xf]
        %v2472 = vld [vmem:[#allocation11 + $0xc0] sm:$0xf]
        %v2473 = vld [vmem:[#allocation11 + $0xc4] sm:$0xf]
        %v2474 = vld [vmem:[#allocation11 + $0xc8] sm:$0xf]
        %v2475 = vld [vmem:[#allocation11 + $0xcc] sm:$0xf]
        %v2476 = vld [vmem:[#allocation11 + $0xd0] sm:$0xf]
        %v2477 = vld [vmem:[#allocation11 + $0xd4] sm:$0xf]
        %v2478 = vld [vmem:[#allocation11 + $0xd8] sm:$0xf]
        %v2479 = vld [vmem:[#allocation11 + $0xdc] sm:$0xf]
        %v2480 = vld [vmem:[#allocation11 + $0xe0] sm:$0xf]
        %v2481 = vld [vmem:[#allocation11 + $0xe4] sm:$0xf]
        %v2482 = vld [vmem:[#allocation11 + $0xe8] sm:$0xf]
        %v2483 = vld [vmem:[#allocation11 + $0xec] sm:$0xf]
        %v2484 = vld [vmem:[#allocation11 + $0xf0] sm:$0xf]
        %v2485 = vld [vmem:[#allocation11 + $0xf4] sm:$0xf]
        %v2486 = vld [vmem:[#allocation11 + $0xf8] sm:$0xf]
        %v2487 = vld [vmem:[#allocation11 + $0xfc] sm:$0xf]
        %v2552 = vunpack.c.l.b16 %v2424
        %v2553 = vunpack.c.l.b16 %v2425
        %v2554 = vunpack.c.l.b16 %v2426
        %v2555 = vunpack.c.l.b16 %v2427
        %v2556 = vunpack.c.l.b16 %v2428
        %v2557 = vunpack.c.l.b16 %v2429
        %v2558 = vunpack.c.l.b16 %v2430
        %v2559 = vunpack.c.l.b16 %v2431
        %v2560 = vunpack.c.l.b16 %v2432
        %v2561 = vunpack.c.l.b16 %v2433
        %v2562 = vunpack.c.l.b16 %v2434
        %v2563 = vunpack.c.l.b16 %v2435
        %v2564 = vunpack.c.l.b16 %v2436
        %v2565 = vunpack.c.l.b16 %v2437
        %v2566 = vunpack.c.l.b16 %v2438
        %v2567 = vunpack.c.l.b16 %v2439
        %v2568 = vunpack.c.l.b16 %v2440
        %v2569 = vunpack.c.l.b16 %v2441
        %v2570 = vunpack.c.l.b16 %v2442
        %v2571 = vunpack.c.l.b16 %v2443
        %v2572 = vunpack.c.l.b16 %v2444
        %v2573 = vunpack.c.l.b16 %v2445
        %v2574 = vunpack.c.l.b16 %v2446
        %v2575 = vunpack.c.l.b16 %v2447
        %v2576 = vunpack.c.l.b16 %v2448
        %v2577 = vunpack.c.l.b16 %v2449
        %v2578 = vunpack.c.l.b16 %v2450
        %v2579 = vunpack.c.l.b16 %v2451
        %v2580 = vunpack.c.l.b16 %v2452
        %v2581 = vunpack.c.l.b16 %v2453
        %v2582 = vunpack.c.l.b16 %v2454
        %v2583 = vunpack.c.l.b16 %v2455
        %v2584 = vunpack.c.l.b16 %v2456
        %v2585 = vunpack.c.l.b16 %v2457
        %v2586 = vunpack.c.l.b16 %v2458
        %v2587 = vunpack.c.l.b16 %v2459
        %v2588 = vunpack.c.l.b16 %v2460
        %v2589 = vunpack.c.l.b16 %v2461
        %v2590 = vunpack.c.l.b16 %v2462
        %v2591 = vunpack.c.l.b16 %v2463
        %v2592 = vunpack.c.l.b16 %v2464
        %v2593 = vunpack.c.l.b16 %v2465
        %v2594 = vunpack.c.l.b16 %v2466
        %v2595 = vunpack.c.l.b16 %v2467
        %v2596 = vunpack.c.l.b16 %v2468
        %v2597 = vunpack.c.l.b16 %v2469
        %v2598 = vunpack.c.l.b16 %v2470
        %v2599 = vunpack.c.l.b16 %v2471
        %v2600 = vunpack.c.l.b16 %v2472
        %v2601 = vunpack.c.l.b16 %v2473
        %v2602 = vunpack.c.l.b16 %v2474
        %v2603 = vunpack.c.l.b16 %v2475
        %v2604 = vunpack.c.l.b16 %v2476
        %v2605 = vunpack.c.l.b16 %v2477
        %v2606 = vunpack.c.l.b16 %v2478
        %v2607 = vunpack.c.l.b16 %v2479
        %v2608 = vunpack.c.l.b16 %v2480
        %v2609 = vunpack.c.l.b16 %v2481
        %v2610 = vunpack.c.l.b16 %v2482
        %v2611 = vunpack.c.l.b16 %v2483
        %v2612 = vunpack.c.l.b16 %v2484
        %v2613 = vunpack.c.l.b16 %v2485
        %v2614 = vunpack.c.l.b16 %v2486
        %v2615 = vunpack.c.l.b16 %v2487
        %v2616 = vpack.c.b16 %v2553, %v2552
        %v2617 = vpack.c.b16 %v2555, %v2554
        %v2618 = vpack.c.b16 %v2557, %v2556
        %v2619 = vpack.c.b16 %v2559, %v2558
        %v2620 = vpack.c.b16 %v2561, %v2560
        %v2621 = vpack.c.b16 %v2563, %v2562
        %v2622 = vpack.c.b16 %v2565, %v2564
        %v2623 = vpack.c.b16 %v2567, %v2566
        %v2624 = vpack.c.b16 %v2569, %v2568
        %v2625 = vpack.c.b16 %v2571, %v2570
        %v2626 = vpack.c.b16 %v2573, %v2572
        %v2627 = vpack.c.b16 %v2575, %v2574
        %v2628 = vpack.c.b16 %v2577, %v2576
        %v2629 = vpack.c.b16 %v2579, %v2578
        %v2630 = vpack.c.b16 %v2581, %v2580
        %v2631 = vpack.c.b16 %v2583, %v2582
        %v2632 = vpack.c.b16 %v2585, %v2584
        %v2633 = vpack.c.b16 %v2587, %v2586
        %v2634 = vpack.c.b16 %v2589, %v2588
        %v2635 = vpack.c.b16 %v2591, %v2590
        %v2636 = vpack.c.b16 %v2593, %v2592
        %v2637 = vpack.c.b16 %v2595, %v2594
        %v2638 = vpack.c.b16 %v2597, %v2596
        %v2639 = vpack.c.b16 %v2599, %v2598
        %v2640 = vpack.c.b16 %v2601, %v2600
        %v2641 = vpack.c.b16 %v2603, %v2602
        %v2642 = vpack.c.b16 %v2605, %v2604
        %v2643 = vpack.c.b16 %v2607, %v2606
        %v2644 = vpack.c.b16 %v2609, %v2608
        %v2645 = vpack.c.b16 %v2611, %v2610
        %v2646 = vpack.c.b16 %v2613, %v2612
        %v2647 = vpack.c.b16 %v2615, %v2614
        %2680 = vmatprep.subr.bf16.mxu0 0
        %2681 = vmatpush1.bf16.msra.mxu0 %v2623
        %2682 = vmatprep.subr.bf16.mxu0 0
        %2683 = vmatpush1.bf16.msra.mxu0 %v2622
        %2684 = vmatprep.subr.bf16.mxu0 0
        %2685 = vmatpush1.bf16.msra.mxu0 %v2621
        %2686 = vmatprep.subr.bf16.mxu0 0
        %2687 = vmatpush1.bf16.msra.mxu0 %v2620
        %2688 = vmatprep.subr.bf16.mxu0 0
        %2689 = vmatpush1.bf16.msra.mxu0 %v2619
        %2690 = vmatprep.subr.bf16.mxu0 0
        %2691 = vmatpush1.bf16.msra.mxu0 %v2618
        %2692 = vmatprep.subr.bf16.mxu0 0
        %2693 = vmatpush1.bf16.msra.mxu0 %v2617
        %2694 = vmatprep.subr.bf16.mxu0 0
        %2695 = vmatpush1.bf16.msra.mxu0 %v2616
        %2696 = vmatprep.subr.bf16.mxu0 0
        %2697 = vmatpush2.bf16.msra.mxu0 %v2631
        %2698 = vmatprep.subr.bf16.mxu0 0
        %2699 = vmatpush2.bf16.msra.mxu0 %v2630
        %2700 = vmatprep.subr.bf16.mxu0 0
        %2701 = vmatpush2.bf16.msra.mxu0 %v2629
        %2702 = vmatprep.subr.bf16.mxu0 0
        %2703 = vmatpush2.bf16.msra.mxu0 %v2628
        %2704 = vmatprep.subr.bf16.mxu0 0
        %2705 = vmatpush2.bf16.msra.mxu0 %v2627
        %2706 = vmatprep.subr.bf16.mxu0 0
        %2707 = vmatpush2.bf16.msra.mxu0 %v2626
        %2708 = vmatprep.subr.bf16.mxu0 0
        %2709 = vmatpush2.bf16.msra.mxu0 %v2625
        %2710 = vmatprep.subr.bf16.mxu0 0
        %2711 = vmatpush2.bf16.msra.mxu0 %v2624
        %2712 = vmatprep.mubr.bf16.mxu0 %v2417
        %2713 = vmatmul.mubr.bf16.gmra.mxu0 %v2416
        %v2714 = vpop.f32.mrf.mxu0
        %v2715 = vadd.f32 0.0, %v2714
        %v2716 = vpop.f32.mrf.mxu0
        %v2717 = vpop.f32.mrf.mxu0
        %v2718 = vadd.f32 0.0, %v2717
        %v2719 = vpop.f32.mrf.mxu0
        %2720 = vmatprep.mubr.bf16.mxu0 %v2421
        %2721 = vmatmul.mubr.bf16.gmra.mxu0 %v2420
        %v2722 = vpop.f32.mrf.mxu0
        %v2723 = vadd.f32 0.0, %v2722
        %v2724 = vpop.f32.mrf.mxu0
        %v2725 = vpop.f32.mrf.mxu0
        %v2726 = vadd.f32 0.0, %v2725
        %v2727 = vpop.f32.mrf.mxu0
        %2728 = vdwg.mxu0
        %2729 = vmatprep.subr.bf16.mxu0 0
        %2730 = vmatpush1.bf16.msra.mxu0 %v2639
        %2731 = vmatprep.subr.bf16.mxu0 0
        %2732 = vmatpush1.bf16.msra.mxu0 %v2638
        %2733 = vmatprep.subr.bf16.mxu0 0
        %2734 = vmatpush1.bf16.msra.mxu0 %v2637
        %2735 = vmatprep.subr.bf16.mxu0 0
        %2736 = vmatpush1.bf16.msra.mxu0 %v2636
        %2737 = vmatprep.subr.bf16.mxu0 0
        %2738 = vmatpush1.bf16.msra.mxu0 %v2635
        %2739 = vmatprep.subr.bf16.mxu0 0
        %2740 = vmatpush1.bf16.msra.mxu0 %v2634
        %2741 = vmatprep.subr.bf16.mxu0 0
        %2742 = vmatpush1.bf16.msra.mxu0 %v2633
        %2743 = vmatprep.subr.bf16.mxu0 0
        %2744 = vmatpush1.bf16.msra.mxu0 %v2632
        %2745 = vmatprep.subr.bf16.mxu0 0
        %2746 = vmatpush2.bf16.msra.mxu0 %v2647
        %2747 = vmatprep.subr.bf16.mxu0 0
        %2748 = vmatpush2.bf16.msra.mxu0 %v2646
        %2749 = vmatprep.subr.bf16.mxu0 0
        %2750 = vmatpush2.bf16.msra.mxu0 %v2645
        %2751 = vmatprep.subr.bf16.mxu0 0
        %2752 = vmatpush2.bf16.msra.mxu0 %v2644
        %2753 = vmatprep.subr.bf16.mxu0 0
        %2754 = vmatpush2.bf16.msra.mxu0 %v2643
        %2755 = vmatprep.subr.bf16.mxu0 0
        %2756 = vmatpush2.bf16.msra.mxu0 %v2642
        %2757 = vmatprep.subr.bf16.mxu0 0
        %2758 = vmatpush2.bf16.msra.mxu0 %v2641
        %2759 = vmatprep.subr.bf16.mxu0 0
        %2760 = vmatpush2.bf16.msra.mxu0 %v2640
        %2761 = vmatprep.mubr.bf16.mxu0 %v2419
        %2762 = vmatmul.mubr.bf16.gmra.mxu0 %v2418
        %v2763 = vpop.f32.mrf.mxu0
        %v2764 = vadd.f32 %v2715, %v2763
        %v2765 = vpop.f32.mrf.mxu0
        %v2766 = vpop.f32.mrf.mxu0
        %v2767 = vadd.f32 %v2718, %v2766
        %v2768 = vpop.f32.mrf.mxu0
        %2769 = vmatprep.mubr.bf16.mxu0 %v2423
        %2770 = vmatmul.mubr.bf16.gmra.mxu0 %v2422
        %v2771 = vpop.f32.mrf.mxu0
        %v2772 = vadd.f32 %v2723, %v2771
        %v2773 = vpop.f32.mrf.mxu0
        %v2774 = vpop.f32.mrf.mxu0
        %v2775 = vadd.f32 %v2726, %v2774
        %v2776 = vpop.f32.mrf.mxu0
        %2777 = vdwg.mxu0
        %v2778 = vadd.f32 %v2008, %v2764
        %v2779 = vadd.f32 %v2009, %v2767
        %v2780 = vadd.f32 %v2010, %v2772
        %v2781 = vadd.f32 %v2011, %v2775
        %v2782 = vld [vmem:[%s12] sm:$0x1]
        %v2784 = vlaneseq
        %v2785 = vshrl.u32 %v2784, 7
        %v2786 = vsub.s32 0, %v2785
        %v2787 = vrot.slane %v2782, %v2786
        %v2789 = vadd.f32 %v2778, %v2787
        %v2790 = vadd.f32 %v2779, %v2787
        %v2791 = vadd.f32 %v2780, %v2787
        %v2792 = vadd.f32 %v2781, %v2787
        %2793 = vst [vmem:[%s531] sm:$0xff] %v2789
        %2794 = vst [vmem:[%s531 + $0x8] sm:$0xff] %v2790
        %2795 = vst [vmem:[%s531 + $0x10] sm:$0xff] %v2791
        %2796 = vst [vmem:[%s531 + $0x18] sm:$0xff] %v2792
        %s2797 = sand.u32 %s319, 1
        %s2798 = scalar_lea.sflag [#allocation4], %s2797
        %s2799 = sand.u32 %s319, 1
        %s2800 = smul.addr %s2799, 32
        %s2801 = scalar_lea.vmem [#allocation13], %s2800
        // Predicated region
        $region97: #{tpu_custom_call.1} parent=71 // pred_check
          %p2802 = pneg %p329
        $region98: #{tpu_custom_call.1} parent=71 // pred_check_branch
          %2804 = sbr.rel (%p2802) target = $region100
        $region99: #{tpu_custom_call.1} parent=71 // pred_region
          %s2805 = smul.u32 4, %s33
          %s2807 = ssub.s32 512, 512
          %2808 = vsyncadd %s2798, %s2807
          %s2809 = smul.addr %s2805, 128
          %s2810 = scalar_lea.hbm %s13, %s2809
          %s2811 = sshll.u32 %s2801, 4
          %s2812 = int_to_ptr.vmem [resolvable:$true] %s2811
          %2817 = dma.vmem_to_hbm [thread:$0]  %s2812, 512, %s2810, %s2798, 128, 128, 8
        $region100: #{tpu_custom_call.1} parent=71 // pred_fallthru
          _
      $region72: #{tpu_custom_call.1} parent=5 // pred_fallthru
        _
      %p2818 = scmp.le.s32.totalorder 2, %s28
      // Predicated region
      $region101: #{tpu_custom_call.1} parent=5 // pred_check
        %p2819 = pneg %p2818
      $region102: #{tpu_custom_call.1} parent=5 // pred_check_branch
        %2821 = sbr.rel (%p2819) target = $region104
      $region103: #{tpu_custom_call.1} parent=5 // pred_region
        %s2822 = ssub.s32 %s28, 2
        // Predicated region
        $region105: #{tpu_custom_call.1} parent=103 // pred_check
          %p2823 = pneg %p335
        $region106: #{tpu_custom_call.1} parent=103 // pred_check_branch
          %2825 = sbr.rel (%p2823) target = $region108
        $region107: #{tpu_custom_call.1} parent=103 // pred_region
          %s2826 = sand.u32 %s320, 1
          %s2827 = scalar_lea.sflag [#allocation4], %s2826
          %s2828 = sand.u32 %s320, 1
          %s2829 = smul.addr %s2828, 32
          %s2830 = scalar_lea.vmem [#allocation13], %s2829
          %2831 = dma.done %s2827, 512
        $region108: #{tpu_custom_call.1} parent=103 // pred_fallthru
          _
      $region104: #{tpu_custom_call.1} parent=5 // pred_fallthru
        _
    $region6: #{tpu_custom_call.1} parent=1 // loop_footer
      %s32 = sadd.s32 1, %s28
    $region7: #{tpu_custom_call.1} parent=1 // loop_footer_branch
      %27 = sbr.rel target = $region3
    $region8: #{tpu_custom_call.1} parent=1 // loop_exit
      _
    %2832 = vsyncpa [#allocation3], 1
    %s2833 = scalar_lea.sflag [#allocation3], 1
    %2834 = vsyncpa %s2833, 1
    %2835 = vsyncpa [#allocation6], 1
    %2836 = vsyncpa [#allocation9], 1
    %2837 = vsyncpa [#allocation12], 1
    %2838 = vsyncpa [#allocation4], 1
    %s2839 = scalar_lea.sflag [#allocation4], 1
    %2840 = vsyncpa %s2839, 1

</llo_original>
